<compile_context>
chip_gen: v7x
topology: tpu7x:2x2x1
jax: 0.10.0
libtpu: 0.0.40
codegen_flags: <defaults>
</compile_context>

<pallas_src>
import jax
import jax.numpy as jnp
from jax.experimental import pallas as pl
from jax.experimental.pallas import tpu as pltpu

Z_DIM = 128     # z_dim in VAE_Encoder
HIDDEN = 768    # BERT hidden size
MID = 128       # width of the MLP head
H_CHUNK = 128   # lane-chunk size for the stage-1 reduction (768 = 6 * 128)


def _softplus(x):
    # numerically stable softplus: max(x, 0) + log(1 + exp(-|x|))
    return jnp.maximum(x, 0.0) + jnp.log(1.0 + jnp.exp(-jnp.abs(x)))


def s_net_kernel(inp_ref, w_lin_ref, b_lin_ref, w1_ref, b1_ref,
                 w2_ref, b2_ref, eps_ref, out_ref, x_scratch):
    # ---- Stage 1: Linear(z_dim, 1) applied to inputs.permute(0, 2, 1) ------
    # x[b, h] = sum_z inp[b, z, h] * w_lin[z] + b_lin
    # Computed in 128-lane H chunks so only a (block_b, 128, 128) f32 temp is
    # live at a time (instead of a full (block_b, 128, 768) f32 copy+product).
    # Per-chunk bf16 -> f32 upcast; the reduction accumulates in f32.
    w_lin = w_lin_ref[...].astype(jnp.float32)                    # (Z, 1)
    b_lin = b_lin_ref[0, 0]                                        # scalar (SMEM)
    w_b = jnp.broadcast_to(w_lin, (Z_DIM, H_CHUNK))                # hoisted bcast

    def h_chunk(c, carry):
        h0 = pl.multiple_of(c * H_CHUNK, H_CHUNK)
        chunk = inp_ref[:, :, pl.ds(h0, H_CHUNK)].astype(jnp.float32)  # (bB, Z, Hc)
        x_scratch[:, pl.ds(h0, H_CHUNK)] = (
            jnp.sum(chunk * w_b[None, :, :], axis=1) + b_lin)
        return carry

    jax.lax.fori_loop(0, HIDDEN // H_CHUNK, h_chunk, 0, unroll=True)

    # ---- Stage 2: Linear(768, 128) -> ReLU -> Linear(128, 2*z_dim) ---------
    # f32 MXU matmuls: the kernel is HBM-bound, so bf16 here buys nothing and
    # f32 keeps parity with the PyTorch reference.
    x = x_scratch[...]                                             # (bB, 768) f32
    h1 = jnp.maximum(
        jnp.dot(x, w1_ref[...], preferred_element_type=jnp.float32) + b1_ref[...],
        0.0)                                                       # (bB, MID)
    p = jnp.dot(h1, w2_ref[...], preferred_element_type=jnp.float32) + b2_ref[...]

    # ---- Stage 3: split, softplus, reparameterized sample ------------------
    mu = p[:, :Z_DIM]
    sigma = _softplus(p[:, Z_DIM:]) + 1e-7
    out_ref[...] = (mu + sigma * eps_ref[...].astype(jnp.float32)
                    ).astype(out_ref.dtype)


def _vmem_capacity_bytes():
    try:
        cap = getattr(pltpu.get_tpu_info(), "vmem_capacity_bytes", None)
        if cap:
            return int(cap)
    except Exception:
        pass
    return 64 * 1024 * 1024   # conservative (v7x per-TC VMEM)


def _pick_block_b(B, itemsize):
    """Generation-aware batch tile: size the double-buffered input tile to ~half
    of this chip's VMEM (v7x 64 MiB -> ~64-80 rows in bf16; v5e/v6e 128 MiB ->
    up to 128 rows), then cap so the grid has >= 2 steps when B allows."""
    vmem = _vmem_capacity_bytes()
    in_row_bytes = Z_DIM * HIDDEN * itemsize
    bb = (vmem // 2) // (2 * in_row_bytes)        # 2x for double buffering
    bb = max(8, min(128, (bb // 8) * 8))
    bb = min(bb, ((B + 7) // 8) * 8)              # no point exceeding B
    if B >= 16:
        bb = min(bb, ((pl.cdiv(B, 2) + 7) // 8) * 8)   # >=2 grid steps for 2 TCs
    return int(max(8, bb)), vmem


def s_net_forward(inputs, params, eps, *, block_b=None, stream_dtype=jnp.bfloat16):
    """inputs: (B, Z_DIM, HIDDEN); eps: (B, Z_DIM) f32 standard-normal noise for
    the reparameterized sample. The input is streamed to the kernel in
    `stream_dtype` (bf16 by default: HBM-bound kernel, half the bytes); pass
    stream_dtype=jnp.float32 for exact f32 parity."""
    B = inputs.shape[0]
    assert inputs.shape[1:] == (Z_DIM, HIDDEN)
    assert eps.shape == (B, Z_DIM)

    if stream_dtype is not None and inputs.dtype != stream_dtype:
        inputs = inputs.astype(stream_dtype)
    itemsize = jnp.dtype(inputs.dtype).itemsize

    bb_auto, vmem = _pick_block_b(B, itemsize)
    if block_b is None:
        block_b = bb_auto
    block_b = max(8, (int(block_b) // 8) * 8)

    # No jnp.pad of the (B, 128, 768) input: Pallas masks the ragged last block
    # (tail rows compute garbage that is never written back).
    grid = (pl.cdiv(B, block_b),)

    weight_bytes = sum(int(params[k].size) * params[k].dtype.itemsize
                       for k in ("w_lin", "b_lin", "w1", "b1", "w2", "b2"))
    bytes_accessed = (int(inputs.size) * itemsize + weight_bytes
                      + 2 * B * Z_DIM * 4)
    flops = 2 * B * (Z_DIM * HIDDEN + HIDDEN * MID + MID * 2 * Z_DIM)
    transcendentals = 2 * B * Z_DIM   # exp + log in softplus

    # ~85% of physical VMEM, capped at 100 MiB (v5e/v6e 128 MiB parts; v5e's
    # scoped default is only 16 MiB, so always raise it).
    vmem_limit = min(int(vmem * 0.85), 100 * 1024 * 1024)

    return pl.pallas_call(
        s_net_kernel,
        out_shape=jax.ShapeDtypeStruct((B, Z_DIM), jnp.float32),
        grid=grid,
        in_specs=[
            # streamed, double-buffered input tile (bf16)
            pl.BlockSpec((block_b, Z_DIM, HIDDEN), lambda i: (i, 0, 0)),
            # weights/biases: constant block index -> loaded once, VMEM-resident
            pl.BlockSpec((Z_DIM, 1), lambda i: (0, 0)),
            pl.BlockSpec(memory_space=pltpu.MemorySpace.SMEM),   # scalar bias
            pl.BlockSpec((HIDDEN, MID), lambda i: (0, 0)),
            pl.BlockSpec((1, MID), lambda i: (0, 0)),
            pl.BlockSpec((MID, 2 * Z_DIM), lambda i: (0, 0)),
            pl.BlockSpec((1, 2 * Z_DIM), lambda i: (0, 0)),
            # per-block noise
            pl.BlockSpec((block_b, Z_DIM), lambda i: (i, 0)),
        ],
        out_specs=pl.BlockSpec((block_b, Z_DIM), lambda i: (i, 0)),
        scratch_shapes=[pltpu.VMEM((block_b, HIDDEN), jnp.float32)],  # stage-1 x
        compiler_params=pltpu.CompilerParams(
            dimension_semantics=("parallel",),      # v7x: shard steps over 2 TCs
            vmem_limit_bytes=vmem_limit),
        cost_estimate=pl.CostEstimate(
            flops=flops, transcendentals=transcendentals,
            bytes_accessed=bytes_accessed),
    )(inputs, params["w_lin"], params["b_lin"], params["w1"], params["b1"],
      params["w2"], params["b2"], eps)


def init_params(key):
    k = jax.random.split(key, 5)
    return {
        # Linear(z_dim, 1): PyTorch weight (1, z_dim) stored as (z_dim, 1)
        "w_lin": jax.random.normal(k[0], (Z_DIM, 1), jnp.float32) / jnp.sqrt(Z_DIM),
        "b_lin": jnp.full((1, 1), 0.01, jnp.float32),
        # Linear(768, 128): stored pre-transposed as (768, 128)
        "w1": jax.random.normal(k[1], (HIDDEN, MID), jnp.float32) / jnp.sqrt(HIDDEN),
        "b1": jax.random.normal(k[2], (1, MID), jnp.float32) * 0.01,
        # Linear(128, 2*z_dim): stored pre-transposed as (128, 256)
        "w2": jax.random.normal(k[3], (MID, 2 * Z_DIM), jnp.float32) / jnp.sqrt(MID),
        "b2": jax.random.normal(k[4], (1, 2 * Z_DIM), jnp.float32) * 0.01,
    }


def s_net_reference(inputs, params, eps):
    """Pure-JAX f32 reference of S_Net.forward (rsample with supplied eps)."""
    x = jnp.einsum("bzh,z->bh", inputs.astype(jnp.float32),
                   params["w_lin"][:, 0]) + params["b_lin"][0, 0]
    h1 = jnp.maximum(x @ params["w1"] + params["b1"], 0.0)
    p = h1 @ params["w2"] + params["b2"]
    mu, sg = p[:, :Z_DIM], p[:, Z_DIM:]
    sigma = jax.nn.softplus(sg) + 1e-7
    return mu + sigma * eps


if __name__ == "__main__":
    key = jax.random.PRNGKey(0)
    k_in, k_par, k_eps = jax.random.split(key, 3)

    B = 16   # small demo batch; block_b resolves to 8 -> 2 grid steps
    inputs = jax.random.normal(k_in, (B, Z_DIM, HIDDEN), jnp.float32)
    params = init_params(k_par)
    # rsample noise: Independent(Normal(mu, sigma), 1).rsample() == mu + sigma*eps
    eps = jax.random.normal(k_eps, (B, Z_DIM), jnp.float32)

    z = s_net_forward(inputs, params, eps)
    z = jax.block_until_ready(z)

    assert z.shape == (B, Z_DIM) and z.dtype == jnp.float32
    assert bool(jnp.all(jnp.isfinite(z)))

    # Tight check vs. a reference fed the same bf16-quantized input (the only
    # intentional precision tradeoff left in the kernel is bf16 input streaming).
    z_ref_q = s_net_reference(inputs.astype(jnp.bfloat16).astype(jnp.float32),
                              params, eps)
    assert bool(jnp.allclose(z, z_ref_q, atol=3e-2, rtol=3e-2))

    # Loose sanity check vs. the exact f32 PyTorch semantics.
    z_ref = s_net_reference(inputs, params, eps)
    assert bool(jnp.allclose(z, z_ref, atol=1e-1, rtol=1e-1))
    print("KERNEL_OK")
</pallas_src>

<mosaic_0001>
module attributes {stable_mosaic.version = 11 : i64} {
  func.func @s_net_kernel(%arg0: i32, %arg1: memref<8x128x768xbf16, #tpu.memory_space<vmem>>, %arg2: memref<128x1xf32, #tpu.memory_space<vmem>>, %arg3: memref<1x1xf32, #tpu.memory_space<smem>>, %arg4: memref<768x128xf32, #tpu.memory_space<vmem>>, %arg5: memref<1x128xf32, #tpu.memory_space<vmem>>, %arg6: memref<128x256xf32, #tpu.memory_space<vmem>>, %arg7: memref<1x256xf32, #tpu.memory_space<vmem>>, %arg8: memref<8x128xf32, #tpu.memory_space<vmem>>, %arg9: memref<8x128xf32, #tpu.memory_space<vmem>>, %arg10: memref<8x768xf32, #tpu.memory_space<vmem>>) attributes {dimension_semantics = [#tpu.dimension_semantics<parallel>], iteration_bounds = array<i64: 2>, scalar_prefetch = 0 : i64, scratch_operands = 1 : i64, tpu.core_type = #tpu.core_type<tc>, window_params = [{transform_indices = @transform_0, window_bounds = array<i64: 8, 128, 768>}, {pipeline_mode = #tpu.pipeline_mode<synchronous>, transform_indices = @transform_1, window_bounds = array<i64: 128, 1>}, {transform_indices = @transform_2, window_bounds = array<i64: 1, 1>}, {pipeline_mode = #tpu.pipeline_mode<synchronous>, transform_indices = @transform_3, window_bounds = array<i64: 768, 128>}, {pipeline_mode = #tpu.pipeline_mode<synchronous>, transform_indices = @transform_4, window_bounds = array<i64: 1, 128>}, {pipeline_mode = #tpu.pipeline_mode<synchronous>, transform_indices = @transform_5, window_bounds = array<i64: 128, 256>}, {pipeline_mode = #tpu.pipeline_mode<synchronous>, transform_indices = @transform_6, window_bounds = array<i64: 1, 256>}, {transform_indices = @transform_7, window_bounds = array<i64: 8, 128>}, {transform_indices = @transform_8, window_bounds = array<i64: 8, 128>}]} {
    %c0 = arith.constant 0 : index
    %c0_0 = arith.constant 0 : index
    %0 = vector.load %arg2[%c0, %c0_0] : memref<128x1xf32, #tpu.memory_space<vmem>>, vector<128x1xf32>
    %c0_1 = arith.constant 0 : index
    %c0_2 = arith.constant 0 : index
    %1 = memref.load %arg3[%c0_1, %c0_2] : memref<1x1xf32, #tpu.memory_space<smem>>
    %2 = vector.shape_cast %0 : vector<128x1xf32> to vector<128x1xf32>
    %3 = vector.broadcast %2 : vector<128x1xf32> to vector<128x128xf32>
    %c0_i32 = arith.constant 0 : i32
    %c128_i32 = arith.constant 128 : i32
    %4 = arith.muli %c0_i32, %c128_i32 : i32
    %5 = tpu.assume_multiple %4, 128 : i32
    %c0_3 = arith.constant 0 : index
    %c0_4 = arith.constant 0 : index
    %6 = arith.index_cast %5 : i32 to index
    %7 = vector.load %arg1[%c0_3, %c0_4, %6] : memref<8x128x768xbf16, #tpu.memory_space<vmem>>, vector<8x128x128xbf16>
    %8 = arith.extf %7 : vector<8x128x128xbf16> to vector<8x128x128xf32>
    %9 = vector.shape_cast %3 : vector<128x128xf32> to vector<1x128x128xf32>
    %10 = vector.broadcast %9 : vector<1x128x128xf32> to vector<8x128x128xf32>
    %11 = arith.mulf %8, %10 : vector<8x128x128xf32>
    %cst = arith.constant dense<0.000000e+00> : vector<8x128xf32>
    %12 = vector.multi_reduction <add>, %11, %cst [1] : vector<8x128x128xf32> to vector<8x128xf32>
    %13 = vector.broadcast %1 : f32 to vector<8x128xf32>
    %14 = arith.addf %12, %13 : vector<8x128xf32>
    %c0_5 = arith.constant 0 : index
    %15 = arith.index_cast %5 : i32 to index
    %16 = vector.load %arg10[%c0_5, %15] : memref<8x768xf32, #tpu.memory_space<vmem>>, vector<8x128xf32>
    tpu.vector_store %arg10[%c0_5, %15], %14 {strides = array<i32>} : memref<8x768xf32, #tpu.memory_space<vmem>>, vector<8x128xf32>,
    %c1_i32 = arith.constant 1 : i32
    %c128_i32_6 = arith.constant 128 : i32
    %17 = arith.muli %c1_i32, %c128_i32_6 : i32
    %18 = tpu.assume_multiple %17, 128 : i32
    %c0_7 = arith.constant 0 : index
    %c0_8 = arith.constant 0 : index
    %19 = arith.index_cast %18 : i32 to index
    %20 = vector.load %arg1[%c0_7, %c0_8, %19] : memref<8x128x768xbf16, #tpu.memory_space<vmem>>, vector<8x128x128xbf16>
    %21 = arith.extf %20 : vector<8x128x128xbf16> to vector<8x128x128xf32>
    %22 = vector.shape_cast %3 : vector<128x128xf32> to vector<1x128x128xf32>
    %23 = vector.broadcast %22 : vector<1x128x128xf32> to vector<8x128x128xf32>
    %24 = arith.mulf %21, %23 : vector<8x128x128xf32>
    %cst_9 = arith.constant dense<0.000000e+00> : vector<8x128xf32>
    %25 = vector.multi_reduction <add>, %24, %cst_9 [1] : vector<8x128x128xf32> to vector<8x128xf32>
    %26 = vector.broadcast %1 : f32 to vector<8x128xf32>
    %27 = arith.addf %25, %26 : vector<8x128xf32>
    %c0_10 = arith.constant 0 : index
    %28 = arith.index_cast %18 : i32 to index
    %29 = vector.load %arg10[%c0_10, %28] : memref<8x768xf32, #tpu.memory_space<vmem>>, vector<8x128xf32>
    tpu.vector_store %arg10[%c0_10, %28], %27 {strides = array<i32>} : memref<8x768xf32, #tpu.memory_space<vmem>>, vector<8x128xf32>,
    %c2_i32 = arith.constant 2 : i32
    %c128_i32_11 = arith.constant 128 : i32
    %30 = arith.muli %c2_i32, %c128_i32_11 : i32
    %31 = tpu.assume_multiple %30, 128 : i32
    %c0_12 = arith.constant 0 : index
    %c0_13 = arith.constant 0 : index
    %32 = arith.index_cast %31 : i32 to index
    %33 = vector.load %arg1[%c0_12, %c0_13, %32] : memref<8x128x768xbf16, #tpu.memory_space<vmem>>, vector<8x128x128xbf16>
    %34 = arith.extf %33 : vector<8x128x128xbf16> to vector<8x128x128xf32>
    %35 = vector.shape_cast %3 : vector<128x128xf32> to vector<1x128x128xf32>
    %36 = vector.broadcast %35 : vector<1x128x128xf32> to vector<8x128x128xf32>
    %37 = arith.mulf %34, %36 : vector<8x128x128xf32>
    %cst_14 = arith.constant dense<0.000000e+00> : vector<8x128xf32>
    %38 = vector.multi_reduction <add>, %37, %cst_14 [1] : vector<8x128x128xf32> to vector<8x128xf32>
    %39 = vector.broadcast %1 : f32 to vector<8x128xf32>
    %40 = arith.addf %38, %39 : vector<8x128xf32>
    %c0_15 = arith.constant 0 : index
    %41 = arith.index_cast %31 : i32 to index
    %42 = vector.load %arg10[%c0_15, %41] : memref<8x768xf32, #tpu.memory_space<vmem>>, vector<8x128xf32>
    tpu.vector_store %arg10[%c0_15, %41], %40 {strides = array<i32>} : memref<8x768xf32, #tpu.memory_space<vmem>>, vector<8x128xf32>,
    %c3_i32 = arith.constant 3 : i32
    %c128_i32_16 = arith.constant 128 : i32
    %43 = arith.muli %c3_i32, %c128_i32_16 : i32
    %44 = tpu.assume_multiple %43, 128 : i32
    %c0_17 = arith.constant 0 : index
    %c0_18 = arith.constant 0 : index
    %45 = arith.index_cast %44 : i32 to index
    %46 = vector.load %arg1[%c0_17, %c0_18, %45] : memref<8x128x768xbf16, #tpu.memory_space<vmem>>, vector<8x128x128xbf16>
    %47 = arith.extf %46 : vector<8x128x128xbf16> to vector<8x128x128xf32>
    %48 = vector.shape_cast %3 : vector<128x128xf32> to vector<1x128x128xf32>
    %49 = vector.broadcast %48 : vector<1x128x128xf32> to vector<8x128x128xf32>
    %50 = arith.mulf %47, %49 : vector<8x128x128xf32>
    %cst_19 = arith.constant dense<0.000000e+00> : vector<8x128xf32>
    %51 = vector.multi_reduction <add>, %50, %cst_19 [1] : vector<8x128x128xf32> to vector<8x128xf32>
    %52 = vector.broadcast %1 : f32 to vector<8x128xf32>
    %53 = arith.addf %51, %52 : vector<8x128xf32>
    %c0_20 = arith.constant 0 : index
    %54 = arith.index_cast %44 : i32 to index
    %55 = vector.load %arg10[%c0_20, %54] : memref<8x768xf32, #tpu.memory_space<vmem>>, vector<8x128xf32>
    tpu.vector_store %arg10[%c0_20, %54], %53 {strides = array<i32>} : memref<8x768xf32, #tpu.memory_space<vmem>>, vector<8x128xf32>,
    %c4_i32 = arith.constant 4 : i32
    %c128_i32_21 = arith.constant 128 : i32
    %56 = arith.muli %c4_i32, %c128_i32_21 : i32
    %57 = tpu.assume_multiple %56, 128 : i32
    %c0_22 = arith.constant 0 : index
    %c0_23 = arith.constant 0 : index
    %58 = arith.index_cast %57 : i32 to index
    %59 = vector.load %arg1[%c0_22, %c0_23, %58] : memref<8x128x768xbf16, #tpu.memory_space<vmem>>, vector<8x128x128xbf16>
    %60 = arith.extf %59 : vector<8x128x128xbf16> to vector<8x128x128xf32>
    %61 = vector.shape_cast %3 : vector<128x128xf32> to vector<1x128x128xf32>
    %62 = vector.broadcast %61 : vector<1x128x128xf32> to vector<8x128x128xf32>
    %63 = arith.mulf %60, %62 : vector<8x128x128xf32>
    %cst_24 = arith.constant dense<0.000000e+00> : vector<8x128xf32>
    %64 = vector.multi_reduction <add>, %63, %cst_24 [1] : vector<8x128x128xf32> to vector<8x128xf32>
    %65 = vector.broadcast %1 : f32 to vector<8x128xf32>
    %66 = arith.addf %64, %65 : vector<8x128xf32>
    %c0_25 = arith.constant 0 : index
    %67 = arith.index_cast %57 : i32 to index
    %68 = vector.load %arg10[%c0_25, %67] : memref<8x768xf32, #tpu.memory_space<vmem>>, vector<8x128xf32>
    tpu.vector_store %arg10[%c0_25, %67], %66 {strides = array<i32>} : memref<8x768xf32, #tpu.memory_space<vmem>>, vector<8x128xf32>,
    %c5_i32 = arith.constant 5 : i32
    %c128_i32_26 = arith.constant 128 : i32
    %69 = arith.muli %c5_i32, %c128_i32_26 : i32
    %70 = tpu.assume_multiple %69, 128 : i32
    %c0_27 = arith.constant 0 : index
    %c0_28 = arith.constant 0 : index
    %71 = arith.index_cast %70 : i32 to index
    %72 = vector.load %arg1[%c0_27, %c0_28, %71] : memref<8x128x768xbf16, #tpu.memory_space<vmem>>, vector<8x128x128xbf16>
    %73 = arith.extf %72 : vector<8x128x128xbf16> to vector<8x128x128xf32>
    %74 = vector.shape_cast %3 : vector<128x128xf32> to vector<1x128x128xf32>
    %75 = vector.broadcast %74 : vector<1x128x128xf32> to vector<8x128x128xf32>
    %76 = arith.mulf %73, %75 : vector<8x128x128xf32>
    %cst_29 = arith.constant dense<0.000000e+00> : vector<8x128xf32>
    %77 = vector.multi_reduction <add>, %76, %cst_29 [1] : vector<8x128x128xf32> to vector<8x128xf32>
    %78 = vector.broadcast %1 : f32 to vector<8x128xf32>
    %79 = arith.addf %77, %78 : vector<8x128xf32>
    %c0_30 = arith.constant 0 : index
    %80 = arith.index_cast %70 : i32 to index
    %81 = vector.load %arg10[%c0_30, %80] : memref<8x768xf32, #tpu.memory_space<vmem>>, vector<8x128xf32>
    tpu.vector_store %arg10[%c0_30, %80], %79 {strides = array<i32>} : memref<8x768xf32, #tpu.memory_space<vmem>>, vector<8x128xf32>,
    %c6_i32 = arith.constant 6 : i32
    %c0_31 = arith.constant 0 : index
    %c0_32 = arith.constant 0 : index
    %82 = vector.load %arg10[%c0_31, %c0_32] : memref<8x768xf32, #tpu.memory_space<vmem>>, vector<8x768xf32>
    %c0_33 = arith.constant 0 : index
    %c0_34 = arith.constant 0 : index
    %83 = vector.load %arg4[%c0_33, %c0_34] : memref<768x128xf32, #tpu.memory_space<vmem>>, vector<768x128xf32>
    %cst_35 = arith.constant dense<0.000000e+00> : vector<8x128xf32>
    %84 = tpu.matmul %82, %83, %cst_35 {dimension_numbers = #tpu.dot_dimension_numbers<[1], [0], [0], [1], [0, 0, 1, 1], [], []>} : vector<8x768xf32>, vector<768x128xf32>, vector<8x128xf32> -> vector<8x128xf32>
    %c0_36 = arith.constant 0 : index
    %c0_37 = arith.constant 0 : index
    %85 = vector.load %arg5[%c0_36, %c0_37] : memref<1x128xf32, #tpu.memory_space<vmem>>, vector<1x128xf32>
    %86 = vector.broadcast %85 : vector<1x128xf32> to vector<8x128xf32>
    %87 = arith.addf %84, %86 : vector<8x128xf32>
    %cst_38 = arith.constant 0.000000e+00 : f32
    %88 = vector.broadcast %cst_38 : f32 to vector<8x128xf32>
    %89 = arith.maximumf %87, %88 : vector<8x128xf32>
    %c0_39 = arith.constant 0 : index
    %c0_40 = arith.constant 0 : index
    %90 = vector.load %arg6[%c0_39, %c0_40] : memref<128x256xf32, #tpu.memory_space<vmem>>, vector<128x256xf32>
    %cst_41 = arith.constant dense<0.000000e+00> : vector<8x256xf32>
    %91 = tpu.matmul %89, %90, %cst_41 {dimension_numbers = #tpu.dot_dimension_numbers<[1], [0], [0], [1], [0, 0, 1, 1], [], []>} : vector<8x128xf32>, vector<128x256xf32>, vector<8x256xf32> -> vector<8x256xf32>
    %c0_42 = arith.constant 0 : index
    %c0_43 = arith.constant 0 : index
    %92 = vector.load %arg7[%c0_42, %c0_43] : memref<1x256xf32, #tpu.memory_space<vmem>>, vector<1x256xf32>
    %93 = vector.broadcast %92 : vector<1x256xf32> to vector<8x256xf32>
    %94 = arith.addf %91, %93 : vector<8x256xf32>
    %95 = vector.extract_strided_slice %94 {offsets = [0, 0], sizes = [8, 128], strides = [1, 1]} : vector<8x256xf32> to vector<8x128xf32>
    %96 = vector.extract_strided_slice %94 {offsets = [0, 128], sizes = [8, 128], strides = [1, 1]} : vector<8x256xf32> to vector<8x128xf32>
    %cst_44 = arith.constant 0.000000e+00 : f32
    %97 = vector.broadcast %cst_44 : f32 to vector<8x128xf32>
    %98 = arith.maximumf %96, %97 : vector<8x128xf32>
    %99 = math.absf %96 : vector<8x128xf32>
    %cst_45 = arith.constant 0.000000e+00 : f32
    %100 = vector.broadcast %cst_45 : f32 to vector<8x128xf32>
    %101 = arith.subf %100, %99 : vector<8x128xf32>
    %102 = math.exp %101 : vector<8x128xf32>
    %cst_46 = arith.constant 1.000000e+00 : f32
    %103 = vector.broadcast %cst_46 : f32 to vector<8x128xf32>
    %104 = arith.addf %103, %102 : vector<8x128xf32>
    %105 = math.log %104 : vector<8x128xf32>
    %106 = arith.addf %98, %105 : vector<8x128xf32>
    %cst_47 = arith.constant 1.000000e-07 : f32
    %107 = vector.broadcast %cst_47 : f32 to vector<8x128xf32>
    %108 = arith.addf %106, %107 : vector<8x128xf32>
    %c0_48 = arith.constant 0 : index
    %c0_49 = arith.constant 0 : index
    %109 = vector.load %arg8[%c0_48, %c0_49] : memref<8x128xf32, #tpu.memory_space<vmem>>, vector<8x128xf32>
    %110 = arith.mulf %108, %109 : vector<8x128xf32>
    %111 = arith.addf %95, %110 : vector<8x128xf32>
    %c0_50 = arith.constant 0 : index
    %c0_51 = arith.constant 0 : index
    %112 = vector.load %arg9[%c0_50, %c0_51] : memref<8x128xf32, #tpu.memory_space<vmem>>, vector<8x128xf32>
    tpu.vector_store %arg9[%c0_50, %c0_51], %111 {strides = array<i32>} : memref<8x128xf32, #tpu.memory_space<vmem>>, vector<8x128xf32>,
    return
  }
  func.func @transform_0(%arg0: i32) -> (i32, i32, i32) {
    %c0_i32 = arith.constant 0 : i32
    %c0_i32_0 = arith.constant 0 : i32
    %c0_i32_1 = arith.constant 0 : i32
    return %arg0, %c0_i32, %c0_i32_0 : i32, i32, i32
  }
  func.func @transform_1(%arg0: i32) -> (i32, i32) {
    %c0_i32 = arith.constant 0 : i32
    %c0_i32_0 = arith.constant 0 : i32
    %c0_i32_1 = arith.constant 0 : i32
    return %c0_i32, %c0_i32_0 : i32, i32
  }
  func.func @transform_2(%arg0: i32) -> (i32, i32) {
    %c0_i32 = arith.constant 0 : i32
    %c0_i32_0 = arith.constant 0 : i32
    %c0_i32_1 = arith.constant 0 : i32
    return %c0_i32, %c0_i32_0 : i32, i32
  }
  func.func @transform_3(%arg0: i32) -> (i32, i32) {
    %c0_i32 = arith.constant 0 : i32
    %c0_i32_0 = arith.constant 0 : i32
    %c0_i32_1 = arith.constant 0 : i32
    return %c0_i32, %c0_i32_0 : i32, i32
  }
  func.func @transform_4(%arg0: i32) -> (i32, i32) {
    %c0_i32 = arith.constant 0 : i32
    %c0_i32_0 = arith.constant 0 : i32
    %c0_i32_1 = arith.constant 0 : i32
    return %c0_i32, %c0_i32_0 : i32, i32
  }
  func.func @transform_5(%arg0: i32) -> (i32, i32) {
    %c0_i32 = arith.constant 0 : i32
    %c0_i32_0 = arith.constant 0 : i32
    %c0_i32_1 = arith.constant 0 : i32
    return %c0_i32, %c0_i32_0 : i32, i32
  }
  func.func @transform_6(%arg0: i32) -> (i32, i32) {
    %c0_i32 = arith.constant 0 : i32
    %c0_i32_0 = arith.constant 0 : i32
    %c0_i32_1 = arith.constant 0 : i32
    return %c0_i32, %c0_i32_0 : i32, i32
  }
  func.func @transform_7(%arg0: i32) -> (i32, i32) {
    %c0_i32 = arith.constant 0 : i32
    %c0_i32_0 = arith.constant 0 : i32
    return %arg0, %c0_i32 : i32, i32
  }
  func.func @transform_8(%arg0: i32) -> (i32, i32) {
    %c0_i32 = arith.constant 0 : i32
    %c0_i32_0 = arith.constant 0 : i32
    return %arg0, %c0_i32 : i32, i32
  }
}

</mosaic_0001>

<llo_original>
// kernel: tpu_custom_call.1
$region0: #{tpu_custom_call.1}
  #allocation0 [shape = 'u32[]', space=smem, size = 0x4, offset = 0x4, fixed_abs, tag = 'smem constant byte address 0x4 - core index']
  #allocation1 [shape = 'u32[144,128]{1,0:T(1,128)}', space=vmem, size = 0x12000, scoped, tag = 'internal scratch']
  #allocation2 [shape = 'f32[8,768]{1,0:T(8,128)}', space=vmem, size = 0x6000, scoped, tag = 'scratch operand']
  #allocation3 [shape = 'f32[1,1]{1,0:T(1,128)S(6)}', space=smem, size = 0x200, scoped, tag = 'scoped memory for tpu_custom_call.1']
  %s0 = inlined_call_operand.hbm [shape: bf16[16,128,768], index: 0, kind: input, shape index: {}]
  %s1 = inlined_call_operand.vmem [shape: f32[128,1], index: 1, kind: input, shape index: {}]
  %s2 = inlined_call_operand.<no memory space> [shape: f32[1,1], index: 2, kind: input, shape index: {}]
  %s3 = inlined_call_operand.hbm [shape: f32[768,128], index: 3, kind: input, shape index: {}]
  %s4 = inlined_call_operand.hbm [shape: f32[1,128], index: 4, kind: input, shape index: {}]
  %s5 = inlined_call_operand.hbm [shape: f32[128,256], index: 5, kind: input, shape index: {}]
  %s6 = inlined_call_operand.hbm [shape: f32[1,256], index: 6, kind: input, shape index: {}]
  %s7 = inlined_call_operand.hbm [shape: f32[16,128], index: 7, kind: input, shape index: {}]
  %s8 = inlined_call_operand.hbm [shape: f32[16,128], index: 8, kind: output, shape index: {}]
  %s9 = sld [smem:[#allocation0]]
  $region89: #{tpu_custom_call.1} parent=0
    _
  %s11 = ssub.s32 1, %s9
  %s12 = scalar_select 0, %s11, %s9
  %13 = sst [smem:[#allocation3]] %s2
  $region1: #{tpu_custom_call.1} parent=0
    #allocation4 [shape = 'u8[3145728]{0}', space=vmem, size = 0x300000, scoped, tag = 'input window, operand 0']
    #allocation5 [shape = 's32[2]{0}', space=sflag, size = 0x8, scoped, tag = 'scoped memory for tpu_custom_call.1']
    #allocation6 [shape = 's32[2]{0}', space=sflag, size = 0x8, scoped, tag = 'scoped memory for tpu_custom_call.1']
    #allocation7 [shape = 'u8[393216]{0}', space=vmem, size = 0x60000, scoped, tag = 'input window, operand 3, single buffered']
    #allocation8 [shape = 's32[1]{0}', space=sflag, size = 0x4, scoped, tag = 'scoped memory for tpu_custom_call.1']
    #allocation9 [shape = 'u8[512]{0}', space=vmem, size = 0x400, scoped, tag = 'input window, operand 4, single buffered']
    #allocation10 [shape = 'u8[131072]{0}', space=vmem, size = 0x20000, scoped, tag = 'input window, operand 5, single buffered']
    #allocation11 [shape = 's32[1]{0}', space=sflag, size = 0x4, scoped, tag = 'scoped memory for tpu_custom_call.1']
    #allocation12 [shape = 'u8[1024]{0}', space=vmem, size = 0x400, scoped, tag = 'input window, operand 6, single buffered']
    #allocation13 [shape = 'u8[8192]{0}', space=vmem, size = 0x2000, scoped, tag = 'input window, operand 7']
    #allocation14 [shape = 's32[2]{0}', space=sflag, size = 0x8, scoped, tag = 'scoped memory for tpu_custom_call.1']
    #allocation15 [shape = 'u8[8192]{0}', space=vmem, size = 0x2000, scoped, tag = 'output window, operand 0']
    %14 = vsyncpa [#allocation5], 0
    %s15 = scalar_lea.sflag [#allocation5], 1
    %16 = vsyncpa %s15, 0
    %17 = vsyncpa [#allocation8], 0
    %18 = vsyncpa [#allocation11], 0
    %19 = vsyncpa [#allocation14], 0
    %s20 = scalar_lea.sflag [#allocation14], 1
    %21 = vsyncpa %s20, 0
    %22 = vsyncpa [#allocation6], 0
    %s23 = scalar_lea.sflag [#allocation6], 1
    %24 = vsyncpa %s23, 0
    loop: start=0, step=1, limit=4
    $region2: #{tpu_custom_call.1} parent=1 // loop_pre_header
      _
    $region3: #{tpu_custom_call.1} parent=1 // loop_header
      %s26 = sphi 0, %s30
      %p27 = scmp.ge.s32.totalorder %s26, 4
      %s36 = sphi 0, %s38
      %s39 = sphi 0, %s36
      %s40 = sphi 0, %s39
      %s56 = sphi 0, %s40
      %s60 = sphi 0, %s60
      %s62 = sphi 0, %s60
      %s63 = sphi 0, %s62
      %s77 = sphi 0, %s63
      %s81 = sphi 0, %s81
      %s83 = sphi 0, %s81
      %s84 = sphi 0, %s83
      %s98 = sphi 0, %s84
      %s102 = sphi 0, %s102
      %s104 = sphi 0, %s102
      %s105 = sphi 0, %s104
      %s119 = sphi 0, %s105
      %s123 = sphi 0, %s123
      %s125 = sphi 0, %s123
      %s126 = sphi 0, %s125
      %s140 = sphi 0, %s126
      %s144 = sphi 0, %s144
      %s146 = sphi 0, %s144
      %s147 = sphi 0, %s146
      %s161 = sphi 0, %s147
      %s165 = sphi 0, %s165
      %s167 = sphi 0, %s165
      %s168 = sphi 0, %s167
      %s182 = sphi 0, %s168
      %s188 = sphi 0, %s190
      %s191 = sphi 0, %s188
      %s192 = sphi 0, %s191
      %s208 = sphi 0, %s192
      %s214 = sphi 0, %s216
      %s217 = sphi 0, %s214
      %s218 = sphi 0, %s217
      %s234 = sphi 0, %s218
    $region4: #{tpu_custom_call.1} parent=1 // loop_header_branch
      %29 = sbr.rel (%p27) target = $region8
    $region5: #{tpu_custom_call.1} parent=1 // loop_body
      %s31 = ssub.s32 %s26, 1
      %s32 = ssub.s32 %s26, 2
      %s33 = sadd.s32 %s26, 1
      %s34 = ssub.s32 %s26, %s33
      %p35 = scmp.eq.s32.totalorder %s34, 0
      %s37 = sadd.s32 %s36, 1
      %s38 = scalar_select %p35, %s36, %s37
      %p41 = pneg %p35
      %p42 = scmp.eq.s32.totalorder %s26, 1
      %p43 = por %p41, %p42
      %p44 = scmp.ne.s32.totalorder %s36, %s39
      %p45 = scmp.eq.s32.totalorder %s26, 0
      %p46 = por %p44, %p45
      %p47 = scmp.ne.s32.totalorder %s36, %s39
      %p48 = scmp.eq.s32.totalorder %s31, 1
      %p49 = por %p47, %p48
      %p50 = scmp.ne.s32.totalorder %s39, %s40
      %p51 = scmp.eq.s32.totalorder %s31, 0
      %p52 = por %p50, %p51
      %p53 = scmp.ne.s32.totalorder %s39, %s40
      %p54 = scmp.eq.s32.totalorder %s32, 1
      %p55 = por %p53, %p54
      %p57 = scmp.ne.s32.totalorder %s40, %s56
      %p58 = scmp.eq.s32.totalorder %s32, 0
      %p59 = por %p57, %p58
      %s61 = sadd.s32 %s60, 1
      %p64 = scmp.eq.s32.totalorder %s26, 1
      %p65 = scmp.ne.s32.totalorder %s60, %s62
      %p66 = scmp.eq.s32.totalorder %s26, 0
      %p67 = por %p65, %p66
      %p68 = scmp.ne.s32.totalorder %s60, %s62
      %p69 = scmp.eq.s32.totalorder %s31, 1
      %p70 = por %p68, %p69
      %p71 = scmp.ne.s32.totalorder %s62, %s63
      %p72 = scmp.eq.s32.totalorder %s31, 0
      %p73 = por %p71, %p72
      %p74 = scmp.ne.s32.totalorder %s62, %s63
      %p75 = scmp.eq.s32.totalorder %s32, 1
      %p76 = por %p74, %p75
      %p78 = scmp.ne.s32.totalorder %s63, %s77
      %p79 = scmp.eq.s32.totalorder %s32, 0
      %p80 = por %p78, %p79
      %s82 = sadd.s32 %s81, 1
      %p85 = scmp.eq.s32.totalorder %s26, 1
      %p86 = scmp.ne.s32.totalorder %s81, %s83
      %p87 = scmp.eq.s32.totalorder %s26, 0
      %p88 = por %p86, %p87
      %p89 = scmp.ne.s32.totalorder %s81, %s83
      %p90 = scmp.eq.s32.totalorder %s31, 1
      %p91 = por %p89, %p90
      %p92 = scmp.ne.s32.totalorder %s83, %s84
      %p93 = scmp.eq.s32.totalorder %s31, 0
      %p94 = por %p92, %p93
      %p95 = scmp.ne.s32.totalorder %s83, %s84
      %p96 = scmp.eq.s32.totalorder %s32, 1
      %p97 = por %p95, %p96
      %p99 = scmp.ne.s32.totalorder %s84, %s98
      %p100 = scmp.eq.s32.totalorder %s32, 0
      %p101 = por %p99, %p100
      %s103 = sadd.s32 %s102, 1
      %p106 = scmp.eq.s32.totalorder %s26, 1
      %p107 = scmp.ne.s32.totalorder %s102, %s104
      %p108 = scmp.eq.s32.totalorder %s26, 0
      %p109 = por %p107, %p108
      %p110 = scmp.ne.s32.totalorder %s102, %s104
      %p111 = scmp.eq.s32.totalorder %s31, 1
      %p112 = por %p110, %p111
      %p113 = scmp.ne.s32.totalorder %s104, %s105
      %p114 = scmp.eq.s32.totalorder %s31, 0
      %p115 = por %p113, %p114
      %p116 = scmp.ne.s32.totalorder %s104, %s105
      %p117 = scmp.eq.s32.totalorder %s32, 1
      %p118 = por %p116, %p117
      %p120 = scmp.ne.s32.totalorder %s105, %s119
      %p121 = scmp.eq.s32.totalorder %s32, 0
      %p122 = por %p120, %p121
      %s124 = sadd.s32 %s123, 1
      %p127 = scmp.eq.s32.totalorder %s26, 1
      %p128 = scmp.ne.s32.totalorder %s123, %s125
      %p129 = scmp.eq.s32.totalorder %s26, 0
      %p130 = por %p128, %p129
      %p131 = scmp.ne.s32.totalorder %s123, %s125
      %p132 = scmp.eq.s32.totalorder %s31, 1
      %p133 = por %p131, %p132
      %p134 = scmp.ne.s32.totalorder %s125, %s126
      %p135 = scmp.eq.s32.totalorder %s31, 0
      %p136 = por %p134, %p135
      %p137 = scmp.ne.s32.totalorder %s125, %s126
      %p138 = scmp.eq.s32.totalorder %s32, 1
      %p139 = por %p137, %p138
      %p141 = scmp.ne.s32.totalorder %s126, %s140
      %p142 = scmp.eq.s32.totalorder %s32, 0
      %p143 = por %p141, %p142
      %s145 = sadd.s32 %s144, 1
      %p148 = scmp.eq.s32.totalorder %s26, 1
      %p149 = scmp.ne.s32.totalorder %s144, %s146
      %p150 = scmp.eq.s32.totalorder %s26, 0
      %p151 = por %p149, %p150
      %p152 = scmp.ne.s32.totalorder %s144, %s146
      %p153 = scmp.eq.s32.totalorder %s31, 1
      %p154 = por %p152, %p153
      %p155 = scmp.ne.s32.totalorder %s146, %s147
      %p156 = scmp.eq.s32.totalorder %s31, 0
      %p157 = por %p155, %p156
      %p158 = scmp.ne.s32.totalorder %s146, %s147
      %p159 = scmp.eq.s32.totalorder %s32, 1
      %p160 = por %p158, %p159
      %p162 = scmp.ne.s32.totalorder %s147, %s161
      %p163 = scmp.eq.s32.totalorder %s32, 0
      %p164 = por %p162, %p163
      %s166 = sadd.s32 %s165, 1
      %p169 = scmp.eq.s32.totalorder %s26, 1
      %p170 = scmp.ne.s32.totalorder %s165, %s167
      %p171 = scmp.eq.s32.totalorder %s26, 0
      %p172 = por %p170, %p171
      %p173 = scmp.ne.s32.totalorder %s165, %s167
      %p174 = scmp.eq.s32.totalorder %s31, 1
      %p175 = por %p173, %p174
      %p176 = scmp.ne.s32.totalorder %s167, %s168
      %p177 = scmp.eq.s32.totalorder %s31, 0
      %p178 = por %p176, %p177
      %p179 = scmp.ne.s32.totalorder %s167, %s168
      %p180 = scmp.eq.s32.totalorder %s32, 1
      %p181 = por %p179, %p180
      %p183 = scmp.ne.s32.totalorder %s168, %s182
      %p184 = scmp.eq.s32.totalorder %s32, 0
      %p185 = por %p183, %p184
      %s186 = ssub.s32 %s26, %s33
      %p187 = scmp.eq.s32.totalorder %s186, 0
      %s189 = sadd.s32 %s188, 1
      %s190 = scalar_select %p187, %s188, %s189
      %p193 = pneg %p187
      %p194 = scmp.eq.s32.totalorder %s26, 1
      %p195 = por %p193, %p194
      %p196 = scmp.ne.s32.totalorder %s188, %s191
      %p197 = scmp.eq.s32.totalorder %s26, 0
      %p198 = por %p196, %p197
      %p199 = scmp.ne.s32.totalorder %s188, %s191
      %p200 = scmp.eq.s32.totalorder %s31, 1
      %p201 = por %p199, %p200
      %p202 = scmp.ne.s32.totalorder %s191, %s192
      %p203 = scmp.eq.s32.totalorder %s31, 0
      %p204 = por %p202, %p203
      %p205 = scmp.ne.s32.totalorder %s191, %s192
      %p206 = scmp.eq.s32.totalorder %s32, 1
      %p207 = por %p205, %p206
      %p209 = scmp.ne.s32.totalorder %s192, %s208
      %p210 = scmp.eq.s32.totalorder %s32, 0
      %p211 = por %p209, %p210
      %s212 = ssub.s32 %s26, %s33
      %p213 = scmp.eq.s32.totalorder %s212, 0
      %s215 = sadd.s32 %s214, 1
      %s216 = scalar_select %p213, %s214, %s215
      %p219 = pneg %p213
      %p220 = scmp.eq.s32.totalorder %s26, 1
      %p221 = por %p219, %p220
      %p222 = scmp.ne.s32.totalorder %s214, %s217
      %p223 = scmp.eq.s32.totalorder %s26, 0
      %p224 = por %p222, %p223
      %p225 = scmp.ne.s32.totalorder %s214, %s217
      %p226 = scmp.eq.s32.totalorder %s31, 1
      %p227 = por %p225, %p226
      %p228 = scmp.ne.s32.totalorder %s217, %s218
      %p229 = scmp.eq.s32.totalorder %s31, 0
      %p230 = por %p228, %p229
      %p231 = scmp.ne.s32.totalorder %s217, %s218
      %p232 = scmp.eq.s32.totalorder %s32, 1
      %p233 = por %p231, %p232
      %p235 = scmp.ne.s32.totalorder %s218, %s234
      %p236 = scmp.eq.s32.totalorder %s32, 0
      %p237 = por %p235, %p236
      %p238 = scmp.le.s32.totalorder 1, %s26
      %p239 = scmp.lt.s32.totalorder %s26, 3
      %p240 = pnand %p238, %p239
      %p241 = pneg %p240
      // Predicated region
      $region9: #{tpu_custom_call.1} parent=5 // pred_check
        _
      $region10: #{tpu_custom_call.1} parent=5 // pred_check_branch
        %243 = sbr.rel (%p240) target = $region12
      $region11: #{tpu_custom_call.1} parent=5 // pred_region
        %s244 = ssub.s32 %s26, 1
        // Predicated region
        $region13: #{tpu_custom_call.1} parent=11 // pred_check
          %p245 = pneg %p73
        $region14: #{tpu_custom_call.1} parent=11 // pred_check_branch
          %247 = sbr.rel (%p245) target = $region16
        $region15: #{tpu_custom_call.1} parent=11 // pred_region
          _
        $region16: #{tpu_custom_call.1} parent=11 // pred_fallthru
          _
        // Predicated region
        $region17: #{tpu_custom_call.1} parent=11 // pred_check
          %p248 = pneg %p94
        $region18: #{tpu_custom_call.1} parent=11 // pred_check_branch
          %250 = sbr.rel (%p248) target = $region20
        $region19: #{tpu_custom_call.1} parent=11 // pred_region
          _
        $region20: #{tpu_custom_call.1} parent=11 // pred_fallthru
          _
        // Predicated region
        $region21: #{tpu_custom_call.1} parent=11 // pred_check
          %p251 = pneg %p115
        $region22: #{tpu_custom_call.1} parent=11 // pred_check_branch
          %253 = sbr.rel (%p251) target = $region24
        $region23: #{tpu_custom_call.1} parent=11 // pred_region
          %s255 = ssub.s32 12288, 12288
          %256 = vsyncadd [#allocation8], %s255
          %s257 = sshll.u32 [#allocation7], 4
          %s258 = int_to_ptr.vmem [resolvable:$true] %s257
          %263 = dma.hbm_to_vmem [thread:$0]  %s3, 12288, %s258, [#allocation8], 128, 128, 8
        $region24: #{tpu_custom_call.1} parent=11 // pred_fallthru
          _
        // Predicated region
        $region25: #{tpu_custom_call.1} parent=11 // pred_check
          %p264 = pneg %p136
        $region26: #{tpu_custom_call.1} parent=11 // pred_check_branch
          %266 = sbr.rel (%p264) target = $region28
        $region27: #{tpu_custom_call.1} parent=11 // pred_region
          %s268 = ssub.s32 16, 16
          %269 = vsyncadd [#allocation8], %s268
          %s271 = sshll.u32 [#allocation9], 4
          %s272 = int_to_ptr.vmem [resolvable:$true] %s271
          %274 = dma.hbm_to_vmem [thread:$0]  %s4, 16, %s272, [#allocation8]
        $region28: #{tpu_custom_call.1} parent=11 // pred_fallthru
          _
        // Predicated region
        $region29: #{tpu_custom_call.1} parent=11 // pred_check
          %p275 = pneg %p157
        $region30: #{tpu_custom_call.1} parent=11 // pred_check_branch
          %277 = sbr.rel (%p275) target = $region32
        $region31: #{tpu_custom_call.1} parent=11 // pred_region
          %s279 = ssub.s32 4096, 4096
          %280 = vsyncadd [#allocation11], %s279
          %s281 = sshll.u32 [#allocation10], 4
          %s282 = int_to_ptr.vmem [resolvable:$true] %s281
          %287 = dma.hbm_to_vmem [thread:$0]  %s5, 4096, %s282, [#allocation11], 256, 256, 16
        $region32: #{tpu_custom_call.1} parent=11 // pred_fallthru
          _
        // Predicated region
        $region33: #{tpu_custom_call.1} parent=11 // pred_check
          %p288 = pneg %p178
        $region34: #{tpu_custom_call.1} parent=11 // pred_check_branch
          %290 = sbr.rel (%p288) target = $region36
        $region35: #{tpu_custom_call.1} parent=11 // pred_region
          %s292 = ssub.s32 32, 32
          %293 = vsyncadd [#allocation11], %s292
          %s295 = sshll.u32 [#allocation12], 4
          %s296 = int_to_ptr.vmem [resolvable:$true] %s295
          %298 = dma.hbm_to_vmem [thread:$0]  %s6, 32, %s296, [#allocation11]
        $region36: #{tpu_custom_call.1} parent=11 // pred_fallthru
          _
      $region12: #{tpu_custom_call.1} parent=5 // pred_fallthru
        _
      %p299 = scmp.lt.s32.totalorder %s26, 2
      // Predicated region
      $region37: #{tpu_custom_call.1} parent=5 // pred_check
        %p300 = pneg %p299
      $region38: #{tpu_custom_call.1} parent=5 // pred_check_branch
        %302 = sbr.rel (%p300) target = $region40
      $region39: #{tpu_custom_call.1} parent=5 // pred_region
        // Predicated region
        $region41: #{tpu_custom_call.1} parent=39 // pred_check
          %p303 = pneg %p46
        $region42: #{tpu_custom_call.1} parent=39 // pred_check_branch
          %305 = sbr.rel (%p303) target = $region44
        $region43: #{tpu_custom_call.1} parent=39 // pred_region
          %s306 = sand.u32 %s36, 1
          %s307 = scalar_lea.sflag [#allocation5], %s306
          %s308 = sand.u32 %s36, 1
          %s309 = smul.addr %s308, 3072
          %s310 = scalar_lea.vmem [#allocation4], %s309
          %s311 = smul.u32 8, %s26
          %s313 = ssub.s32 49152, 49152
          %314 = vsyncadd %s307, %s313
          %s315 = smul.addr %s311, 96
          %s316 = smul.addr %s315, 64
          %s317 = scalar_lea.hbm %s0, %s316
          %s318 = sshll.u32 %s310, 4
          %s319 = int_to_ptr.vmem [resolvable:$true] %s318
          %324 = dma.hbm_to_vmem [thread:$0]  %s317, 49152, %s319, %s307, 384, 384, 24
        $region44: #{tpu_custom_call.1} parent=39 // pred_fallthru
          _
        // Predicated region
        $region45: #{tpu_custom_call.1} parent=39 // pred_check
          %p325 = pneg %p198
        $region46: #{tpu_custom_call.1} parent=39 // pred_check_branch
          %327 = sbr.rel (%p325) target = $region48
        $region47: #{tpu_custom_call.1} parent=39 // pred_region
          %s328 = sand.u32 %s188, 1
          %s329 = scalar_lea.sflag [#allocation14], %s328
          %s330 = sand.u32 %s188, 1
          %s331 = smul.addr %s330, 8
          %s332 = scalar_lea.vmem [#allocation13], %s331
          %s334 = ssub.s32 128, 128
          %335 = vsyncadd %s329, %s334
          %s336 = smul.addr %s26, 128
          %s337 = scalar_lea.hbm %s7, %s336
          %s339 = sshll.u32 %s332, 4
          %s340 = int_to_ptr.vmem [resolvable:$true] %s339
          %342 = dma.hbm_to_vmem [thread:$0]  %s337, 128, %s340, %s329
        $region48: #{tpu_custom_call.1} parent=39 // pred_fallthru
          _
      $region40: #{tpu_custom_call.1} parent=5 // pred_fallthru
        _
      %p343 = scmp.le.s32.totalorder 1, %s26
      %p344 = scmp.lt.s32.totalorder %s26, 3
      %p345 = pnand %p343, %p344
      %p346 = pneg %p345
      // Predicated region
      $region49: #{tpu_custom_call.1} parent=5 // pred_check
        _
      $region50: #{tpu_custom_call.1} parent=5 // pred_check_branch
        %348 = sbr.rel (%p345) target = $region52
      $region51: #{tpu_custom_call.1} parent=5 // pred_region
        %s349 = ssub.s32 %s26, 1
        %s350 = sand.u32 %s39, 1
        %s351 = scalar_lea.sflag [#allocation5], %s350
        %s352 = sand.u32 %s39, 1
        %s353 = smul.addr %s352, 3072
        %s354 = scalar_lea.vmem [#allocation4], %s353
        // Predicated region
        $region53: #{tpu_custom_call.1} parent=51 // pred_check
          %p355 = pneg %p52
        $region54: #{tpu_custom_call.1} parent=51 // pred_check_branch
          %357 = sbr.rel (%p355) target = $region56
        $region55: #{tpu_custom_call.1} parent=51 // pred_region
          %358 = dma.done %s351, 49152
        $region56: #{tpu_custom_call.1} parent=51 // pred_fallthru
          _
        // Predicated region
        $region57: #{tpu_custom_call.1} parent=51 // pred_check
          %p359 = pneg %p115
        $region58: #{tpu_custom_call.1} parent=51 // pred_check_branch
          %361 = sbr.rel (%p359) target = $region60
        $region59: #{tpu_custom_call.1} parent=51 // pred_region
          %362 = dma.done [#allocation8], 12288
        $region60: #{tpu_custom_call.1} parent=51 // pred_fallthru
          _
        // Predicated region
        $region61: #{tpu_custom_call.1} parent=51 // pred_check
          %p363 = pneg %p136
        $region62: #{tpu_custom_call.1} parent=51 // pred_check_branch
          %365 = sbr.rel (%p363) target = $region64
        $region63: #{tpu_custom_call.1} parent=51 // pred_region
          %366 = dma.done [#allocation8], 16
        $region64: #{tpu_custom_call.1} parent=51 // pred_fallthru
          _
        // Predicated region
        $region65: #{tpu_custom_call.1} parent=51 // pred_check
          %p367 = pneg %p157
        $region66: #{tpu_custom_call.1} parent=51 // pred_check_branch
          %369 = sbr.rel (%p367) target = $region68
        $region67: #{tpu_custom_call.1} parent=51 // pred_region
          %370 = dma.done [#allocation11], 4096
        $region68: #{tpu_custom_call.1} parent=51 // pred_fallthru
          _
        // Predicated region
        $region69: #{tpu_custom_call.1} parent=51 // pred_check
          %p371 = pneg %p178
        $region70: #{tpu_custom_call.1} parent=51 // pred_check_branch
          %373 = sbr.rel (%p371) target = $region72
        $region71: #{tpu_custom_call.1} parent=51 // pred_region
          %374 = dma.done [#allocation11], 32
        $region72: #{tpu_custom_call.1} parent=51 // pred_fallthru
          _
        %s375 = sand.u32 %s191, 1
        %s376 = scalar_lea.sflag [#allocation14], %s375
        %s377 = sand.u32 %s191, 1
        %s378 = smul.addr %s377, 8
        %s379 = scalar_lea.vmem [#allocation13], %s378
        // Predicated region
        $region73: #{tpu_custom_call.1} parent=51 // pred_check
          %p380 = pneg %p204
        $region74: #{tpu_custom_call.1} parent=51 // pred_check_branch
          %382 = sbr.rel (%p380) target = $region76
        $region75: #{tpu_custom_call.1} parent=51 // pred_region
          %383 = dma.done %s376, 128
        $region76: #{tpu_custom_call.1} parent=51 // pred_fallthru
          _
        %s384 = sand.u32 %s39, 1
        %s385 = scalar_lea.sflag [#allocation5], %s384
        %s386 = sand.u32 %s39, 1
        %s387 = smul.addr %s386, 3072
        %s388 = scalar_lea.vmem [#allocation4], %s387
        %p389 = pneg %p52
        %p390 = pneg %p49
        %p391 = pneg %p73
        %p392 = pneg %p70
        %p393 = pneg %p94
        %p394 = pneg %p91
        %p395 = pneg %p115
        %p396 = pneg %p112
        %p397 = pneg %p136
        %p398 = pneg %p133
        %p399 = pneg %p157
        %p400 = pneg %p154
        %p401 = pneg %p178
        %p402 = pneg %p175
        %s403 = sand.u32 %s191, 1
        %s404 = scalar_lea.sflag [#allocation14], %s403
        %s405 = sand.u32 %s191, 1
        %s406 = smul.addr %s405, 8
        %s407 = scalar_lea.vmem [#allocation13], %s406
        %p408 = pneg %p204
        %p409 = pneg %p201
        %p410 = pneg %p230
        %p411 = pneg %p227
        %s412 = sand.u32 %s217, 1
        %s413 = scalar_lea.sflag [#allocation6], %s412
        %s414 = sand.u32 %s217, 1
        %s415 = smul.addr %s414, 8
        %s416 = scalar_lea.vmem [#allocation15], %s415
        %s417 = smul.u32 8, %s31
        %v418 = vld [vmem:[%s1] sm:$0xff]
        %v419 = vld [vmem:[%s1 + $0x8] sm:$0xff]
        %v420 = vld [vmem:[%s1 + $0x10] sm:$0xff]
        %v421 = vld [vmem:[%s1 + $0x18] sm:$0xff]
        %v422 = vld [vmem:[%s1 + $0x20] sm:$0xff]
        %v423 = vld [vmem:[%s1 + $0x28] sm:$0xff]
        %v424 = vld [vmem:[%s1 + $0x30] sm:$0xff]
        %v425 = vld [vmem:[%s1 + $0x38] sm:$0xff]
        %v426 = vld [vmem:[%s1 + $0x40] sm:$0xff]
        %v427 = vld [vmem:[%s1 + $0x48] sm:$0xff]
        %v428 = vld [vmem:[%s1 + $0x50] sm:$0xff]
        %v429 = vld [vmem:[%s1 + $0x58] sm:$0xff]
        %v430 = vld [vmem:[%s1 + $0x60] sm:$0xff]
        %v431 = vld [vmem:[%s1 + $0x68] sm:$0xff]
        %v432 = vld [vmem:[%s1 + $0x70] sm:$0xff]
        %v433 = vld [vmem:[%s1 + $0x78] sm:$0xff]
        %s434 = sld [smem:[#allocation3]]
        %v435 = vld [vmem:[%s354] sm:$0xf]
        %v436 = vld [vmem:[%s354 + $0x18] sm:$0xf]
        %v437 = vld [vmem:[%s354 + $0x30] sm:$0xf]
        %v438 = vld [vmem:[%s354 + $0x48] sm:$0xf]
        %v439 = vld [vmem:[%s354 + $0x60] sm:$0xf]
        %v440 = vld [vmem:[%s354 + $0x78] sm:$0xf]
        %v441 = vld [vmem:[%s354 + $0x90] sm:$0xf]
        %v442 = vld [vmem:[%s354 + $0xa8] sm:$0xf]
        %v443 = vld [vmem:[%s354 + $0xc0] sm:$0xf]
        %v444 = vld [vmem:[%s354 + $0xd8] sm:$0xf]
        %v445 = vld [vmem:[%s354 + $0xf0] sm:$0xf]
        %v446 = vld [vmem:[%s354 + $0x108] sm:$0xf]
        %v447 = vld [vmem:[%s354 + $0x120] sm:$0xf]
        %v448 = vld [vmem:[%s354 + $0x138] sm:$0xf]
        %v449 = vld [vmem:[%s354 + $0x150] sm:$0xf]
        %v450 = vld [vmem:[%s354 + $0x168] sm:$0xf]
        %v451 = vld [vmem:[%s354 + $0x180] sm:$0xf]
        %v452 = vld [vmem:[%s354 + $0x198] sm:$0xf]
        %v453 = vld [vmem:[%s354 + $0x1b0] sm:$0xf]
        %v454 = vld [vmem:[%s354 + $0x1c8] sm:$0xf]
        %v455 = vld [vmem:[%s354 + $0x1e0] sm:$0xf]
        %v456 = vld [vmem:[%s354 + $0x1f8] sm:$0xf]
        %v457 = vld [vmem:[%s354 + $0x210] sm:$0xf]
        %v458 = vld [vmem:[%s354 + $0x228] sm:$0xf]
        %v459 = vld [vmem:[%s354 + $0x240] sm:$0xf]
        %v460 = vld [vmem:[%s354 + $0x258] sm:$0xf]
        %v461 = vld [vmem:[%s354 + $0x270] sm:$0xf]
        %v462 = vld [vmem:[%s354 + $0x288] sm:$0xf]
        %v463 = vld [vmem:[%s354 + $0x2a0] sm:$0xf]
        %v464 = vld [vmem:[%s354 + $0x2b8] sm:$0xf]
        %v465 = vld [vmem:[%s354 + $0x2d0] sm:$0xf]
        %v466 = vld [vmem:[%s354 + $0x2e8] sm:$0xf]
        %v467 = vld [vmem:[%s354 + $0x300] sm:$0xf]
        %v468 = vld [vmem:[%s354 + $0x318] sm:$0xf]
        %v469 = vld [vmem:[%s354 + $0x330] sm:$0xf]
        %v470 = vld [vmem:[%s354 + $0x348] sm:$0xf]
        %v471 = vld [vmem:[%s354 + $0x360] sm:$0xf]
        %v472 = vld [vmem:[%s354 + $0x378] sm:$0xf]
        %v473 = vld [vmem:[%s354 + $0x390] sm:$0xf]
        %v474 = vld [vmem:[%s354 + $0x3a8] sm:$0xf]
        %v475 = vld [vmem:[%s354 + $0x3c0] sm:$0xf]
        %v476 = vld [vmem:[%s354 + $0x3d8] sm:$0xf]
        %v477 = vld [vmem:[%s354 + $0x3f0] sm:$0xf]
        %v478 = vld [vmem:[%s354 + $0x408] sm:$0xf]
        %v479 = vld [vmem:[%s354 + $0x420] sm:$0xf]
        %v480 = vld [vmem:[%s354 + $0x438] sm:$0xf]
        %v481 = vld [vmem:[%s354 + $0x450] sm:$0xf]
        %v482 = vld [vmem:[%s354 + $0x468] sm:$0xf]
        %v483 = vld [vmem:[%s354 + $0x480] sm:$0xf]
        %v484 = vld [vmem:[%s354 + $0x498] sm:$0xf]
        %v485 = vld [vmem:[%s354 + $0x4b0] sm:$0xf]
        %v486 = vld [vmem:[%s354 + $0x4c8] sm:$0xf]
        %v487 = vld [vmem:[%s354 + $0x4e0] sm:$0xf]
        %v488 = vld [vmem:[%s354 + $0x4f8] sm:$0xf]
        %v489 = vld [vmem:[%s354 + $0x510] sm:$0xf]
        %v490 = vld [vmem:[%s354 + $0x528] sm:$0xf]
        %v491 = vld [vmem:[%s354 + $0x540] sm:$0xf]
        %v492 = vld [vmem:[%s354 + $0x558] sm:$0xf]
        %v493 = vld [vmem:[%s354 + $0x570] sm:$0xf]
        %v494 = vld [vmem:[%s354 + $0x588] sm:$0xf]
        %v495 = vld [vmem:[%s354 + $0x5a0] sm:$0xf]
        %v496 = vld [vmem:[%s354 + $0x5b8] sm:$0xf]
        %v497 = vld [vmem:[%s354 + $0x5d0] sm:$0xf]
        %v498 = vld [vmem:[%s354 + $0x5e8] sm:$0xf]
        %v499 = vld [vmem:[%s354 + $0x600] sm:$0xf]
        %v500 = vld [vmem:[%s354 + $0x618] sm:$0xf]
        %v501 = vld [vmem:[%s354 + $0x630] sm:$0xf]
        %v502 = vld [vmem:[%s354 + $0x648] sm:$0xf]
        %v503 = vld [vmem:[%s354 + $0x660] sm:$0xf]
        %v504 = vld [vmem:[%s354 + $0x678] sm:$0xf]
        %v505 = vld [vmem:[%s354 + $0x690] sm:$0xf]
        %v506 = vld [vmem:[%s354 + $0x6a8] sm:$0xf]
        %v507 = vld [vmem:[%s354 + $0x6c0] sm:$0xf]
        %v508 = vld [vmem:[%s354 + $0x6d8] sm:$0xf]
        %v509 = vld [vmem:[%s354 + $0x6f0] sm:$0xf]
        %v510 = vld [vmem:[%s354 + $0x708] sm:$0xf]
        %v511 = vld [vmem:[%s354 + $0x720] sm:$0xf]
        %v512 = vld [vmem:[%s354 + $0x738] sm:$0xf]
        %v513 = vld [vmem:[%s354 + $0x750] sm:$0xf]
        %v514 = vld [vmem:[%s354 + $0x768] sm:$0xf]
        %v515 = vld [vmem:[%s354 + $0x780] sm:$0xf]
        %v516 = vld [vmem:[%s354 + $0x798] sm:$0xf]
        %v517 = vld [vmem:[%s354 + $0x7b0] sm:$0xf]
        %v518 = vld [vmem:[%s354 + $0x7c8] sm:$0xf]
        %v519 = vld [vmem:[%s354 + $0x7e0] sm:$0xf]
        %v520 = vld [vmem:[%s354 + $0x7f8] sm:$0xf]
        %v521 = vld [vmem:[%s354 + $0x810] sm:$0xf]
        %v522 = vld [vmem:[%s354 + $0x828] sm:$0xf]
        %v523 = vld [vmem:[%s354 + $0x840] sm:$0xf]
        %v524 = vld [vmem:[%s354 + $0x858] sm:$0xf]
        %v525 = vld [vmem:[%s354 + $0x870] sm:$0xf]
        %v526 = vld [vmem:[%s354 + $0x888] sm:$0xf]
        %v527 = vld [vmem:[%s354 + $0x8a0] sm:$0xf]
        %v528 = vld [vmem:[%s354 + $0x8b8] sm:$0xf]
        %v529 = vld [vmem:[%s354 + $0x8d0] sm:$0xf]
        %v530 = vld [vmem:[%s354 + $0x8e8] sm:$0xf]
        %v531 = vld [vmem:[%s354 + $0x900] sm:$0xf]
        %v532 = vld [vmem:[%s354 + $0x918] sm:$0xf]
        %v533 = vld [vmem:[%s354 + $0x930] sm:$0xf]
        %v534 = vld [vmem:[%s354 + $0x948] sm:$0xf]
        %v535 = vld [vmem:[%s354 + $0x960] sm:$0xf]
        %v536 = vld [vmem:[%s354 + $0x978] sm:$0xf]
        %v537 = vld [vmem:[%s354 + $0x990] sm:$0xf]
        %v538 = vld [vmem:[%s354 + $0x9a8] sm:$0xf]
        %v539 = vld [vmem:[%s354 + $0x9c0] sm:$0xf]
        %v540 = vld [vmem:[%s354 + $0x9d8] sm:$0xf]
        %v541 = vld [vmem:[%s354 + $0x9f0] sm:$0xf]
        %v542 = vld [vmem:[%s354 + $0xa08] sm:$0xf]
        %v543 = vld [vmem:[%s354 + $0xa20] sm:$0xf]
        %v544 = vld [vmem:[%s354 + $0xa38] sm:$0xf]
        %v545 = vld [vmem:[%s354 + $0xa50] sm:$0xf]
        %v546 = vld [vmem:[%s354 + $0xa68] sm:$0xf]
        %v547 = vld [vmem:[%s354 + $0xa80] sm:$0xf]
        %v548 = vld [vmem:[%s354 + $0xa98] sm:$0xf]
        %v549 = vld [vmem:[%s354 + $0xab0] sm:$0xf]
        %v550 = vld [vmem:[%s354 + $0xac8] sm:$0xf]
        %v551 = vld [vmem:[%s354 + $0xae0] sm:$0xf]
        %v552 = vld [vmem:[%s354 + $0xaf8] sm:$0xf]
        %v553 = vld [vmem:[%s354 + $0xb10] sm:$0xf]
        %v554 = vld [vmem:[%s354 + $0xb28] sm:$0xf]
        %v555 = vld [vmem:[%s354 + $0xb40] sm:$0xf]
        %v556 = vld [vmem:[%s354 + $0xb58] sm:$0xf]
        %v557 = vld [vmem:[%s354 + $0xb70] sm:$0xf]
        %v558 = vld [vmem:[%s354 + $0xb88] sm:$0xf]
        %v559 = vld [vmem:[%s354 + $0xba0] sm:$0xf]
        %v560 = vld [vmem:[%s354 + $0xbb8] sm:$0xf]
        %v561 = vld [vmem:[%s354 + $0xbd0] sm:$0xf]
        %v562 = vld [vmem:[%s354 + $0xbe8] sm:$0xf]
        %v563 = vunpack.c.l.bf16 %v435
        %v564 = vunpack.c.l.bf16 %v436
        %v565 = vunpack.c.l.bf16 %v437
        %v566 = vunpack.c.l.bf16 %v438
        %v567 = vunpack.c.l.bf16 %v439
        %v568 = vunpack.c.l.bf16 %v440
        %v569 = vunpack.c.l.bf16 %v441
        %v570 = vunpack.c.l.bf16 %v442
        %v571 = vunpack.c.l.bf16 %v443
        %v572 = vunpack.c.l.bf16 %v444
        %v573 = vunpack.c.l.bf16 %v445
        %v574 = vunpack.c.l.bf16 %v446
        %v575 = vunpack.c.l.bf16 %v447
        %v576 = vunpack.c.l.bf16 %v448
        %v577 = vunpack.c.l.bf16 %v449
        %v578 = vunpack.c.l.bf16 %v450
        %v579 = vunpack.c.l.bf16 %v451
        %v580 = vunpack.c.l.bf16 %v452
        %v581 = vunpack.c.l.bf16 %v453
        %v582 = vunpack.c.l.bf16 %v454
        %v583 = vunpack.c.l.bf16 %v455
        %v584 = vunpack.c.l.bf16 %v456
        %v585 = vunpack.c.l.bf16 %v457
        %v586 = vunpack.c.l.bf16 %v458
        %v587 = vunpack.c.l.bf16 %v459
        %v588 = vunpack.c.l.bf16 %v460
        %v589 = vunpack.c.l.bf16 %v461
        %v590 = vunpack.c.l.bf16 %v462
        %v591 = vunpack.c.l.bf16 %v463
        %v592 = vunpack.c.l.bf16 %v464
        %v593 = vunpack.c.l.bf16 %v465
        %v594 = vunpack.c.l.bf16 %v466
        %v595 = vunpack.c.l.bf16 %v467
        %v596 = vunpack.c.l.bf16 %v468
        %v597 = vunpack.c.l.bf16 %v469
        %v598 = vunpack.c.l.bf16 %v470
        %v599 = vunpack.c.l.bf16 %v471
        %v600 = vunpack.c.l.bf16 %v472
        %v601 = vunpack.c.l.bf16 %v473
        %v602 = vunpack.c.l.bf16 %v474
        %v603 = vunpack.c.l.bf16 %v475
        %v604 = vunpack.c.l.bf16 %v476
        %v605 = vunpack.c.l.bf16 %v477
        %v606 = vunpack.c.l.bf16 %v478
        %v607 = vunpack.c.l.bf16 %v479
        %v608 = vunpack.c.l.bf16 %v480
        %v609 = vunpack.c.l.bf16 %v481
        %v610 = vunpack.c.l.bf16 %v482
        %v611 = vunpack.c.l.bf16 %v483
        %v612 = vunpack.c.l.bf16 %v484
        %v613 = vunpack.c.l.bf16 %v485
        %v614 = vunpack.c.l.bf16 %v486
        %v615 = vunpack.c.l.bf16 %v487
        %v616 = vunpack.c.l.bf16 %v488
        %v617 = vunpack.c.l.bf16 %v489
        %v618 = vunpack.c.l.bf16 %v490
        %v619 = vunpack.c.l.bf16 %v491
        %v620 = vunpack.c.l.bf16 %v492
        %v621 = vunpack.c.l.bf16 %v493
        %v622 = vunpack.c.l.bf16 %v494
        %v623 = vunpack.c.l.bf16 %v495
        %v624 = vunpack.c.l.bf16 %v496
        %v625 = vunpack.c.l.bf16 %v497
        %v626 = vunpack.c.l.bf16 %v498
        %v627 = vunpack.c.l.bf16 %v499
        %v628 = vunpack.c.l.bf16 %v500
        %v629 = vunpack.c.l.bf16 %v501
        %v630 = vunpack.c.l.bf16 %v502
        %v631 = vunpack.c.l.bf16 %v503
        %v632 = vunpack.c.l.bf16 %v504
        %v633 = vunpack.c.l.bf16 %v505
        %v634 = vunpack.c.l.bf16 %v506
        %v635 = vunpack.c.l.bf16 %v507
        %v636 = vunpack.c.l.bf16 %v508
        %v637 = vunpack.c.l.bf16 %v509
        %v638 = vunpack.c.l.bf16 %v510
        %v639 = vunpack.c.l.bf16 %v511
        %v640 = vunpack.c.l.bf16 %v512
        %v641 = vunpack.c.l.bf16 %v513
        %v642 = vunpack.c.l.bf16 %v514
        %v643 = vunpack.c.l.bf16 %v515
        %v644 = vunpack.c.l.bf16 %v516
        %v645 = vunpack.c.l.bf16 %v517
        %v646 = vunpack.c.l.bf16 %v518
        %v647 = vunpack.c.l.bf16 %v519
        %v648 = vunpack.c.l.bf16 %v520
        %v649 = vunpack.c.l.bf16 %v521
        %v650 = vunpack.c.l.bf16 %v522
        %v651 = vunpack.c.l.bf16 %v523
        %v652 = vunpack.c.l.bf16 %v524
        %v653 = vunpack.c.l.bf16 %v525
        %v654 = vunpack.c.l.bf16 %v526
        %v655 = vunpack.c.l.bf16 %v527
        %v656 = vunpack.c.l.bf16 %v528
        %v657 = vunpack.c.l.bf16 %v529
        %v658 = vunpack.c.l.bf16 %v530
        %v659 = vunpack.c.l.bf16 %v531
        %v660 = vunpack.c.l.bf16 %v532
        %v661 = vunpack.c.l.bf16 %v533
        %v662 = vunpack.c.l.bf16 %v534
        %v663 = vunpack.c.l.bf16 %v535
        %v664 = vunpack.c.l.bf16 %v536
        %v665 = vunpack.c.l.bf16 %v537
        %v666 = vunpack.c.l.bf16 %v538
        %v667 = vunpack.c.l.bf16 %v539
        %v668 = vunpack.c.l.bf16 %v540
        %v669 = vunpack.c.l.bf16 %v541
        %v670 = vunpack.c.l.bf16 %v542
        %v671 = vunpack.c.l.bf16 %v543
        %v672 = vunpack.c.l.bf16 %v544
        %v673 = vunpack.c.l.bf16 %v545
        %v674 = vunpack.c.l.bf16 %v546
        %v675 = vunpack.c.l.bf16 %v547
        %v676 = vunpack.c.l.bf16 %v548
        %v677 = vunpack.c.l.bf16 %v549
        %v678 = vunpack.c.l.bf16 %v550
        %v679 = vunpack.c.l.bf16 %v551
        %v680 = vunpack.c.l.bf16 %v552
        %v681 = vunpack.c.l.bf16 %v553
        %v682 = vunpack.c.l.bf16 %v554
        %v683 = vunpack.c.l.bf16 %v555
        %v684 = vunpack.c.l.bf16 %v556
        %v685 = vunpack.c.l.bf16 %v557
        %v686 = vunpack.c.l.bf16 %v558
        %v687 = vunpack.c.l.bf16 %v559
        %v688 = vunpack.c.l.bf16 %v560
        %v689 = vunpack.c.l.bf16 %v561
        %v690 = vunpack.c.l.bf16 %v562
        %692 = vset.pattern.permute.xlu0 0
        %693 = vperm.xlu0 %692, %v418
        %v694 = vpop.permute.xlu0 %693
        %697 = vset.pattern.permute.xlu0 0
        %698 = vperm.xlu0 %697, %v419
        %v699 = vpop.permute.xlu0 %698
        %702 = vset.pattern.permute.xlu0 0
        %703 = vperm.xlu0 %702, %v420
        %v704 = vpop.permute.xlu0 %703
        %707 = vset.pattern.permute.xlu0 0
        %708 = vperm.xlu0 %707, %v421
        %v709 = vpop.permute.xlu0 %708
        %712 = vset.pattern.permute.xlu0 0
        %713 = vperm.xlu0 %712, %v422
        %v714 = vpop.permute.xlu0 %713
        %717 = vset.pattern.permute.xlu0 0
        %718 = vperm.xlu0 %717, %v423
        %v719 = vpop.permute.xlu0 %718
        %722 = vset.pattern.permute.xlu0 0
        %723 = vperm.xlu0 %722, %v424
        %v724 = vpop.permute.xlu0 %723
        %727 = vset.pattern.permute.xlu0 0
        %728 = vperm.xlu0 %727, %v425
        %v729 = vpop.permute.xlu0 %728
        %732 = vset.pattern.permute.xlu0 0
        %733 = vperm.xlu0 %732, %v426
        %v734 = vpop.permute.xlu0 %733
        %737 = vset.pattern.permute.xlu0 0
        %738 = vperm.xlu0 %737, %v427
        %v739 = vpop.permute.xlu0 %738
        %742 = vset.pattern.permute.xlu0 0
        %743 = vperm.xlu0 %742, %v428
        %v744 = vpop.permute.xlu0 %743
        %747 = vset.pattern.permute.xlu0 0
        %748 = vperm.xlu0 %747, %v429
        %v749 = vpop.permute.xlu0 %748
        %752 = vset.pattern.permute.xlu0 0
        %753 = vperm.xlu0 %752, %v430
        %v754 = vpop.permute.xlu0 %753
        %757 = vset.pattern.permute.xlu0 0
        %758 = vperm.xlu0 %757, %v431
        %v759 = vpop.permute.xlu0 %758
        %762 = vset.pattern.permute.xlu0 0
        %763 = vperm.xlu0 %762, %v432
        %v764 = vpop.permute.xlu0 %763
        %767 = vset.pattern.permute.xlu0 0
        %768 = vperm.xlu0 %767, %v433
        %v769 = vpop.permute.xlu0 %768
        %v771 = vmul.f32 %v563, %v694
        %v772 = vmul.f32 %v564, %v699
        %v773 = vmul.f32 %v565, %v704
        %v774 = vmul.f32 %v566, %v709
        %v775 = vmul.f32 %v567, %v714
        %v776 = vmul.f32 %v568, %v719
        %v777 = vmul.f32 %v569, %v724
        %v778 = vmul.f32 %v570, %v729
        %v779 = vmul.f32 %v571, %v734
        %v780 = vmul.f32 %v572, %v739
        %v781 = vmul.f32 %v573, %v744
        %v782 = vmul.f32 %v574, %v749
        %v783 = vmul.f32 %v575, %v754
        %v784 = vmul.f32 %v576, %v759
        %v785 = vmul.f32 %v577, %v764
        %v786 = vmul.f32 %v578, %v769
        %v787 = vmul.f32 %v579, %v694
        %v788 = vmul.f32 %v580, %v699
        %v789 = vmul.f32 %v581, %v704
        %v790 = vmul.f32 %v582, %v709
        %v791 = vmul.f32 %v583, %v714
        %v792 = vmul.f32 %v584, %v719
        %v793 = vmul.f32 %v585, %v724
        %v794 = vmul.f32 %v586, %v729
        %v795 = vmul.f32 %v587, %v734
        %v796 = vmul.f32 %v588, %v739
        %v797 = vmul.f32 %v589, %v744
        %v798 = vmul.f32 %v590, %v749
        %v799 = vmul.f32 %v591, %v754
        %v800 = vmul.f32 %v592, %v759
        %v801 = vmul.f32 %v593, %v764
        %v802 = vmul.f32 %v594, %v769
        %v803 = vmul.f32 %v595, %v694
        %v804 = vmul.f32 %v596, %v699
        %v805 = vmul.f32 %v597, %v704
        %v806 = vmul.f32 %v598, %v709
        %v807 = vmul.f32 %v599, %v714
        %v808 = vmul.f32 %v600, %v719
        %v809 = vmul.f32 %v601, %v724
        %v810 = vmul.f32 %v602, %v729
        %v811 = vmul.f32 %v603, %v734
        %v812 = vmul.f32 %v604, %v739
        %v813 = vmul.f32 %v605, %v744
        %v814 = vmul.f32 %v606, %v749
        %v815 = vmul.f32 %v607, %v754
        %v816 = vmul.f32 %v608, %v759
        %v817 = vmul.f32 %v609, %v764
        %v818 = vmul.f32 %v610, %v769
        %v819 = vmul.f32 %v611, %v694
        %v820 = vmul.f32 %v612, %v699
        %v821 = vmul.f32 %v613, %v704
        %v822 = vmul.f32 %v614, %v709
        %v823 = vmul.f32 %v615, %v714
        %v824 = vmul.f32 %v616, %v719
        %v825 = vmul.f32 %v617, %v724
        %v826 = vmul.f32 %v618, %v729
        %v827 = vmul.f32 %v619, %v734
        %v828 = vmul.f32 %v620, %v739
        %v829 = vmul.f32 %v621, %v744
        %v830 = vmul.f32 %v622, %v749
        %v831 = vmul.f32 %v623, %v754
        %v832 = vmul.f32 %v624, %v759
        %v833 = vmul.f32 %v625, %v764
        %v834 = vmul.f32 %v626, %v769
        %v835 = vmul.f32 %v627, %v694
        %v836 = vmul.f32 %v628, %v699
        %v837 = vmul.f32 %v629, %v704
        %v838 = vmul.f32 %v630, %v709
        %v839 = vmul.f32 %v631, %v714
        %v840 = vmul.f32 %v632, %v719
        %v841 = vmul.f32 %v633, %v724
        %v842 = vmul.f32 %v634, %v729
        %v843 = vmul.f32 %v635, %v734
        %v844 = vmul.f32 %v636, %v739
        %v845 = vmul.f32 %v637, %v744
        %v846 = vmul.f32 %v638, %v749
        %v847 = vmul.f32 %v639, %v754
        %v848 = vmul.f32 %v640, %v759
        %v849 = vmul.f32 %v641, %v764
        %v850 = vmul.f32 %v642, %v769
        %v851 = vmul.f32 %v643, %v694
        %v852 = vmul.f32 %v644, %v699
        %v853 = vmul.f32 %v645, %v704
        %v854 = vmul.f32 %v646, %v709
        %v855 = vmul.f32 %v647, %v714
        %v856 = vmul.f32 %v648, %v719
        %v857 = vmul.f32 %v649, %v724
        %v858 = vmul.f32 %v650, %v729
        %v859 = vmul.f32 %v651, %v734
        %v860 = vmul.f32 %v652, %v739
        %v861 = vmul.f32 %v653, %v744
        %v862 = vmul.f32 %v654, %v749
        %v863 = vmul.f32 %v655, %v754
        %v864 = vmul.f32 %v656, %v759
        %v865 = vmul.f32 %v657, %v764
        %v866 = vmul.f32 %v658, %v769
        %v867 = vmul.f32 %v659, %v694
        %v868 = vmul.f32 %v660, %v699
        %v869 = vmul.f32 %v661, %v704
        %v870 = vmul.f32 %v662, %v709
        %v871 = vmul.f32 %v663, %v714
        %v872 = vmul.f32 %v664, %v719
        %v873 = vmul.f32 %v665, %v724
        %v874 = vmul.f32 %v666, %v729
        %v875 = vmul.f32 %v667, %v734
        %v876 = vmul.f32 %v668, %v739
        %v877 = vmul.f32 %v669, %v744
        %v878 = vmul.f32 %v670, %v749
        %v879 = vmul.f32 %v671, %v754
        %v880 = vmul.f32 %v672, %v759
        %v881 = vmul.f32 %v673, %v764
        %v882 = vmul.f32 %v674, %v769
        %v883 = vmul.f32 %v675, %v694
        %v884 = vmul.f32 %v676, %v699
        %v885 = vmul.f32 %v677, %v704
        %v886 = vmul.f32 %v678, %v709
        %v887 = vmul.f32 %v679, %v714
        %v888 = vmul.f32 %v680, %v719
        %v889 = vmul.f32 %v681, %v724
        %v890 = vmul.f32 %v682, %v729
        %v891 = vmul.f32 %v683, %v734
        %v892 = vmul.f32 %v684, %v739
        %v893 = vmul.f32 %v685, %v744
        %v894 = vmul.f32 %v686, %v749
        %v895 = vmul.f32 %v687, %v754
        %v896 = vmul.f32 %v688, %v759
        %v897 = vmul.f32 %v689, %v764
        %v898 = vmul.f32 %v690, %v769
        %v899 = vadd.f32 %v771, %v772
        %v900 = vadd.f32 %v899, %v773
        %v901 = vadd.f32 %v900, %v774
        %v902 = vadd.f32 %v901, %v775
        %v903 = vadd.f32 %v902, %v776
        %v904 = vadd.f32 %v903, %v777
        %v905 = vadd.f32 %v904, %v778
        %v906 = vadd.f32 %v905, %v779
        %v907 = vadd.f32 %v906, %v780
        %v908 = vadd.f32 %v907, %v781
        %v909 = vadd.f32 %v908, %v782
        %v910 = vadd.f32 %v909, %v783
        %v911 = vadd.f32 %v910, %v784
        %v912 = vadd.f32 %v911, %v785
        %v913 = vadd.f32 %v912, %v786
        %v914 = vrot.slane %v913, 4
        %v915 = vadd.f32 %v913, %v914
        %v916 = vrot.slane %v915, 2
        %v917 = vadd.f32 %v915, %v916
        %v918 = vrot.slane %v917, 1
        %v919 = vadd.f32 %v917, %v918
        %v920 = vadd.f32 %v787, %v788
        %v921 = vadd.f32 %v920, %v789
        %v922 = vadd.f32 %v921, %v790
        %v923 = vadd.f32 %v922, %v791
        %v924 = vadd.f32 %v923, %v792
        %v925 = vadd.f32 %v924, %v793
        %v926 = vadd.f32 %v925, %v794
        %v927 = vadd.f32 %v926, %v795
        %v928 = vadd.f32 %v927, %v796
        %v929 = vadd.f32 %v928, %v797
        %v930 = vadd.f32 %v929, %v798
        %v931 = vadd.f32 %v930, %v799
        %v932 = vadd.f32 %v931, %v800
        %v933 = vadd.f32 %v932, %v801
        %v934 = vadd.f32 %v933, %v802
        %v935 = vrot.slane %v934, 4
        %v936 = vadd.f32 %v934, %v935
        %v937 = vrot.slane %v936, 2
        %v938 = vadd.f32 %v936, %v937
        %v939 = vrot.slane %v938, 1
        %v940 = vadd.f32 %v938, %v939
        %v941 = vadd.f32 %v803, %v804
        %v942 = vadd.f32 %v941, %v805
        %v943 = vadd.f32 %v942, %v806
        %v944 = vadd.f32 %v943, %v807
        %v945 = vadd.f32 %v944, %v808
        %v946 = vadd.f32 %v945, %v809
        %v947 = vadd.f32 %v946, %v810
        %v948 = vadd.f32 %v947, %v811
        %v949 = vadd.f32 %v948, %v812
        %v950 = vadd.f32 %v949, %v813
        %v951 = vadd.f32 %v950, %v814
        %v952 = vadd.f32 %v951, %v815
        %v953 = vadd.f32 %v952, %v816
        %v954 = vadd.f32 %v953, %v817
        %v955 = vadd.f32 %v954, %v818
        %v956 = vrot.slane %v955, 4
        %v957 = vadd.f32 %v955, %v956
        %v958 = vrot.slane %v957, 2
        %v959 = vadd.f32 %v957, %v958
        %v960 = vrot.slane %v959, 1
        %v961 = vadd.f32 %v959, %v960
        %v962 = vadd.f32 %v819, %v820
        %v963 = vadd.f32 %v962, %v821
        %v964 = vadd.f32 %v963, %v822
        %v965 = vadd.f32 %v964, %v823
        %v966 = vadd.f32 %v965, %v824
        %v967 = vadd.f32 %v966, %v825
        %v968 = vadd.f32 %v967, %v826
        %v969 = vadd.f32 %v968, %v827
        %v970 = vadd.f32 %v969, %v828
        %v971 = vadd.f32 %v970, %v829
        %v972 = vadd.f32 %v971, %v830
        %v973 = vadd.f32 %v972, %v831
        %v974 = vadd.f32 %v973, %v832
        %v975 = vadd.f32 %v974, %v833
        %v976 = vadd.f32 %v975, %v834
        %v977 = vrot.slane %v976, 4
        %v978 = vadd.f32 %v976, %v977
        %v979 = vrot.slane %v978, 2
        %v980 = vadd.f32 %v978, %v979
        %v981 = vrot.slane %v980, 1
        %v982 = vadd.f32 %v980, %v981
        %v983 = vadd.f32 %v835, %v836
        %v984 = vadd.f32 %v983, %v837
        %v985 = vadd.f32 %v984, %v838
        %v986 = vadd.f32 %v985, %v839
        %v987 = vadd.f32 %v986, %v840
        %v988 = vadd.f32 %v987, %v841
        %v989 = vadd.f32 %v988, %v842
        %v990 = vadd.f32 %v989, %v843
        %v991 = vadd.f32 %v990, %v844
        %v992 = vadd.f32 %v991, %v845
        %v993 = vadd.f32 %v992, %v846
        %v994 = vadd.f32 %v993, %v847
        %v995 = vadd.f32 %v994, %v848
        %v996 = vadd.f32 %v995, %v849
        %v997 = vadd.f32 %v996, %v850
        %v998 = vrot.slane %v997, 4
        %v999 = vadd.f32 %v997, %v998
        %v1000 = vrot.slane %v999, 2
        %v1001 = vadd.f32 %v999, %v1000
        %v1002 = vrot.slane %v1001, 1
        %v1003 = vadd.f32 %v1001, %v1002
        %v1004 = vadd.f32 %v851, %v852
        %v1005 = vadd.f32 %v1004, %v853
        %v1006 = vadd.f32 %v1005, %v854
        %v1007 = vadd.f32 %v1006, %v855
        %v1008 = vadd.f32 %v1007, %v856
        %v1009 = vadd.f32 %v1008, %v857
        %v1010 = vadd.f32 %v1009, %v858
        %v1011 = vadd.f32 %v1010, %v859
        %v1012 = vadd.f32 %v1011, %v860
        %v1013 = vadd.f32 %v1012, %v861
        %v1014 = vadd.f32 %v1013, %v862
        %v1015 = vadd.f32 %v1014, %v863
        %v1016 = vadd.f32 %v1015, %v864
        %v1017 = vadd.f32 %v1016, %v865
        %v1018 = vadd.f32 %v1017, %v866
        %v1019 = vrot.slane %v1018, 4
        %v1020 = vadd.f32 %v1018, %v1019
        %v1021 = vrot.slane %v1020, 2
        %v1022 = vadd.f32 %v1020, %v1021
        %v1023 = vrot.slane %v1022, 1
        %v1024 = vadd.f32 %v1022, %v1023
        %v1025 = vadd.f32 %v867, %v868
        %v1026 = vadd.f32 %v1025, %v869
        %v1027 = vadd.f32 %v1026, %v870
        %v1028 = vadd.f32 %v1027, %v871
        %v1029 = vadd.f32 %v1028, %v872
        %v1030 = vadd.f32 %v1029, %v873
        %v1031 = vadd.f32 %v1030, %v874
        %v1032 = vadd.f32 %v1031, %v875
        %v1033 = vadd.f32 %v1032, %v876
        %v1034 = vadd.f32 %v1033, %v877
        %v1035 = vadd.f32 %v1034, %v878
        %v1036 = vadd.f32 %v1035, %v879
        %v1037 = vadd.f32 %v1036, %v880
        %v1038 = vadd.f32 %v1037, %v881
        %v1039 = vadd.f32 %v1038, %v882
        %v1040 = vrot.slane %v1039, 4
        %v1041 = vadd.f32 %v1039, %v1040
        %v1042 = vrot.slane %v1041, 2
        %v1043 = vadd.f32 %v1041, %v1042
        %v1044 = vrot.slane %v1043, 1
        %v1045 = vadd.f32 %v1043, %v1044
        %v1046 = vadd.f32 %v883, %v884
        %v1047 = vadd.f32 %v1046, %v885
        %v1048 = vadd.f32 %v1047, %v886
        %v1049 = vadd.f32 %v1048, %v887
        %v1050 = vadd.f32 %v1049, %v888
        %v1051 = vadd.f32 %v1050, %v889
        %v1052 = vadd.f32 %v1051, %v890
        %v1053 = vadd.f32 %v1052, %v891
        %v1054 = vadd.f32 %v1053, %v892
        %v1055 = vadd.f32 %v1054, %v893
        %v1056 = vadd.f32 %v1055, %v894
        %v1057 = vadd.f32 %v1056, %v895
        %v1058 = vadd.f32 %v1057, %v896
        %v1059 = vadd.f32 %v1058, %v897
        %v1060 = vadd.f32 %v1059, %v898
        %v1061 = vrot.slane %v1060, 4
        %v1062 = vadd.f32 %v1060, %v1061
        %v1063 = vrot.slane %v1062, 2
        %v1064 = vadd.f32 %v1062, %v1063
        %v1065 = vrot.slane %v1064, 1
        %v1066 = vadd.f32 %v1064, %v1065
        %v1067 = vstv %s434
        %v1068 = vadd.f32 %v919, %v1067
        %v1069 = vadd.f32 %v940, %v1067
        %v1070 = vadd.f32 %v961, %v1067
        %v1071 = vadd.f32 %v982, %v1067
        %v1072 = vadd.f32 %v1003, %v1067
        %v1073 = vadd.f32 %v1024, %v1067
        %v1074 = vadd.f32 %v1045, %v1067
        %v1075 = vadd.f32 %v1066, %v1067
        %vm1084 = vcmask 1041409
        %v1085 = vsel %vm1084, %v1069, %v1068
        %vm1086 = vcmask 1042434
        %v1087 = vsel %vm1086, %v1070, %v1085
        %vm1088 = vcmask 1043459
        %v1089 = vsel %vm1088, %v1071, %v1087
        %vm1090 = vcmask 1044484
        %v1091 = vsel %vm1090, %v1072, %v1089
        %vm1092 = vcmask 1045509
        %v1093 = vsel %vm1092, %v1073, %v1091
        %vm1094 = vcmask 1046534
        %v1095 = vsel %vm1094, %v1074, %v1093
        %vm1096 = vcmask 1047559
        %v1097 = vsel %vm1096, %v1075, %v1095
        %1099 = vst [vmem:[#allocation2] sm:$0xff] %v1097
        %s1100 = scalar_lea.vmem %s354, 4 [#allocation4]
        %v1101 = vld [vmem:[%s1100] sm:$0xf]
        %v1102 = vld [vmem:[%s1100 + $0x18] sm:$0xf]
        %v1103 = vld [vmem:[%s1100 + $0x30] sm:$0xf]
        %v1104 = vld [vmem:[%s1100 + $0x48] sm:$0xf]
        %v1105 = vld [vmem:[%s1100 + $0x60] sm:$0xf]
        %v1106 = vld [vmem:[%s1100 + $0x78] sm:$0xf]
        %v1107 = vld [vmem:[%s1100 + $0x90] sm:$0xf]
        %v1108 = vld [vmem:[%s1100 + $0xa8] sm:$0xf]
        %v1109 = vld [vmem:[%s1100 + $0xc0] sm:$0xf]
        %v1110 = vld [vmem:[%s1100 + $0xd8] sm:$0xf]
        %v1111 = vld [vmem:[%s1100 + $0xf0] sm:$0xf]
        %v1112 = vld [vmem:[%s1100 + $0x108] sm:$0xf]
        %v1113 = vld [vmem:[%s1100 + $0x120] sm:$0xf]
        %v1114 = vld [vmem:[%s1100 + $0x138] sm:$0xf]
        %v1115 = vld [vmem:[%s1100 + $0x150] sm:$0xf]
        %v1116 = vld [vmem:[%s1100 + $0x168] sm:$0xf]
        %v1117 = vld [vmem:[%s1100 + $0x180] sm:$0xf]
        %v1118 = vld [vmem:[%s1100 + $0x198] sm:$0xf]
        %v1119 = vld [vmem:[%s1100 + $0x1b0] sm:$0xf]
        %v1120 = vld [vmem:[%s1100 + $0x1c8] sm:$0xf]
        %v1121 = vld [vmem:[%s1100 + $0x1e0] sm:$0xf]
        %v1122 = vld [vmem:[%s1100 + $0x1f8] sm:$0xf]
        %v1123 = vld [vmem:[%s1100 + $0x210] sm:$0xf]
        %v1124 = vld [vmem:[%s1100 + $0x228] sm:$0xf]
        %v1125 = vld [vmem:[%s1100 + $0x240] sm:$0xf]
        %v1126 = vld [vmem:[%s1100 + $0x258] sm:$0xf]
        %v1127 = vld [vmem:[%s1100 + $0x270] sm:$0xf]
        %v1128 = vld [vmem:[%s1100 + $0x288] sm:$0xf]
        %v1129 = vld [vmem:[%s1100 + $0x2a0] sm:$0xf]
        %v1130 = vld [vmem:[%s1100 + $0x2b8] sm:$0xf]
        %v1131 = vld [vmem:[%s1100 + $0x2d0] sm:$0xf]
        %v1132 = vld [vmem:[%s1100 + $0x2e8] sm:$0xf]
        %v1133 = vld [vmem:[%s1100 + $0x300] sm:$0xf]
        %v1134 = vld [vmem:[%s1100 + $0x318] sm:$0xf]
        %v1135 = vld [vmem:[%s1100 + $0x330] sm:$0xf]
        %v1136 = vld [vmem:[%s1100 + $0x348] sm:$0xf]
        %v1137 = vld [vmem:[%s1100 + $0x360] sm:$0xf]
        %v1138 = vld [vmem:[%s1100 + $0x378] sm:$0xf]
        %v1139 = vld [vmem:[%s1100 + $0x390] sm:$0xf]
        %v1140 = vld [vmem:[%s1100 + $0x3a8] sm:$0xf]
        %v1141 = vld [vmem:[%s1100 + $0x3c0] sm:$0xf]
        %v1142 = vld [vmem:[%s1100 + $0x3d8] sm:$0xf]
        %v1143 = vld [vmem:[%s1100 + $0x3f0] sm:$0xf]
        %v1144 = vld [vmem:[%s1100 + $0x408] sm:$0xf]
        %v1145 = vld [vmem:[%s1100 + $0x420] sm:$0xf]
        %v1146 = vld [vmem:[%s1100 + $0x438] sm:$0xf]
        %v1147 = vld [vmem:[%s1100 + $0x450] sm:$0xf]
        %v1148 = vld [vmem:[%s1100 + $0x468] sm:$0xf]
        %v1149 = vld [vmem:[%s1100 + $0x480] sm:$0xf]
        %v1150 = vld [vmem:[%s1100 + $0x498] sm:$0xf]
        %v1151 = vld [vmem:[%s1100 + $0x4b0] sm:$0xf]
        %v1152 = vld [vmem:[%s1100 + $0x4c8] sm:$0xf]
        %v1153 = vld [vmem:[%s1100 + $0x4e0] sm:$0xf]
        %v1154 = vld [vmem:[%s1100 + $0x4f8] sm:$0xf]
        %v1155 = vld [vmem:[%s1100 + $0x510] sm:$0xf]
        %v1156 = vld [vmem:[%s1100 + $0x528] sm:$0xf]
        %v1157 = vld [vmem:[%s1100 + $0x540] sm:$0xf]
        %v1158 = vld [vmem:[%s1100 + $0x558] sm:$0xf]
        %v1159 = vld [vmem:[%s1100 + $0x570] sm:$0xf]
        %v1160 = vld [vmem:[%s1100 + $0x588] sm:$0xf]
        %v1161 = vld [vmem:[%s1100 + $0x5a0] sm:$0xf]
        %v1162 = vld [vmem:[%s1100 + $0x5b8] sm:$0xf]
        %v1163 = vld [vmem:[%s1100 + $0x5d0] sm:$0xf]
        %v1164 = vld [vmem:[%s1100 + $0x5e8] sm:$0xf]
        %v1165 = vld [vmem:[%s1100 + $0x600] sm:$0xf]
        %v1166 = vld [vmem:[%s1100 + $0x618] sm:$0xf]
        %v1167 = vld [vmem:[%s1100 + $0x630] sm:$0xf]
        %v1168 = vld [vmem:[%s1100 + $0x648] sm:$0xf]
        %v1169 = vld [vmem:[%s1100 + $0x660] sm:$0xf]
        %v1170 = vld [vmem:[%s1100 + $0x678] sm:$0xf]
        %v1171 = vld [vmem:[%s1100 + $0x690] sm:$0xf]
        %v1172 = vld [vmem:[%s1100 + $0x6a8] sm:$0xf]
        %v1173 = vld [vmem:[%s1100 + $0x6c0] sm:$0xf]
        %v1174 = vld [vmem:[%s1100 + $0x6d8] sm:$0xf]
        %v1175 = vld [vmem:[%s1100 + $0x6f0] sm:$0xf]
        %v1176 = vld [vmem:[%s1100 + $0x708] sm:$0xf]
        %v1177 = vld [vmem:[%s1100 + $0x720] sm:$0xf]
        %v1178 = vld [vmem:[%s1100 + $0x738] sm:$0xf]
        %v1179 = vld [vmem:[%s1100 + $0x750] sm:$0xf]
        %v1180 = vld [vmem:[%s1100 + $0x768] sm:$0xf]
        %v1181 = vld [vmem:[%s1100 + $0x780] sm:$0xf]
        %v1182 = vld [vmem:[%s1100 + $0x798] sm:$0xf]
        %v1183 = vld [vmem:[%s1100 + $0x7b0] sm:$0xf]
        %v1184 = vld [vmem:[%s1100 + $0x7c8] sm:$0xf]
        %v1185 = vld [vmem:[%s1100 + $0x7e0] sm:$0xf]
        %v1186 = vld [vmem:[%s1100 + $0x7f8] sm:$0xf]
        %v1187 = vld [vmem:[%s1100 + $0x810] sm:$0xf]
        %v1188 = vld [vmem:[%s1100 + $0x828] sm:$0xf]
        %v1189 = vld [vmem:[%s1100 + $0x840] sm:$0xf]
        %v1190 = vld [vmem:[%s1100 + $0x858] sm:$0xf]
        %v1191 = vld [vmem:[%s1100 + $0x870] sm:$0xf]
        %v1192 = vld [vmem:[%s1100 + $0x888] sm:$0xf]
        %v1193 = vld [vmem:[%s1100 + $0x8a0] sm:$0xf]
        %v1194 = vld [vmem:[%s1100 + $0x8b8] sm:$0xf]
        %v1195 = vld [vmem:[%s1100 + $0x8d0] sm:$0xf]
        %v1196 = vld [vmem:[%s1100 + $0x8e8] sm:$0xf]
        %v1197 = vld [vmem:[%s1100 + $0x900] sm:$0xf]
        %v1198 = vld [vmem:[%s1100 + $0x918] sm:$0xf]
        %v1199 = vld [vmem:[%s1100 + $0x930] sm:$0xf]
        %v1200 = vld [vmem:[%s1100 + $0x948] sm:$0xf]
        %v1201 = vld [vmem:[%s1100 + $0x960] sm:$0xf]
        %v1202 = vld [vmem:[%s1100 + $0x978] sm:$0xf]
        %v1203 = vld [vmem:[%s1100 + $0x990] sm:$0xf]
        %v1204 = vld [vmem:[%s1100 + $0x9a8] sm:$0xf]
        %v1205 = vld [vmem:[%s1100 + $0x9c0] sm:$0xf]
        %v1206 = vld [vmem:[%s1100 + $0x9d8] sm:$0xf]
        %v1207 = vld [vmem:[%s1100 + $0x9f0] sm:$0xf]
        %v1208 = vld [vmem:[%s1100 + $0xa08] sm:$0xf]
        %v1209 = vld [vmem:[%s1100 + $0xa20] sm:$0xf]
        %v1210 = vld [vmem:[%s1100 + $0xa38] sm:$0xf]
        %v1211 = vld [vmem:[%s1100 + $0xa50] sm:$0xf]
        %v1212 = vld [vmem:[%s1100 + $0xa68] sm:$0xf]
        %v1213 = vld [vmem:[%s1100 + $0xa80] sm:$0xf]
        %v1214 = vld [vmem:[%s1100 + $0xa98] sm:$0xf]
        %v1215 = vld [vmem:[%s1100 + $0xab0] sm:$0xf]
        %v1216 = vld [vmem:[%s1100 + $0xac8] sm:$0xf]
        %v1217 = vld [vmem:[%s1100 + $0xae0] sm:$0xf]
        %v1218 = vld [vmem:[%s1100 + $0xaf8] sm:$0xf]
        %v1219 = vld [vmem:[%s1100 + $0xb10] sm:$0xf]
        %v1220 = vld [vmem:[%s1100 + $0xb28] sm:$0xf]
        %v1221 = vld [vmem:[%s1100 + $0xb40] sm:$0xf]
        %v1222 = vld [vmem:[%s1100 + $0xb58] sm:$0xf]
        %v1223 = vld [vmem:[%s1100 + $0xb70] sm:$0xf]
        %v1224 = vld [vmem:[%s1100 + $0xb88] sm:$0xf]
        %v1225 = vld [vmem:[%s1100 + $0xba0] sm:$0xf]
        %v1226 = vld [vmem:[%s1100 + $0xbb8] sm:$0xf]
        %v1227 = vld [vmem:[%s1100 + $0xbd0] sm:$0xf]
        %v1228 = vld [vmem:[%s1100 + $0xbe8] sm:$0xf]
        %v1229 = vunpack.c.l.bf16 %v1101
        %v1230 = vunpack.c.l.bf16 %v1102
        %v1231 = vunpack.c.l.bf16 %v1103
        %v1232 = vunpack.c.l.bf16 %v1104
        %v1233 = vunpack.c.l.bf16 %v1105
        %v1234 = vunpack.c.l.bf16 %v1106
        %v1235 = vunpack.c.l.bf16 %v1107
        %v1236 = vunpack.c.l.bf16 %v1108
        %v1237 = vunpack.c.l.bf16 %v1109
        %v1238 = vunpack.c.l.bf16 %v1110
        %v1239 = vunpack.c.l.bf16 %v1111
        %v1240 = vunpack.c.l.bf16 %v1112
        %v1241 = vunpack.c.l.bf16 %v1113
        %v1242 = vunpack.c.l.bf16 %v1114
        %v1243 = vunpack.c.l.bf16 %v1115
        %v1244 = vunpack.c.l.bf16 %v1116
        %v1245 = vunpack.c.l.bf16 %v1117
        %v1246 = vunpack.c.l.bf16 %v1118
        %v1247 = vunpack.c.l.bf16 %v1119
        %v1248 = vunpack.c.l.bf16 %v1120
        %v1249 = vunpack.c.l.bf16 %v1121
        %v1250 = vunpack.c.l.bf16 %v1122
        %v1251 = vunpack.c.l.bf16 %v1123
        %v1252 = vunpack.c.l.bf16 %v1124
        %v1253 = vunpack.c.l.bf16 %v1125
        %v1254 = vunpack.c.l.bf16 %v1126
        %v1255 = vunpack.c.l.bf16 %v1127
        %v1256 = vunpack.c.l.bf16 %v1128
        %v1257 = vunpack.c.l.bf16 %v1129
        %v1258 = vunpack.c.l.bf16 %v1130
        %v1259 = vunpack.c.l.bf16 %v1131
        %v1260 = vunpack.c.l.bf16 %v1132
        %v1261 = vunpack.c.l.bf16 %v1133
        %v1262 = vunpack.c.l.bf16 %v1134
        %v1263 = vunpack.c.l.bf16 %v1135
        %v1264 = vunpack.c.l.bf16 %v1136
        %v1265 = vunpack.c.l.bf16 %v1137
        %v1266 = vunpack.c.l.bf16 %v1138
        %v1267 = vunpack.c.l.bf16 %v1139
        %v1268 = vunpack.c.l.bf16 %v1140
        %v1269 = vunpack.c.l.bf16 %v1141
        %v1270 = vunpack.c.l.bf16 %v1142
        %v1271 = vunpack.c.l.bf16 %v1143
        %v1272 = vunpack.c.l.bf16 %v1144
        %v1273 = vunpack.c.l.bf16 %v1145
        %v1274 = vunpack.c.l.bf16 %v1146
        %v1275 = vunpack.c.l.bf16 %v1147
        %v1276 = vunpack.c.l.bf16 %v1148
        %v1277 = vunpack.c.l.bf16 %v1149
        %v1278 = vunpack.c.l.bf16 %v1150
        %v1279 = vunpack.c.l.bf16 %v1151
        %v1280 = vunpack.c.l.bf16 %v1152
        %v1281 = vunpack.c.l.bf16 %v1153
        %v1282 = vunpack.c.l.bf16 %v1154
        %v1283 = vunpack.c.l.bf16 %v1155
        %v1284 = vunpack.c.l.bf16 %v1156
        %v1285 = vunpack.c.l.bf16 %v1157
        %v1286 = vunpack.c.l.bf16 %v1158
        %v1287 = vunpack.c.l.bf16 %v1159
        %v1288 = vunpack.c.l.bf16 %v1160
        %v1289 = vunpack.c.l.bf16 %v1161
        %v1290 = vunpack.c.l.bf16 %v1162
        %v1291 = vunpack.c.l.bf16 %v1163
        %v1292 = vunpack.c.l.bf16 %v1164
        %v1293 = vunpack.c.l.bf16 %v1165
        %v1294 = vunpack.c.l.bf16 %v1166
        %v1295 = vunpack.c.l.bf16 %v1167
        %v1296 = vunpack.c.l.bf16 %v1168
        %v1297 = vunpack.c.l.bf16 %v1169
        %v1298 = vunpack.c.l.bf16 %v1170
        %v1299 = vunpack.c.l.bf16 %v1171
        %v1300 = vunpack.c.l.bf16 %v1172
        %v1301 = vunpack.c.l.bf16 %v1173
        %v1302 = vunpack.c.l.bf16 %v1174
        %v1303 = vunpack.c.l.bf16 %v1175
        %v1304 = vunpack.c.l.bf16 %v1176
        %v1305 = vunpack.c.l.bf16 %v1177
        %v1306 = vunpack.c.l.bf16 %v1178
        %v1307 = vunpack.c.l.bf16 %v1179
        %v1308 = vunpack.c.l.bf16 %v1180
        %v1309 = vunpack.c.l.bf16 %v1181
        %v1310 = vunpack.c.l.bf16 %v1182
        %v1311 = vunpack.c.l.bf16 %v1183
        %v1312 = vunpack.c.l.bf16 %v1184
        %v1313 = vunpack.c.l.bf16 %v1185
        %v1314 = vunpack.c.l.bf16 %v1186
        %v1315 = vunpack.c.l.bf16 %v1187
        %v1316 = vunpack.c.l.bf16 %v1188
        %v1317 = vunpack.c.l.bf16 %v1189
        %v1318 = vunpack.c.l.bf16 %v1190
        %v1319 = vunpack.c.l.bf16 %v1191
        %v1320 = vunpack.c.l.bf16 %v1192
        %v1321 = vunpack.c.l.bf16 %v1193
        %v1322 = vunpack.c.l.bf16 %v1194
        %v1323 = vunpack.c.l.bf16 %v1195
        %v1324 = vunpack.c.l.bf16 %v1196
        %v1325 = vunpack.c.l.bf16 %v1197
        %v1326 = vunpack.c.l.bf16 %v1198
        %v1327 = vunpack.c.l.bf16 %v1199
        %v1328 = vunpack.c.l.bf16 %v1200
        %v1329 = vunpack.c.l.bf16 %v1201
        %v1330 = vunpack.c.l.bf16 %v1202
        %v1331 = vunpack.c.l.bf16 %v1203
        %v1332 = vunpack.c.l.bf16 %v1204
        %v1333 = vunpack.c.l.bf16 %v1205
        %v1334 = vunpack.c.l.bf16 %v1206
        %v1335 = vunpack.c.l.bf16 %v1207
        %v1336 = vunpack.c.l.bf16 %v1208
        %v1337 = vunpack.c.l.bf16 %v1209
        %v1338 = vunpack.c.l.bf16 %v1210
        %v1339 = vunpack.c.l.bf16 %v1211
        %v1340 = vunpack.c.l.bf16 %v1212
        %v1341 = vunpack.c.l.bf16 %v1213
        %v1342 = vunpack.c.l.bf16 %v1214
        %v1343 = vunpack.c.l.bf16 %v1215
        %v1344 = vunpack.c.l.bf16 %v1216
        %v1345 = vunpack.c.l.bf16 %v1217
        %v1346 = vunpack.c.l.bf16 %v1218
        %v1347 = vunpack.c.l.bf16 %v1219
        %v1348 = vunpack.c.l.bf16 %v1220
        %v1349 = vunpack.c.l.bf16 %v1221
        %v1350 = vunpack.c.l.bf16 %v1222
        %v1351 = vunpack.c.l.bf16 %v1223
        %v1352 = vunpack.c.l.bf16 %v1224
        %v1353 = vunpack.c.l.bf16 %v1225
        %v1354 = vunpack.c.l.bf16 %v1226
        %v1355 = vunpack.c.l.bf16 %v1227
        %v1356 = vunpack.c.l.bf16 %v1228
        %v1357 = vmul.f32 %v1229, %v694
        %v1358 = vmul.f32 %v1230, %v699
        %v1359 = vmul.f32 %v1231, %v704
        %v1360 = vmul.f32 %v1232, %v709
        %v1361 = vmul.f32 %v1233, %v714
        %v1362 = vmul.f32 %v1234, %v719
        %v1363 = vmul.f32 %v1235, %v724
        %v1364 = vmul.f32 %v1236, %v729
        %v1365 = vmul.f32 %v1237, %v734
        %v1366 = vmul.f32 %v1238, %v739
        %v1367 = vmul.f32 %v1239, %v744
        %v1368 = vmul.f32 %v1240, %v749
        %v1369 = vmul.f32 %v1241, %v754
        %v1370 = vmul.f32 %v1242, %v759
        %v1371 = vmul.f32 %v1243, %v764
        %v1372 = vmul.f32 %v1244, %v769
        %v1373 = vmul.f32 %v1245, %v694
        %v1374 = vmul.f32 %v1246, %v699
        %v1375 = vmul.f32 %v1247, %v704
        %v1376 = vmul.f32 %v1248, %v709
        %v1377 = vmul.f32 %v1249, %v714
        %v1378 = vmul.f32 %v1250, %v719
        %v1379 = vmul.f32 %v1251, %v724
        %v1380 = vmul.f32 %v1252, %v729
        %v1381 = vmul.f32 %v1253, %v734
        %v1382 = vmul.f32 %v1254, %v739
        %v1383 = vmul.f32 %v1255, %v744
        %v1384 = vmul.f32 %v1256, %v749
        %v1385 = vmul.f32 %v1257, %v754
        %v1386 = vmul.f32 %v1258, %v759
        %v1387 = vmul.f32 %v1259, %v764
        %v1388 = vmul.f32 %v1260, %v769
        %v1389 = vmul.f32 %v1261, %v694
        %v1390 = vmul.f32 %v1262, %v699
        %v1391 = vmul.f32 %v1263, %v704
        %v1392 = vmul.f32 %v1264, %v709
        %v1393 = vmul.f32 %v1265, %v714
        %v1394 = vmul.f32 %v1266, %v719
        %v1395 = vmul.f32 %v1267, %v724
        %v1396 = vmul.f32 %v1268, %v729
        %v1397 = vmul.f32 %v1269, %v734
        %v1398 = vmul.f32 %v1270, %v739
        %v1399 = vmul.f32 %v1271, %v744
        %v1400 = vmul.f32 %v1272, %v749
        %v1401 = vmul.f32 %v1273, %v754
        %v1402 = vmul.f32 %v1274, %v759
        %v1403 = vmul.f32 %v1275, %v764
        %v1404 = vmul.f32 %v1276, %v769
        %v1405 = vmul.f32 %v1277, %v694
        %v1406 = vmul.f32 %v1278, %v699
        %v1407 = vmul.f32 %v1279, %v704
        %v1408 = vmul.f32 %v1280, %v709
        %v1409 = vmul.f32 %v1281, %v714
        %v1410 = vmul.f32 %v1282, %v719
        %v1411 = vmul.f32 %v1283, %v724
        %v1412 = vmul.f32 %v1284, %v729
        %v1413 = vmul.f32 %v1285, %v734
        %v1414 = vmul.f32 %v1286, %v739
        %v1415 = vmul.f32 %v1287, %v744
        %v1416 = vmul.f32 %v1288, %v749
        %v1417 = vmul.f32 %v1289, %v754
        %v1418 = vmul.f32 %v1290, %v759
        %v1419 = vmul.f32 %v1291, %v764
        %v1420 = vmul.f32 %v1292, %v769
        %v1421 = vmul.f32 %v1293, %v694
        %v1422 = vmul.f32 %v1294, %v699
        %v1423 = vmul.f32 %v1295, %v704
        %v1424 = vmul.f32 %v1296, %v709
        %v1425 = vmul.f32 %v1297, %v714
        %v1426 = vmul.f32 %v1298, %v719
        %v1427 = vmul.f32 %v1299, %v724
        %v1428 = vmul.f32 %v1300, %v729
        %v1429 = vmul.f32 %v1301, %v734
        %v1430 = vmul.f32 %v1302, %v739
        %v1431 = vmul.f32 %v1303, %v744
        %v1432 = vmul.f32 %v1304, %v749
        %v1433 = vmul.f32 %v1305, %v754
        %v1434 = vmul.f32 %v1306, %v759
        %v1435 = vmul.f32 %v1307, %v764
        %v1436 = vmul.f32 %v1308, %v769
        %v1437 = vmul.f32 %v1309, %v694
        %v1438 = vmul.f32 %v1310, %v699
        %v1439 = vmul.f32 %v1311, %v704
        %v1440 = vmul.f32 %v1312, %v709
        %v1441 = vmul.f32 %v1313, %v714
        %v1442 = vmul.f32 %v1314, %v719
        %v1443 = vmul.f32 %v1315, %v724
        %v1444 = vmul.f32 %v1316, %v729
        %v1445 = vmul.f32 %v1317, %v734
        %v1446 = vmul.f32 %v1318, %v739
        %v1447 = vmul.f32 %v1319, %v744
        %v1448 = vmul.f32 %v1320, %v749
        %v1449 = vmul.f32 %v1321, %v754
        %v1450 = vmul.f32 %v1322, %v759
        %v1451 = vmul.f32 %v1323, %v764
        %v1452 = vmul.f32 %v1324, %v769
        %v1453 = vmul.f32 %v1325, %v694
        %v1454 = vmul.f32 %v1326, %v699
        %v1455 = vmul.f32 %v1327, %v704
        %v1456 = vmul.f32 %v1328, %v709
        %v1457 = vmul.f32 %v1329, %v714
        %v1458 = vmul.f32 %v1330, %v719
        %v1459 = vmul.f32 %v1331, %v724
        %v1460 = vmul.f32 %v1332, %v729
        %v1461 = vmul.f32 %v1333, %v734
        %v1462 = vmul.f32 %v1334, %v739
        %v1463 = vmul.f32 %v1335, %v744
        %v1464 = vmul.f32 %v1336, %v749
        %v1465 = vmul.f32 %v1337, %v754
        %v1466 = vmul.f32 %v1338, %v759
        %v1467 = vmul.f32 %v1339, %v764
        %v1468 = vmul.f32 %v1340, %v769
        %v1469 = vmul.f32 %v1341, %v694
        %v1470 = vmul.f32 %v1342, %v699
        %v1471 = vmul.f32 %v1343, %v704
        %v1472 = vmul.f32 %v1344, %v709
        %v1473 = vmul.f32 %v1345, %v714
        %v1474 = vmul.f32 %v1346, %v719
        %v1475 = vmul.f32 %v1347, %v724
        %v1476 = vmul.f32 %v1348, %v729
        %v1477 = vmul.f32 %v1349, %v734
        %v1478 = vmul.f32 %v1350, %v739
        %v1479 = vmul.f32 %v1351, %v744
        %v1480 = vmul.f32 %v1352, %v749
        %v1481 = vmul.f32 %v1353, %v754
        %v1482 = vmul.f32 %v1354, %v759
        %v1483 = vmul.f32 %v1355, %v764
        %v1484 = vmul.f32 %v1356, %v769
        %v1485 = vadd.f32 %v1357, %v1358
        %v1486 = vadd.f32 %v1485, %v1359
        %v1487 = vadd.f32 %v1486, %v1360
        %v1488 = vadd.f32 %v1487, %v1361
        %v1489 = vadd.f32 %v1488, %v1362
        %v1490 = vadd.f32 %v1489, %v1363
        %v1491 = vadd.f32 %v1490, %v1364
        %v1492 = vadd.f32 %v1491, %v1365
        %v1493 = vadd.f32 %v1492, %v1366
        %v1494 = vadd.f32 %v1493, %v1367
        %v1495 = vadd.f32 %v1494, %v1368
        %v1496 = vadd.f32 %v1495, %v1369
        %v1497 = vadd.f32 %v1496, %v1370
        %v1498 = vadd.f32 %v1497, %v1371
        %v1499 = vadd.f32 %v1498, %v1372
        %v1500 = vrot.slane %v1499, 4
        %v1501 = vadd.f32 %v1499, %v1500
        %v1502 = vrot.slane %v1501, 2
        %v1503 = vadd.f32 %v1501, %v1502
        %v1504 = vrot.slane %v1503, 1
        %v1505 = vadd.f32 %v1503, %v1504
        %v1506 = vadd.f32 %v1373, %v1374
        %v1507 = vadd.f32 %v1506, %v1375
        %v1508 = vadd.f32 %v1507, %v1376
        %v1509 = vadd.f32 %v1508, %v1377
        %v1510 = vadd.f32 %v1509, %v1378
        %v1511 = vadd.f32 %v1510, %v1379
        %v1512 = vadd.f32 %v1511, %v1380
        %v1513 = vadd.f32 %v1512, %v1381
        %v1514 = vadd.f32 %v1513, %v1382
        %v1515 = vadd.f32 %v1514, %v1383
        %v1516 = vadd.f32 %v1515, %v1384
        %v1517 = vadd.f32 %v1516, %v1385
        %v1518 = vadd.f32 %v1517, %v1386
        %v1519 = vadd.f32 %v1518, %v1387
        %v1520 = vadd.f32 %v1519, %v1388
        %v1521 = vrot.slane %v1520, 4
        %v1522 = vadd.f32 %v1520, %v1521
        %v1523 = vrot.slane %v1522, 2
        %v1524 = vadd.f32 %v1522, %v1523
        %v1525 = vrot.slane %v1524, 1
        %v1526 = vadd.f32 %v1524, %v1525
        %v1527 = vadd.f32 %v1389, %v1390
        %v1528 = vadd.f32 %v1527, %v1391
        %v1529 = vadd.f32 %v1528, %v1392
        %v1530 = vadd.f32 %v1529, %v1393
        %v1531 = vadd.f32 %v1530, %v1394
        %v1532 = vadd.f32 %v1531, %v1395
        %v1533 = vadd.f32 %v1532, %v1396
        %v1534 = vadd.f32 %v1533, %v1397
        %v1535 = vadd.f32 %v1534, %v1398
        %v1536 = vadd.f32 %v1535, %v1399
        %v1537 = vadd.f32 %v1536, %v1400
        %v1538 = vadd.f32 %v1537, %v1401
        %v1539 = vadd.f32 %v1538, %v1402
        %v1540 = vadd.f32 %v1539, %v1403
        %v1541 = vadd.f32 %v1540, %v1404
        %v1542 = vrot.slane %v1541, 4
        %v1543 = vadd.f32 %v1541, %v1542
        %v1544 = vrot.slane %v1543, 2
        %v1545 = vadd.f32 %v1543, %v1544
        %v1546 = vrot.slane %v1545, 1
        %v1547 = vadd.f32 %v1545, %v1546
        %v1548 = vadd.f32 %v1405, %v1406
        %v1549 = vadd.f32 %v1548, %v1407
        %v1550 = vadd.f32 %v1549, %v1408
        %v1551 = vadd.f32 %v1550, %v1409
        %v1552 = vadd.f32 %v1551, %v1410
        %v1553 = vadd.f32 %v1552, %v1411
        %v1554 = vadd.f32 %v1553, %v1412
        %v1555 = vadd.f32 %v1554, %v1413
        %v1556 = vadd.f32 %v1555, %v1414
        %v1557 = vadd.f32 %v1556, %v1415
        %v1558 = vadd.f32 %v1557, %v1416
        %v1559 = vadd.f32 %v1558, %v1417
        %v1560 = vadd.f32 %v1559, %v1418
        %v1561 = vadd.f32 %v1560, %v1419
        %v1562 = vadd.f32 %v1561, %v1420
        %v1563 = vrot.slane %v1562, 4
        %v1564 = vadd.f32 %v1562, %v1563
        %v1565 = vrot.slane %v1564, 2
        %v1566 = vadd.f32 %v1564, %v1565
        %v1567 = vrot.slane %v1566, 1
        %v1568 = vadd.f32 %v1566, %v1567
        %v1569 = vadd.f32 %v1421, %v1422
        %v1570 = vadd.f32 %v1569, %v1423
        %v1571 = vadd.f32 %v1570, %v1424
        %v1572 = vadd.f32 %v1571, %v1425
        %v1573 = vadd.f32 %v1572, %v1426
        %v1574 = vadd.f32 %v1573, %v1427
        %v1575 = vadd.f32 %v1574, %v1428
        %v1576 = vadd.f32 %v1575, %v1429
        %v1577 = vadd.f32 %v1576, %v1430
        %v1578 = vadd.f32 %v1577, %v1431
        %v1579 = vadd.f32 %v1578, %v1432
        %v1580 = vadd.f32 %v1579, %v1433
        %v1581 = vadd.f32 %v1580, %v1434
        %v1582 = vadd.f32 %v1581, %v1435
        %v1583 = vadd.f32 %v1582, %v1436
        %v1584 = vrot.slane %v1583, 4
        %v1585 = vadd.f32 %v1583, %v1584
        %v1586 = vrot.slane %v1585, 2
        %v1587 = vadd.f32 %v1585, %v1586
        %v1588 = vrot.slane %v1587, 1
        %v1589 = vadd.f32 %v1587, %v1588
        %v1590 = vadd.f32 %v1437, %v1438
        %v1591 = vadd.f32 %v1590, %v1439
        %v1592 = vadd.f32 %v1591, %v1440
        %v1593 = vadd.f32 %v1592, %v1441
        %v1594 = vadd.f32 %v1593, %v1442
        %v1595 = vadd.f32 %v1594, %v1443
        %v1596 = vadd.f32 %v1595, %v1444
        %v1597 = vadd.f32 %v1596, %v1445
        %v1598 = vadd.f32 %v1597, %v1446
        %v1599 = vadd.f32 %v1598, %v1447
        %v1600 = vadd.f32 %v1599, %v1448
        %v1601 = vadd.f32 %v1600, %v1449
        %v1602 = vadd.f32 %v1601, %v1450
        %v1603 = vadd.f32 %v1602, %v1451
        %v1604 = vadd.f32 %v1603, %v1452
        %v1605 = vrot.slane %v1604, 4
        %v1606 = vadd.f32 %v1604, %v1605
        %v1607 = vrot.slane %v1606, 2
        %v1608 = vadd.f32 %v1606, %v1607
        %v1609 = vrot.slane %v1608, 1
        %v1610 = vadd.f32 %v1608, %v1609
        %v1611 = vadd.f32 %v1453, %v1454
        %v1612 = vadd.f32 %v1611, %v1455
        %v1613 = vadd.f32 %v1612, %v1456
        %v1614 = vadd.f32 %v1613, %v1457
        %v1615 = vadd.f32 %v1614, %v1458
        %v1616 = vadd.f32 %v1615, %v1459
        %v1617 = vadd.f32 %v1616, %v1460
        %v1618 = vadd.f32 %v1617, %v1461
        %v1619 = vadd.f32 %v1618, %v1462
        %v1620 = vadd.f32 %v1619, %v1463
        %v1621 = vadd.f32 %v1620, %v1464
        %v1622 = vadd.f32 %v1621, %v1465
        %v1623 = vadd.f32 %v1622, %v1466
        %v1624 = vadd.f32 %v1623, %v1467
        %v1625 = vadd.f32 %v1624, %v1468
        %v1626 = vrot.slane %v1625, 4
        %v1627 = vadd.f32 %v1625, %v1626
        %v1628 = vrot.slane %v1627, 2
        %v1629 = vadd.f32 %v1627, %v1628
        %v1630 = vrot.slane %v1629, 1
        %v1631 = vadd.f32 %v1629, %v1630
        %v1632 = vadd.f32 %v1469, %v1470
        %v1633 = vadd.f32 %v1632, %v1471
        %v1634 = vadd.f32 %v1633, %v1472
        %v1635 = vadd.f32 %v1634, %v1473
        %v1636 = vadd.f32 %v1635, %v1474
        %v1637 = vadd.f32 %v1636, %v1475
        %v1638 = vadd.f32 %v1637, %v1476
        %v1639 = vadd.f32 %v1638, %v1477
        %v1640 = vadd.f32 %v1639, %v1478
        %v1641 = vadd.f32 %v1640, %v1479
        %v1642 = vadd.f32 %v1641, %v1480
        %v1643 = vadd.f32 %v1642, %v1481
        %v1644 = vadd.f32 %v1643, %v1482
        %v1645 = vadd.f32 %v1644, %v1483
        %v1646 = vadd.f32 %v1645, %v1484
        %v1647 = vrot.slane %v1646, 4
        %v1648 = vadd.f32 %v1646, %v1647
        %v1649 = vrot.slane %v1648, 2
        %v1650 = vadd.f32 %v1648, %v1649
        %v1651 = vrot.slane %v1650, 1
        %v1652 = vadd.f32 %v1650, %v1651
        %v1653 = vadd.f32 %v1505, %v1067
        %v1654 = vadd.f32 %v1526, %v1067
        %v1655 = vadd.f32 %v1547, %v1067
        %v1656 = vadd.f32 %v1568, %v1067
        %v1657 = vadd.f32 %v1589, %v1067
        %v1658 = vadd.f32 %v1610, %v1067
        %v1659 = vadd.f32 %v1631, %v1067
        %v1660 = vadd.f32 %v1652, %v1067
        %v1669 = vsel %vm1084, %v1654, %v1653
        %v1670 = vsel %vm1086, %v1655, %v1669
        %v1671 = vsel %vm1088, %v1656, %v1670
        %v1672 = vsel %vm1090, %v1657, %v1671
        %v1673 = vsel %vm1092, %v1658, %v1672
        %v1674 = vsel %vm1094, %v1659, %v1673
        %v1675 = vsel %vm1096, %v1660, %v1674
        %s1677 = scalar_lea.vmem [#allocation2], 8
        %1678 = vst [vmem:[%s1677] sm:$0xff] %v1675
        %s1679 = scalar_lea.vmem %s354, 8 [#allocation4]
        %v1680 = vld [vmem:[%s1679] sm:$0xf]
        %v1681 = vld [vmem:[%s1679 + $0x18] sm:$0xf]
        %v1682 = vld [vmem:[%s1679 + $0x30] sm:$0xf]
        %v1683 = vld [vmem:[%s1679 + $0x48] sm:$0xf]
        %v1684 = vld [vmem:[%s1679 + $0x60] sm:$0xf]
        %v1685 = vld [vmem:[%s1679 + $0x78] sm:$0xf]
        %v1686 = vld [vmem:[%s1679 + $0x90] sm:$0xf]
        %v1687 = vld [vmem:[%s1679 + $0xa8] sm:$0xf]
        %v1688 = vld [vmem:[%s1679 + $0xc0] sm:$0xf]
        %v1689 = vld [vmem:[%s1679 + $0xd8] sm:$0xf]
        %v1690 = vld [vmem:[%s1679 + $0xf0] sm:$0xf]
        %v1691 = vld [vmem:[%s1679 + $0x108] sm:$0xf]
        %v1692 = vld [vmem:[%s1679 + $0x120] sm:$0xf]
        %v1693 = vld [vmem:[%s1679 + $0x138] sm:$0xf]
        %v1694 = vld [vmem:[%s1679 + $0x150] sm:$0xf]
        %v1695 = vld [vmem:[%s1679 + $0x168] sm:$0xf]
        %v1696 = vld [vmem:[%s1679 + $0x180] sm:$0xf]
        %v1697 = vld [vmem:[%s1679 + $0x198] sm:$0xf]
        %v1698 = vld [vmem:[%s1679 + $0x1b0] sm:$0xf]
        %v1699 = vld [vmem:[%s1679 + $0x1c8] sm:$0xf]
        %v1700 = vld [vmem:[%s1679 + $0x1e0] sm:$0xf]
        %v1701 = vld [vmem:[%s1679 + $0x1f8] sm:$0xf]
        %v1702 = vld [vmem:[%s1679 + $0x210] sm:$0xf]
        %v1703 = vld [vmem:[%s1679 + $0x228] sm:$0xf]
        %v1704 = vld [vmem:[%s1679 + $0x240] sm:$0xf]
        %v1705 = vld [vmem:[%s1679 + $0x258] sm:$0xf]
        %v1706 = vld [vmem:[%s1679 + $0x270] sm:$0xf]
        %v1707 = vld [vmem:[%s1679 + $0x288] sm:$0xf]
        %v1708 = vld [vmem:[%s1679 + $0x2a0] sm:$0xf]
        %v1709 = vld [vmem:[%s1679 + $0x2b8] sm:$0xf]
        %v1710 = vld [vmem:[%s1679 + $0x2d0] sm:$0xf]
        %v1711 = vld [vmem:[%s1679 + $0x2e8] sm:$0xf]
        %v1712 = vld [vmem:[%s1679 + $0x300] sm:$0xf]
        %v1713 = vld [vmem:[%s1679 + $0x318] sm:$0xf]
        %v1714 = vld [vmem:[%s1679 + $0x330] sm:$0xf]
        %v1715 = vld [vmem:[%s1679 + $0x348] sm:$0xf]
        %v1716 = vld [vmem:[%s1679 + $0x360] sm:$0xf]
        %v1717 = vld [vmem:[%s1679 + $0x378] sm:$0xf]
        %v1718 = vld [vmem:[%s1679 + $0x390] sm:$0xf]
        %v1719 = vld [vmem:[%s1679 + $0x3a8] sm:$0xf]
        %v1720 = vld [vmem:[%s1679 + $0x3c0] sm:$0xf]
        %v1721 = vld [vmem:[%s1679 + $0x3d8] sm:$0xf]
        %v1722 = vld [vmem:[%s1679 + $0x3f0] sm:$0xf]
        %v1723 = vld [vmem:[%s1679 + $0x408] sm:$0xf]
        %v1724 = vld [vmem:[%s1679 + $0x420] sm:$0xf]
        %v1725 = vld [vmem:[%s1679 + $0x438] sm:$0xf]
        %v1726 = vld [vmem:[%s1679 + $0x450] sm:$0xf]
        %v1727 = vld [vmem:[%s1679 + $0x468] sm:$0xf]
        %v1728 = vld [vmem:[%s1679 + $0x480] sm:$0xf]
        %v1729 = vld [vmem:[%s1679 + $0x498] sm:$0xf]
        %v1730 = vld [vmem:[%s1679 + $0x4b0] sm:$0xf]
        %v1731 = vld [vmem:[%s1679 + $0x4c8] sm:$0xf]
        %v1732 = vld [vmem:[%s1679 + $0x4e0] sm:$0xf]
        %v1733 = vld [vmem:[%s1679 + $0x4f8] sm:$0xf]
        %v1734 = vld [vmem:[%s1679 + $0x510] sm:$0xf]
        %v1735 = vld [vmem:[%s1679 + $0x528] sm:$0xf]
        %v1736 = vld [vmem:[%s1679 + $0x540] sm:$0xf]
        %v1737 = vld [vmem:[%s1679 + $0x558] sm:$0xf]
        %v1738 = vld [vmem:[%s1679 + $0x570] sm:$0xf]
        %v1739 = vld [vmem:[%s1679 + $0x588] sm:$0xf]
        %v1740 = vld [vmem:[%s1679 + $0x5a0] sm:$0xf]
        %v1741 = vld [vmem:[%s1679 + $0x5b8] sm:$0xf]
        %v1742 = vld [vmem:[%s1679 + $0x5d0] sm:$0xf]
        %v1743 = vld [vmem:[%s1679 + $0x5e8] sm:$0xf]
        %v1744 = vld [vmem:[%s1679 + $0x600] sm:$0xf]
        %v1745 = vld [vmem:[%s1679 + $0x618] sm:$0xf]
        %v1746 = vld [vmem:[%s1679 + $0x630] sm:$0xf]
        %v1747 = vld [vmem:[%s1679 + $0x648] sm:$0xf]
        %v1748 = vld [vmem:[%s1679 + $0x660] sm:$0xf]
        %v1749 = vld [vmem:[%s1679 + $0x678] sm:$0xf]
        %v1750 = vld [vmem:[%s1679 + $0x690] sm:$0xf]
        %v1751 = vld [vmem:[%s1679 + $0x6a8] sm:$0xf]
        %v1752 = vld [vmem:[%s1679 + $0x6c0] sm:$0xf]
        %v1753 = vld [vmem:[%s1679 + $0x6d8] sm:$0xf]
        %v1754 = vld [vmem:[%s1679 + $0x6f0] sm:$0xf]
        %v1755 = vld [vmem:[%s1679 + $0x708] sm:$0xf]
        %v1756 = vld [vmem:[%s1679 + $0x720] sm:$0xf]
        %v1757 = vld [vmem:[%s1679 + $0x738] sm:$0xf]
        %v1758 = vld [vmem:[%s1679 + $0x750] sm:$0xf]
        %v1759 = vld [vmem:[%s1679 + $0x768] sm:$0xf]
        %v1760 = vld [vmem:[%s1679 + $0x780] sm:$0xf]
        %v1761 = vld [vmem:[%s1679 + $0x798] sm:$0xf]
        %v1762 = vld [vmem:[%s1679 + $0x7b0] sm:$0xf]
        %v1763 = vld [vmem:[%s1679 + $0x7c8] sm:$0xf]
        %v1764 = vld [vmem:[%s1679 + $0x7e0] sm:$0xf]
        %v1765 = vld [vmem:[%s1679 + $0x7f8] sm:$0xf]
        %v1766 = vld [vmem:[%s1679 + $0x810] sm:$0xf]
        %v1767 = vld [vmem:[%s1679 + $0x828] sm:$0xf]
        %v1768 = vld [vmem:[%s1679 + $0x840] sm:$0xf]
        %v1769 = vld [vmem:[%s1679 + $0x858] sm:$0xf]
        %v1770 = vld [vmem:[%s1679 + $0x870] sm:$0xf]
        %v1771 = vld [vmem:[%s1679 + $0x888] sm:$0xf]
        %v1772 = vld [vmem:[%s1679 + $0x8a0] sm:$0xf]
        %v1773 = vld [vmem:[%s1679 + $0x8b8] sm:$0xf]
        %v1774 = vld [vmem:[%s1679 + $0x8d0] sm:$0xf]
        %v1775 = vld [vmem:[%s1679 + $0x8e8] sm:$0xf]
        %v1776 = vld [vmem:[%s1679 + $0x900] sm:$0xf]
        %v1777 = vld [vmem:[%s1679 + $0x918] sm:$0xf]
        %v1778 = vld [vmem:[%s1679 + $0x930] sm:$0xf]
        %v1779 = vld [vmem:[%s1679 + $0x948] sm:$0xf]
        %v1780 = vld [vmem:[%s1679 + $0x960] sm:$0xf]
        %v1781 = vld [vmem:[%s1679 + $0x978] sm:$0xf]
        %v1782 = vld [vmem:[%s1679 + $0x990] sm:$0xf]
        %v1783 = vld [vmem:[%s1679 + $0x9a8] sm:$0xf]
        %v1784 = vld [vmem:[%s1679 + $0x9c0] sm:$0xf]
        %v1785 = vld [vmem:[%s1679 + $0x9d8] sm:$0xf]
        %v1786 = vld [vmem:[%s1679 + $0x9f0] sm:$0xf]
        %v1787 = vld [vmem:[%s1679 + $0xa08] sm:$0xf]
        %v1788 = vld [vmem:[%s1679 + $0xa20] sm:$0xf]
        %v1789 = vld [vmem:[%s1679 + $0xa38] sm:$0xf]
        %v1790 = vld [vmem:[%s1679 + $0xa50] sm:$0xf]
        %v1791 = vld [vmem:[%s1679 + $0xa68] sm:$0xf]
        %v1792 = vld [vmem:[%s1679 + $0xa80] sm:$0xf]
        %v1793 = vld [vmem:[%s1679 + $0xa98] sm:$0xf]
        %v1794 = vld [vmem:[%s1679 + $0xab0] sm:$0xf]
        %v1795 = vld [vmem:[%s1679 + $0xac8] sm:$0xf]
        %v1796 = vld [vmem:[%s1679 + $0xae0] sm:$0xf]
        %v1797 = vld [vmem:[%s1679 + $0xaf8] sm:$0xf]
        %v1798 = vld [vmem:[%s1679 + $0xb10] sm:$0xf]
        %v1799 = vld [vmem:[%s1679 + $0xb28] sm:$0xf]
        %v1800 = vld [vmem:[%s1679 + $0xb40] sm:$0xf]
        %v1801 = vld [vmem:[%s1679 + $0xb58] sm:$0xf]
        %v1802 = vld [vmem:[%s1679 + $0xb70] sm:$0xf]
        %v1803 = vld [vmem:[%s1679 + $0xb88] sm:$0xf]
        %v1804 = vld [vmem:[%s1679 + $0xba0] sm:$0xf]
        %v1805 = vld [vmem:[%s1679 + $0xbb8] sm:$0xf]
        %v1806 = vld [vmem:[%s1679 + $0xbd0] sm:$0xf]
        %v1807 = vld [vmem:[%s1679 + $0xbe8] sm:$0xf]
        %v1808 = vunpack.c.l.bf16 %v1680
        %v1809 = vunpack.c.l.bf16 %v1681
        %v1810 = vunpack.c.l.bf16 %v1682
        %v1811 = vunpack.c.l.bf16 %v1683
        %v1812 = vunpack.c.l.bf16 %v1684
        %v1813 = vunpack.c.l.bf16 %v1685
        %v1814 = vunpack.c.l.bf16 %v1686
        %v1815 = vunpack.c.l.bf16 %v1687
        %v1816 = vunpack.c.l.bf16 %v1688
        %v1817 = vunpack.c.l.bf16 %v1689
        %v1818 = vunpack.c.l.bf16 %v1690
        %v1819 = vunpack.c.l.bf16 %v1691
        %v1820 = vunpack.c.l.bf16 %v1692
        %v1821 = vunpack.c.l.bf16 %v1693
        %v1822 = vunpack.c.l.bf16 %v1694
        %v1823 = vunpack.c.l.bf16 %v1695
        %v1824 = vunpack.c.l.bf16 %v1696
        %v1825 = vunpack.c.l.bf16 %v1697
        %v1826 = vunpack.c.l.bf16 %v1698
        %v1827 = vunpack.c.l.bf16 %v1699
        %v1828 = vunpack.c.l.bf16 %v1700
        %v1829 = vunpack.c.l.bf16 %v1701
        %v1830 = vunpack.c.l.bf16 %v1702
        %v1831 = vunpack.c.l.bf16 %v1703
        %v1832 = vunpack.c.l.bf16 %v1704
        %v1833 = vunpack.c.l.bf16 %v1705
        %v1834 = vunpack.c.l.bf16 %v1706
        %v1835 = vunpack.c.l.bf16 %v1707
        %v1836 = vunpack.c.l.bf16 %v1708
        %v1837 = vunpack.c.l.bf16 %v1709
        %v1838 = vunpack.c.l.bf16 %v1710
        %v1839 = vunpack.c.l.bf16 %v1711
        %v1840 = vunpack.c.l.bf16 %v1712
        %v1841 = vunpack.c.l.bf16 %v1713
        %v1842 = vunpack.c.l.bf16 %v1714
        %v1843 = vunpack.c.l.bf16 %v1715
        %v1844 = vunpack.c.l.bf16 %v1716
        %v1845 = vunpack.c.l.bf16 %v1717
        %v1846 = vunpack.c.l.bf16 %v1718
        %v1847 = vunpack.c.l.bf16 %v1719
        %v1848 = vunpack.c.l.bf16 %v1720
        %v1849 = vunpack.c.l.bf16 %v1721
        %v1850 = vunpack.c.l.bf16 %v1722
        %v1851 = vunpack.c.l.bf16 %v1723
        %v1852 = vunpack.c.l.bf16 %v1724
        %v1853 = vunpack.c.l.bf16 %v1725
        %v1854 = vunpack.c.l.bf16 %v1726
        %v1855 = vunpack.c.l.bf16 %v1727
        %v1856 = vunpack.c.l.bf16 %v1728
        %v1857 = vunpack.c.l.bf16 %v1729
        %v1858 = vunpack.c.l.bf16 %v1730
        %v1859 = vunpack.c.l.bf16 %v1731
        %v1860 = vunpack.c.l.bf16 %v1732
        %v1861 = vunpack.c.l.bf16 %v1733
        %v1862 = vunpack.c.l.bf16 %v1734
        %v1863 = vunpack.c.l.bf16 %v1735
        %v1864 = vunpack.c.l.bf16 %v1736
        %v1865 = vunpack.c.l.bf16 %v1737
        %v1866 = vunpack.c.l.bf16 %v1738
        %v1867 = vunpack.c.l.bf16 %v1739
        %v1868 = vunpack.c.l.bf16 %v1740
        %v1869 = vunpack.c.l.bf16 %v1741
        %v1870 = vunpack.c.l.bf16 %v1742
        %v1871 = vunpack.c.l.bf16 %v1743
        %v1872 = vunpack.c.l.bf16 %v1744
        %v1873 = vunpack.c.l.bf16 %v1745
        %v1874 = vunpack.c.l.bf16 %v1746
        %v1875 = vunpack.c.l.bf16 %v1747
        %v1876 = vunpack.c.l.bf16 %v1748
        %v1877 = vunpack.c.l.bf16 %v1749
        %v1878 = vunpack.c.l.bf16 %v1750
        %v1879 = vunpack.c.l.bf16 %v1751
        %v1880 = vunpack.c.l.bf16 %v1752
        %v1881 = vunpack.c.l.bf16 %v1753
        %v1882 = vunpack.c.l.bf16 %v1754
        %v1883 = vunpack.c.l.bf16 %v1755
        %v1884 = vunpack.c.l.bf16 %v1756
        %v1885 = vunpack.c.l.bf16 %v1757
        %v1886 = vunpack.c.l.bf16 %v1758
        %v1887 = vunpack.c.l.bf16 %v1759
        %v1888 = vunpack.c.l.bf16 %v1760
        %v1889 = vunpack.c.l.bf16 %v1761
        %v1890 = vunpack.c.l.bf16 %v1762
        %v1891 = vunpack.c.l.bf16 %v1763
        %v1892 = vunpack.c.l.bf16 %v1764
        %v1893 = vunpack.c.l.bf16 %v1765
        %v1894 = vunpack.c.l.bf16 %v1766
        %v1895 = vunpack.c.l.bf16 %v1767
        %v1896 = vunpack.c.l.bf16 %v1768
        %v1897 = vunpack.c.l.bf16 %v1769
        %v1898 = vunpack.c.l.bf16 %v1770
        %v1899 = vunpack.c.l.bf16 %v1771
        %v1900 = vunpack.c.l.bf16 %v1772
        %v1901 = vunpack.c.l.bf16 %v1773
        %v1902 = vunpack.c.l.bf16 %v1774
        %v1903 = vunpack.c.l.bf16 %v1775
        %v1904 = vunpack.c.l.bf16 %v1776
        %v1905 = vunpack.c.l.bf16 %v1777
        %v1906 = vunpack.c.l.bf16 %v1778
        %v1907 = vunpack.c.l.bf16 %v1779
        %v1908 = vunpack.c.l.bf16 %v1780
        %v1909 = vunpack.c.l.bf16 %v1781
        %v1910 = vunpack.c.l.bf16 %v1782
        %v1911 = vunpack.c.l.bf16 %v1783
        %v1912 = vunpack.c.l.bf16 %v1784
        %v1913 = vunpack.c.l.bf16 %v1785
        %v1914 = vunpack.c.l.bf16 %v1786
        %v1915 = vunpack.c.l.bf16 %v1787
        %v1916 = vunpack.c.l.bf16 %v1788
        %v1917 = vunpack.c.l.bf16 %v1789
        %v1918 = vunpack.c.l.bf16 %v1790
        %v1919 = vunpack.c.l.bf16 %v1791
        %v1920 = vunpack.c.l.bf16 %v1792
        %v1921 = vunpack.c.l.bf16 %v1793
        %v1922 = vunpack.c.l.bf16 %v1794
        %v1923 = vunpack.c.l.bf16 %v1795
        %v1924 = vunpack.c.l.bf16 %v1796
        %v1925 = vunpack.c.l.bf16 %v1797
        %v1926 = vunpack.c.l.bf16 %v1798
        %v1927 = vunpack.c.l.bf16 %v1799
        %v1928 = vunpack.c.l.bf16 %v1800
        %v1929 = vunpack.c.l.bf16 %v1801
        %v1930 = vunpack.c.l.bf16 %v1802
        %v1931 = vunpack.c.l.bf16 %v1803
        %v1932 = vunpack.c.l.bf16 %v1804
        %v1933 = vunpack.c.l.bf16 %v1805
        %v1934 = vunpack.c.l.bf16 %v1806
        %v1935 = vunpack.c.l.bf16 %v1807
        %v1936 = vmul.f32 %v1808, %v694
        %v1937 = vmul.f32 %v1809, %v699
        %v1938 = vmul.f32 %v1810, %v704
        %v1939 = vmul.f32 %v1811, %v709
        %v1940 = vmul.f32 %v1812, %v714
        %v1941 = vmul.f32 %v1813, %v719
        %v1942 = vmul.f32 %v1814, %v724
        %v1943 = vmul.f32 %v1815, %v729
        %v1944 = vmul.f32 %v1816, %v734
        %v1945 = vmul.f32 %v1817, %v739
        %v1946 = vmul.f32 %v1818, %v744
        %v1947 = vmul.f32 %v1819, %v749
        %v1948 = vmul.f32 %v1820, %v754
        %v1949 = vmul.f32 %v1821, %v759
        %v1950 = vmul.f32 %v1822, %v764
        %v1951 = vmul.f32 %v1823, %v769
        %v1952 = vmul.f32 %v1824, %v694
        %v1953 = vmul.f32 %v1825, %v699
        %v1954 = vmul.f32 %v1826, %v704
        %v1955 = vmul.f32 %v1827, %v709
        %v1956 = vmul.f32 %v1828, %v714
        %v1957 = vmul.f32 %v1829, %v719
        %v1958 = vmul.f32 %v1830, %v724
        %v1959 = vmul.f32 %v1831, %v729
        %v1960 = vmul.f32 %v1832, %v734
        %v1961 = vmul.f32 %v1833, %v739
        %v1962 = vmul.f32 %v1834, %v744
        %v1963 = vmul.f32 %v1835, %v749
        %v1964 = vmul.f32 %v1836, %v754
        %v1965 = vmul.f32 %v1837, %v759
        %v1966 = vmul.f32 %v1838, %v764
        %v1967 = vmul.f32 %v1839, %v769
        %v1968 = vmul.f32 %v1840, %v694
        %v1969 = vmul.f32 %v1841, %v699
        %v1970 = vmul.f32 %v1842, %v704
        %v1971 = vmul.f32 %v1843, %v709
        %v1972 = vmul.f32 %v1844, %v714
        %v1973 = vmul.f32 %v1845, %v719
        %v1974 = vmul.f32 %v1846, %v724
        %v1975 = vmul.f32 %v1847, %v729
        %v1976 = vmul.f32 %v1848, %v734
        %v1977 = vmul.f32 %v1849, %v739
        %v1978 = vmul.f32 %v1850, %v744
        %v1979 = vmul.f32 %v1851, %v749
        %v1980 = vmul.f32 %v1852, %v754
        %v1981 = vmul.f32 %v1853, %v759
        %v1982 = vmul.f32 %v1854, %v764
        %v1983 = vmul.f32 %v1855, %v769
        %v1984 = vmul.f32 %v1856, %v694
        %v1985 = vmul.f32 %v1857, %v699
        %v1986 = vmul.f32 %v1858, %v704
        %v1987 = vmul.f32 %v1859, %v709
        %v1988 = vmul.f32 %v1860, %v714
        %v1989 = vmul.f32 %v1861, %v719
        %v1990 = vmul.f32 %v1862, %v724
        %v1991 = vmul.f32 %v1863, %v729
        %v1992 = vmul.f32 %v1864, %v734
        %v1993 = vmul.f32 %v1865, %v739
        %v1994 = vmul.f32 %v1866, %v744
        %v1995 = vmul.f32 %v1867, %v749
        %v1996 = vmul.f32 %v1868, %v754
        %v1997 = vmul.f32 %v1869, %v759
        %v1998 = vmul.f32 %v1870, %v764
        %v1999 = vmul.f32 %v1871, %v769
        %v2000 = vmul.f32 %v1872, %v694
        %v2001 = vmul.f32 %v1873, %v699
        %v2002 = vmul.f32 %v1874, %v704
        %v2003 = vmul.f32 %v1875, %v709
        %v2004 = vmul.f32 %v1876, %v714
        %v2005 = vmul.f32 %v1877, %v719
        %v2006 = vmul.f32 %v1878, %v724
        %v2007 = vmul.f32 %v1879, %v729
        %v2008 = vmul.f32 %v1880, %v734
        %v2009 = vmul.f32 %v1881, %v739
        %v2010 = vmul.f32 %v1882, %v744
        %v2011 = vmul.f32 %v1883, %v749
        %v2012 = vmul.f32 %v1884, %v754
        %v2013 = vmul.f32 %v1885, %v759
        %v2014 = vmul.f32 %v1886, %v764
        %v2015 = vmul.f32 %v1887, %v769
        %v2016 = vmul.f32 %v1888, %v694
        %v2017 = vmul.f32 %v1889, %v699
        %v2018 = vmul.f32 %v1890, %v704
        %v2019 = vmul.f32 %v1891, %v709
        %v2020 = vmul.f32 %v1892, %v714
        %v2021 = vmul.f32 %v1893, %v719
        %v2022 = vmul.f32 %v1894, %v724
        %v2023 = vmul.f32 %v1895, %v729
        %v2024 = vmul.f32 %v1896, %v734
        %v2025 = vmul.f32 %v1897, %v739
        %v2026 = vmul.f32 %v1898, %v744
        %v2027 = vmul.f32 %v1899, %v749
        %v2028 = vmul.f32 %v1900, %v754
        %v2029 = vmul.f32 %v1901, %v759
        %v2030 = vmul.f32 %v1902, %v764
        %v2031 = vmul.f32 %v1903, %v769
        %v2032 = vmul.f32 %v1904, %v694
        %v2033 = vmul.f32 %v1905, %v699
        %v2034 = vmul.f32 %v1906, %v704
        %v2035 = vmul.f32 %v1907, %v709
        %v2036 = vmul.f32 %v1908, %v714
        %v2037 = vmul.f32 %v1909, %v719
        %v2038 = vmul.f32 %v1910, %v724
        %v2039 = vmul.f32 %v1911, %v729
        %v2040 = vmul.f32 %v1912, %v734
        %v2041 = vmul.f32 %v1913, %v739
        %v2042 = vmul.f32 %v1914, %v744
        %v2043 = vmul.f32 %v1915, %v749
        %v2044 = vmul.f32 %v1916, %v754
        %v2045 = vmul.f32 %v1917, %v759
        %v2046 = vmul.f32 %v1918, %v764
        %v2047 = vmul.f32 %v1919, %v769
        %v2048 = vmul.f32 %v1920, %v694
        %v2049 = vmul.f32 %v1921, %v699
        %v2050 = vmul.f32 %v1922, %v704
        %v2051 = vmul.f32 %v1923, %v709
        %v2052 = vmul.f32 %v1924, %v714
        %v2053 = vmul.f32 %v1925, %v719
        %v2054 = vmul.f32 %v1926, %v724
        %v2055 = vmul.f32 %v1927, %v729
        %v2056 = vmul.f32 %v1928, %v734
        %v2057 = vmul.f32 %v1929, %v739
        %v2058 = vmul.f32 %v1930, %v744
        %v2059 = vmul.f32 %v1931, %v749
        %v2060 = vmul.f32 %v1932, %v754
        %v2061 = vmul.f32 %v1933, %v759
        %v2062 = vmul.f32 %v1934, %v764
        %v2063 = vmul.f32 %v1935, %v769
        %v2064 = vadd.f32 %v1936, %v1937
        %v2065 = vadd.f32 %v2064, %v1938
        %v2066 = vadd.f32 %v2065, %v1939
        %v2067 = vadd.f32 %v2066, %v1940
        %v2068 = vadd.f32 %v2067, %v1941
        %v2069 = vadd.f32 %v2068, %v1942
        %v2070 = vadd.f32 %v2069, %v1943
        %v2071 = vadd.f32 %v2070, %v1944
        %v2072 = vadd.f32 %v2071, %v1945
        %v2073 = vadd.f32 %v2072, %v1946
        %v2074 = vadd.f32 %v2073, %v1947
        %v2075 = vadd.f32 %v2074, %v1948
        %v2076 = vadd.f32 %v2075, %v1949
        %v2077 = vadd.f32 %v2076, %v1950
        %v2078 = vadd.f32 %v2077, %v1951
        %v2079 = vrot.slane %v2078, 4
        %v2080 = vadd.f32 %v2078, %v2079
        %v2081 = vrot.slane %v2080, 2
        %v2082 = vadd.f32 %v2080, %v2081
        %v2083 = vrot.slane %v2082, 1
        %v2084 = vadd.f32 %v2082, %v2083
        %v2085 = vadd.f32 %v1952, %v1953
        %v2086 = vadd.f32 %v2085, %v1954
        %v2087 = vadd.f32 %v2086, %v1955
        %v2088 = vadd.f32 %v2087, %v1956
        %v2089 = vadd.f32 %v2088, %v1957
        %v2090 = vadd.f32 %v2089, %v1958
        %v2091 = vadd.f32 %v2090, %v1959
        %v2092 = vadd.f32 %v2091, %v1960
        %v2093 = vadd.f32 %v2092, %v1961
        %v2094 = vadd.f32 %v2093, %v1962
        %v2095 = vadd.f32 %v2094, %v1963
        %v2096 = vadd.f32 %v2095, %v1964
        %v2097 = vadd.f32 %v2096, %v1965
        %v2098 = vadd.f32 %v2097, %v1966
        %v2099 = vadd.f32 %v2098, %v1967
        %v2100 = vrot.slane %v2099, 4
        %v2101 = vadd.f32 %v2099, %v2100
        %v2102 = vrot.slane %v2101, 2
        %v2103 = vadd.f32 %v2101, %v2102
        %v2104 = vrot.slane %v2103, 1
        %v2105 = vadd.f32 %v2103, %v2104
        %v2106 = vadd.f32 %v1968, %v1969
        %v2107 = vadd.f32 %v2106, %v1970
        %v2108 = vadd.f32 %v2107, %v1971
        %v2109 = vadd.f32 %v2108, %v1972
        %v2110 = vadd.f32 %v2109, %v1973
        %v2111 = vadd.f32 %v2110, %v1974
        %v2112 = vadd.f32 %v2111, %v1975
        %v2113 = vadd.f32 %v2112, %v1976
        %v2114 = vadd.f32 %v2113, %v1977
        %v2115 = vadd.f32 %v2114, %v1978
        %v2116 = vadd.f32 %v2115, %v1979
        %v2117 = vadd.f32 %v2116, %v1980
        %v2118 = vadd.f32 %v2117, %v1981
        %v2119 = vadd.f32 %v2118, %v1982
        %v2120 = vadd.f32 %v2119, %v1983
        %v2121 = vrot.slane %v2120, 4
        %v2122 = vadd.f32 %v2120, %v2121
        %v2123 = vrot.slane %v2122, 2
        %v2124 = vadd.f32 %v2122, %v2123
        %v2125 = vrot.slane %v2124, 1
        %v2126 = vadd.f32 %v2124, %v2125
        %v2127 = vadd.f32 %v1984, %v1985
        %v2128 = vadd.f32 %v2127, %v1986
        %v2129 = vadd.f32 %v2128, %v1987
        %v2130 = vadd.f32 %v2129, %v1988
        %v2131 = vadd.f32 %v2130, %v1989
        %v2132 = vadd.f32 %v2131, %v1990
        %v2133 = vadd.f32 %v2132, %v1991
        %v2134 = vadd.f32 %v2133, %v1992
        %v2135 = vadd.f32 %v2134, %v1993
        %v2136 = vadd.f32 %v2135, %v1994
        %v2137 = vadd.f32 %v2136, %v1995
        %v2138 = vadd.f32 %v2137, %v1996
        %v2139 = vadd.f32 %v2138, %v1997
        %v2140 = vadd.f32 %v2139, %v1998
        %v2141 = vadd.f32 %v2140, %v1999
        %v2142 = vrot.slane %v2141, 4
        %v2143 = vadd.f32 %v2141, %v2142
        %v2144 = vrot.slane %v2143, 2
        %v2145 = vadd.f32 %v2143, %v2144
        %v2146 = vrot.slane %v2145, 1
        %v2147 = vadd.f32 %v2145, %v2146
        %v2148 = vadd.f32 %v2000, %v2001
        %v2149 = vadd.f32 %v2148, %v2002
        %v2150 = vadd.f32 %v2149, %v2003
        %v2151 = vadd.f32 %v2150, %v2004
        %v2152 = vadd.f32 %v2151, %v2005
        %v2153 = vadd.f32 %v2152, %v2006
        %v2154 = vadd.f32 %v2153, %v2007
        %v2155 = vadd.f32 %v2154, %v2008
        %v2156 = vadd.f32 %v2155, %v2009
        %v2157 = vadd.f32 %v2156, %v2010
        %v2158 = vadd.f32 %v2157, %v2011
        %v2159 = vadd.f32 %v2158, %v2012
        %v2160 = vadd.f32 %v2159, %v2013
        %v2161 = vadd.f32 %v2160, %v2014
        %v2162 = vadd.f32 %v2161, %v2015
        %v2163 = vrot.slane %v2162, 4
        %v2164 = vadd.f32 %v2162, %v2163
        %v2165 = vrot.slane %v2164, 2
        %v2166 = vadd.f32 %v2164, %v2165
        %v2167 = vrot.slane %v2166, 1
        %v2168 = vadd.f32 %v2166, %v2167
        %v2169 = vadd.f32 %v2016, %v2017
        %v2170 = vadd.f32 %v2169, %v2018
        %v2171 = vadd.f32 %v2170, %v2019
        %v2172 = vadd.f32 %v2171, %v2020
        %v2173 = vadd.f32 %v2172, %v2021
        %v2174 = vadd.f32 %v2173, %v2022
        %v2175 = vadd.f32 %v2174, %v2023
        %v2176 = vadd.f32 %v2175, %v2024
        %v2177 = vadd.f32 %v2176, %v2025
        %v2178 = vadd.f32 %v2177, %v2026
        %v2179 = vadd.f32 %v2178, %v2027
        %v2180 = vadd.f32 %v2179, %v2028
        %v2181 = vadd.f32 %v2180, %v2029
        %v2182 = vadd.f32 %v2181, %v2030
        %v2183 = vadd.f32 %v2182, %v2031
        %v2184 = vrot.slane %v2183, 4
        %v2185 = vadd.f32 %v2183, %v2184
        %v2186 = vrot.slane %v2185, 2
        %v2187 = vadd.f32 %v2185, %v2186
        %v2188 = vrot.slane %v2187, 1
        %v2189 = vadd.f32 %v2187, %v2188
        %v2190 = vadd.f32 %v2032, %v2033
        %v2191 = vadd.f32 %v2190, %v2034
        %v2192 = vadd.f32 %v2191, %v2035
        %v2193 = vadd.f32 %v2192, %v2036
        %v2194 = vadd.f32 %v2193, %v2037
        %v2195 = vadd.f32 %v2194, %v2038
        %v2196 = vadd.f32 %v2195, %v2039
        %v2197 = vadd.f32 %v2196, %v2040
        %v2198 = vadd.f32 %v2197, %v2041
        %v2199 = vadd.f32 %v2198, %v2042
        %v2200 = vadd.f32 %v2199, %v2043
        %v2201 = vadd.f32 %v2200, %v2044
        %v2202 = vadd.f32 %v2201, %v2045
        %v2203 = vadd.f32 %v2202, %v2046
        %v2204 = vadd.f32 %v2203, %v2047
        %v2205 = vrot.slane %v2204, 4
        %v2206 = vadd.f32 %v2204, %v2205
        %v2207 = vrot.slane %v2206, 2
        %v2208 = vadd.f32 %v2206, %v2207
        %v2209 = vrot.slane %v2208, 1
        %v2210 = vadd.f32 %v2208, %v2209
        %v2211 = vadd.f32 %v2048, %v2049
        %v2212 = vadd.f32 %v2211, %v2050
        %v2213 = vadd.f32 %v2212, %v2051
        %v2214 = vadd.f32 %v2213, %v2052
        %v2215 = vadd.f32 %v2214, %v2053
        %v2216 = vadd.f32 %v2215, %v2054
        %v2217 = vadd.f32 %v2216, %v2055
        %v2218 = vadd.f32 %v2217, %v2056
        %v2219 = vadd.f32 %v2218, %v2057
        %v2220 = vadd.f32 %v2219, %v2058
        %v2221 = vadd.f32 %v2220, %v2059
        %v2222 = vadd.f32 %v2221, %v2060
        %v2223 = vadd.f32 %v2222, %v2061
        %v2224 = vadd.f32 %v2223, %v2062
        %v2225 = vadd.f32 %v2224, %v2063
        %v2226 = vrot.slane %v2225, 4
        %v2227 = vadd.f32 %v2225, %v2226
        %v2228 = vrot.slane %v2227, 2
        %v2229 = vadd.f32 %v2227, %v2228
        %v2230 = vrot.slane %v2229, 1
        %v2231 = vadd.f32 %v2229, %v2230
        %v2232 = vadd.f32 %v2084, %v1067
        %v2233 = vadd.f32 %v2105, %v1067
        %v2234 = vadd.f32 %v2126, %v1067
        %v2235 = vadd.f32 %v2147, %v1067
        %v2236 = vadd.f32 %v2168, %v1067
        %v2237 = vadd.f32 %v2189, %v1067
        %v2238 = vadd.f32 %v2210, %v1067
        %v2239 = vadd.f32 %v2231, %v1067
        %v2248 = vsel %vm1084, %v2233, %v2232
        %v2249 = vsel %vm1086, %v2234, %v2248
        %v2250 = vsel %vm1088, %v2235, %v2249
        %v2251 = vsel %vm1090, %v2236, %v2250
        %v2252 = vsel %vm1092, %v2237, %v2251
        %v2253 = vsel %vm1094, %v2238, %v2252
        %v2254 = vsel %vm1096, %v2239, %v2253
        %s2256 = scalar_lea.vmem [#allocation2], 16
        %2257 = vst [vmem:[%s2256] sm:$0xff] %v2254
        %s2258 = scalar_lea.vmem %s354, 12 [#allocation4]
        %v2259 = vld [vmem:[%s2258] sm:$0xf]
        %v2260 = vld [vmem:[%s2258 + $0x18] sm:$0xf]
        %v2261 = vld [vmem:[%s2258 + $0x30] sm:$0xf]
        %v2262 = vld [vmem:[%s2258 + $0x48] sm:$0xf]
        %v2263 = vld [vmem:[%s2258 + $0x60] sm:$0xf]
        %v2264 = vld [vmem:[%s2258 + $0x78] sm:$0xf]
        %v2265 = vld [vmem:[%s2258 + $0x90] sm:$0xf]
        %v2266 = vld [vmem:[%s2258 + $0xa8] sm:$0xf]
        %v2267 = vld [vmem:[%s2258 + $0xc0] sm:$0xf]
        %v2268 = vld [vmem:[%s2258 + $0xd8] sm:$0xf]
        %v2269 = vld [vmem:[%s2258 + $0xf0] sm:$0xf]
        %v2270 = vld [vmem:[%s2258 + $0x108] sm:$0xf]
        %v2271 = vld [vmem:[%s2258 + $0x120] sm:$0xf]
        %v2272 = vld [vmem:[%s2258 + $0x138] sm:$0xf]
        %v2273 = vld [vmem:[%s2258 + $0x150] sm:$0xf]
        %v2274 = vld [vmem:[%s2258 + $0x168] sm:$0xf]
        %v2275 = vld [vmem:[%s2258 + $0x180] sm:$0xf]
        %v2276 = vld [vmem:[%s2258 + $0x198] sm:$0xf]
        %v2277 = vld [vmem:[%s2258 + $0x1b0] sm:$0xf]
        %v2278 = vld [vmem:[%s2258 + $0x1c8] sm:$0xf]
        %v2279 = vld [vmem:[%s2258 + $0x1e0] sm:$0xf]
        %v2280 = vld [vmem:[%s2258 + $0x1f8] sm:$0xf]
        %v2281 = vld [vmem:[%s2258 + $0x210] sm:$0xf]
        %v2282 = vld [vmem:[%s2258 + $0x228] sm:$0xf]
        %v2283 = vld [vmem:[%s2258 + $0x240] sm:$0xf]
        %v2284 = vld [vmem:[%s2258 + $0x258] sm:$0xf]
        %v2285 = vld [vmem:[%s2258 + $0x270] sm:$0xf]
        %v2286 = vld [vmem:[%s2258 + $0x288] sm:$0xf]
        %v2287 = vld [vmem:[%s2258 + $0x2a0] sm:$0xf]
        %v2288 = vld [vmem:[%s2258 + $0x2b8] sm:$0xf]
        %v2289 = vld [vmem:[%s2258 + $0x2d0] sm:$0xf]
        %v2290 = vld [vmem:[%s2258 + $0x2e8] sm:$0xf]
        %v2291 = vld [vmem:[%s2258 + $0x300] sm:$0xf]
        %v2292 = vld [vmem:[%s2258 + $0x318] sm:$0xf]
        %v2293 = vld [vmem:[%s2258 + $0x330] sm:$0xf]
        %v2294 = vld [vmem:[%s2258 + $0x348] sm:$0xf]
        %v2295 = vld [vmem:[%s2258 + $0x360] sm:$0xf]
        %v2296 = vld [vmem:[%s2258 + $0x378] sm:$0xf]
        %v2297 = vld [vmem:[%s2258 + $0x390] sm:$0xf]
        %v2298 = vld [vmem:[%s2258 + $0x3a8] sm:$0xf]
        %v2299 = vld [vmem:[%s2258 + $0x3c0] sm:$0xf]
        %v2300 = vld [vmem:[%s2258 + $0x3d8] sm:$0xf]
        %v2301 = vld [vmem:[%s2258 + $0x3f0] sm:$0xf]
        %v2302 = vld [vmem:[%s2258 + $0x408] sm:$0xf]
        %v2303 = vld [vmem:[%s2258 + $0x420] sm:$0xf]
        %v2304 = vld [vmem:[%s2258 + $0x438] sm:$0xf]
        %v2305 = vld [vmem:[%s2258 + $0x450] sm:$0xf]
        %v2306 = vld [vmem:[%s2258 + $0x468] sm:$0xf]
        %v2307 = vld [vmem:[%s2258 + $0x480] sm:$0xf]
        %v2308 = vld [vmem:[%s2258 + $0x498] sm:$0xf]
        %v2309 = vld [vmem:[%s2258 + $0x4b0] sm:$0xf]
        %v2310 = vld [vmem:[%s2258 + $0x4c8] sm:$0xf]
        %v2311 = vld [vmem:[%s2258 + $0x4e0] sm:$0xf]
        %v2312 = vld [vmem:[%s2258 + $0x4f8] sm:$0xf]
        %v2313 = vld [vmem:[%s2258 + $0x510] sm:$0xf]
        %v2314 = vld [vmem:[%s2258 + $0x528] sm:$0xf]
        %v2315 = vld [vmem:[%s2258 + $0x540] sm:$0xf]
        %v2316 = vld [vmem:[%s2258 + $0x558] sm:$0xf]
        %v2317 = vld [vmem:[%s2258 + $0x570] sm:$0xf]
        %v2318 = vld [vmem:[%s2258 + $0x588] sm:$0xf]
        %v2319 = vld [vmem:[%s2258 + $0x5a0] sm:$0xf]
        %v2320 = vld [vmem:[%s2258 + $0x5b8] sm:$0xf]
        %v2321 = vld [vmem:[%s2258 + $0x5d0] sm:$0xf]
        %v2322 = vld [vmem:[%s2258 + $0x5e8] sm:$0xf]
        %v2323 = vld [vmem:[%s2258 + $0x600] sm:$0xf]
        %v2324 = vld [vmem:[%s2258 + $0x618] sm:$0xf]
        %v2325 = vld [vmem:[%s2258 + $0x630] sm:$0xf]
        %v2326 = vld [vmem:[%s2258 + $0x648] sm:$0xf]
        %v2327 = vld [vmem:[%s2258 + $0x660] sm:$0xf]
        %v2328 = vld [vmem:[%s2258 + $0x678] sm:$0xf]
        %v2329 = vld [vmem:[%s2258 + $0x690] sm:$0xf]
        %v2330 = vld [vmem:[%s2258 + $0x6a8] sm:$0xf]
        %v2331 = vld [vmem:[%s2258 + $0x6c0] sm:$0xf]
        %v2332 = vld [vmem:[%s2258 + $0x6d8] sm:$0xf]
        %v2333 = vld [vmem:[%s2258 + $0x6f0] sm:$0xf]
        %v2334 = vld [vmem:[%s2258 + $0x708] sm:$0xf]
        %v2335 = vld [vmem:[%s2258 + $0x720] sm:$0xf]
        %v2336 = vld [vmem:[%s2258 + $0x738] sm:$0xf]
        %v2337 = vld [vmem:[%s2258 + $0x750] sm:$0xf]
        %v2338 = vld [vmem:[%s2258 + $0x768] sm:$0xf]
        %v2339 = vld [vmem:[%s2258 + $0x780] sm:$0xf]
        %v2340 = vld [vmem:[%s2258 + $0x798] sm:$0xf]
        %v2341 = vld [vmem:[%s2258 + $0x7b0] sm:$0xf]
        %v2342 = vld [vmem:[%s2258 + $0x7c8] sm:$0xf]
        %v2343 = vld [vmem:[%s2258 + $0x7e0] sm:$0xf]
        %v2344 = vld [vmem:[%s2258 + $0x7f8] sm:$0xf]
        %v2345 = vld [vmem:[%s2258 + $0x810] sm:$0xf]
        %v2346 = vld [vmem:[%s2258 + $0x828] sm:$0xf]
        %v2347 = vld [vmem:[%s2258 + $0x840] sm:$0xf]
        %v2348 = vld [vmem:[%s2258 + $0x858] sm:$0xf]
        %v2349 = vld [vmem:[%s2258 + $0x870] sm:$0xf]
        %v2350 = vld [vmem:[%s2258 + $0x888] sm:$0xf]
        %v2351 = vld [vmem:[%s2258 + $0x8a0] sm:$0xf]
        %v2352 = vld [vmem:[%s2258 + $0x8b8] sm:$0xf]
        %v2353 = vld [vmem:[%s2258 + $0x8d0] sm:$0xf]
        %v2354 = vld [vmem:[%s2258 + $0x8e8] sm:$0xf]
        %v2355 = vld [vmem:[%s2258 + $0x900] sm:$0xf]
        %v2356 = vld [vmem:[%s2258 + $0x918] sm:$0xf]
        %v2357 = vld [vmem:[%s2258 + $0x930] sm:$0xf]
        %v2358 = vld [vmem:[%s2258 + $0x948] sm:$0xf]
        %v2359 = vld [vmem:[%s2258 + $0x960] sm:$0xf]
        %v2360 = vld [vmem:[%s2258 + $0x978] sm:$0xf]
        %v2361 = vld [vmem:[%s2258 + $0x990] sm:$0xf]
        %v2362 = vld [vmem:[%s2258 + $0x9a8] sm:$0xf]
        %v2363 = vld [vmem:[%s2258 + $0x9c0] sm:$0xf]
        %v2364 = vld [vmem:[%s2258 + $0x9d8] sm:$0xf]
        %v2365 = vld [vmem:[%s2258 + $0x9f0] sm:$0xf]
        %v2366 = vld [vmem:[%s2258 + $0xa08] sm:$0xf]
        %v2367 = vld [vmem:[%s2258 + $0xa20] sm:$0xf]
        %v2368 = vld [vmem:[%s2258 + $0xa38] sm:$0xf]
        %v2369 = vld [vmem:[%s2258 + $0xa50] sm:$0xf]
        %v2370 = vld [vmem:[%s2258 + $0xa68] sm:$0xf]
        %v2371 = vld [vmem:[%s2258 + $0xa80] sm:$0xf]
        %v2372 = vld [vmem:[%s2258 + $0xa98] sm:$0xf]
        %v2373 = vld [vmem:[%s2258 + $0xab0] sm:$0xf]
        %v2374 = vld [vmem:[%s2258 + $0xac8] sm:$0xf]
        %v2375 = vld [vmem:[%s2258 + $0xae0] sm:$0xf]
        %v2376 = vld [vmem:[%s2258 + $0xaf8] sm:$0xf]
        %v2377 = vld [vmem:[%s2258 + $0xb10] sm:$0xf]
        %v2378 = vld [vmem:[%s2258 + $0xb28] sm:$0xf]
        %v2379 = vld [vmem:[%s2258 + $0xb40] sm:$0xf]
        %v2380 = vld [vmem:[%s2258 + $0xb58] sm:$0xf]
        %v2381 = vld [vmem:[%s2258 + $0xb70] sm:$0xf]
        %v2382 = vld [vmem:[%s2258 + $0xb88] sm:$0xf]
        %v2383 = vld [vmem:[%s2258 + $0xba0] sm:$0xf]
        %v2384 = vld [vmem:[%s2258 + $0xbb8] sm:$0xf]
        %v2385 = vld [vmem:[%s2258 + $0xbd0] sm:$0xf]
        %v2386 = vld [vmem:[%s2258 + $0xbe8] sm:$0xf]
        %v2387 = vunpack.c.l.bf16 %v2259
        %v2388 = vunpack.c.l.bf16 %v2260
        %v2389 = vunpack.c.l.bf16 %v2261
        %v2390 = vunpack.c.l.bf16 %v2262
        %v2391 = vunpack.c.l.bf16 %v2263
        %v2392 = vunpack.c.l.bf16 %v2264
        %v2393 = vunpack.c.l.bf16 %v2265
        %v2394 = vunpack.c.l.bf16 %v2266
        %v2395 = vunpack.c.l.bf16 %v2267
        %v2396 = vunpack.c.l.bf16 %v2268
        %v2397 = vunpack.c.l.bf16 %v2269
        %v2398 = vunpack.c.l.bf16 %v2270
        %v2399 = vunpack.c.l.bf16 %v2271
        %v2400 = vunpack.c.l.bf16 %v2272
        %v2401 = vunpack.c.l.bf16 %v2273
        %v2402 = vunpack.c.l.bf16 %v2274
        %v2403 = vunpack.c.l.bf16 %v2275
        %v2404 = vunpack.c.l.bf16 %v2276
        %v2405 = vunpack.c.l.bf16 %v2277
        %v2406 = vunpack.c.l.bf16 %v2278
        %v2407 = vunpack.c.l.bf16 %v2279
        %v2408 = vunpack.c.l.bf16 %v2280
        %v2409 = vunpack.c.l.bf16 %v2281
        %v2410 = vunpack.c.l.bf16 %v2282
        %v2411 = vunpack.c.l.bf16 %v2283
        %v2412 = vunpack.c.l.bf16 %v2284
        %v2413 = vunpack.c.l.bf16 %v2285
        %v2414 = vunpack.c.l.bf16 %v2286
        %v2415 = vunpack.c.l.bf16 %v2287
        %v2416 = vunpack.c.l.bf16 %v2288
        %v2417 = vunpack.c.l.bf16 %v2289
        %v2418 = vunpack.c.l.bf16 %v2290
        %v2419 = vunpack.c.l.bf16 %v2291
        %v2420 = vunpack.c.l.bf16 %v2292
        %v2421 = vunpack.c.l.bf16 %v2293
        %v2422 = vunpack.c.l.bf16 %v2294
        %v2423 = vunpack.c.l.bf16 %v2295
        %v2424 = vunpack.c.l.bf16 %v2296
        %v2425 = vunpack.c.l.bf16 %v2297
        %v2426 = vunpack.c.l.bf16 %v2298
        %v2427 = vunpack.c.l.bf16 %v2299
        %v2428 = vunpack.c.l.bf16 %v2300
        %v2429 = vunpack.c.l.bf16 %v2301
        %v2430 = vunpack.c.l.bf16 %v2302
        %v2431 = vunpack.c.l.bf16 %v2303
        %v2432 = vunpack.c.l.bf16 %v2304
        %v2433 = vunpack.c.l.bf16 %v2305
        %v2434 = vunpack.c.l.bf16 %v2306
        %v2435 = vunpack.c.l.bf16 %v2307
        %v2436 = vunpack.c.l.bf16 %v2308
        %v2437 = vunpack.c.l.bf16 %v2309
        %v2438 = vunpack.c.l.bf16 %v2310
        %v2439 = vunpack.c.l.bf16 %v2311
        %v2440 = vunpack.c.l.bf16 %v2312
        %v2441 = vunpack.c.l.bf16 %v2313
        %v2442 = vunpack.c.l.bf16 %v2314
        %v2443 = vunpack.c.l.bf16 %v2315
        %v2444 = vunpack.c.l.bf16 %v2316
        %v2445 = vunpack.c.l.bf16 %v2317
        %v2446 = vunpack.c.l.bf16 %v2318
        %v2447 = vunpack.c.l.bf16 %v2319
        %v2448 = vunpack.c.l.bf16 %v2320
        %v2449 = vunpack.c.l.bf16 %v2321
        %v2450 = vunpack.c.l.bf16 %v2322
        %v2451 = vunpack.c.l.bf16 %v2323
        %v2452 = vunpack.c.l.bf16 %v2324
        %v2453 = vunpack.c.l.bf16 %v2325
        %v2454 = vunpack.c.l.bf16 %v2326
        %v2455 = vunpack.c.l.bf16 %v2327
        %v2456 = vunpack.c.l.bf16 %v2328
        %v2457 = vunpack.c.l.bf16 %v2329
        %v2458 = vunpack.c.l.bf16 %v2330
        %v2459 = vunpack.c.l.bf16 %v2331
        %v2460 = vunpack.c.l.bf16 %v2332
        %v2461 = vunpack.c.l.bf16 %v2333
        %v2462 = vunpack.c.l.bf16 %v2334
        %v2463 = vunpack.c.l.bf16 %v2335
        %v2464 = vunpack.c.l.bf16 %v2336
        %v2465 = vunpack.c.l.bf16 %v2337
        %v2466 = vunpack.c.l.bf16 %v2338
        %v2467 = vunpack.c.l.bf16 %v2339
        %v2468 = vunpack.c.l.bf16 %v2340
        %v2469 = vunpack.c.l.bf16 %v2341
        %v2470 = vunpack.c.l.bf16 %v2342
        %v2471 = vunpack.c.l.bf16 %v2343
        %v2472 = vunpack.c.l.bf16 %v2344
        %v2473 = vunpack.c.l.bf16 %v2345
        %v2474 = vunpack.c.l.bf16 %v2346
        %v2475 = vunpack.c.l.bf16 %v2347
        %v2476 = vunpack.c.l.bf16 %v2348
        %v2477 = vunpack.c.l.bf16 %v2349
        %v2478 = vunpack.c.l.bf16 %v2350
        %v2479 = vunpack.c.l.bf16 %v2351
        %v2480 = vunpack.c.l.bf16 %v2352
        %v2481 = vunpack.c.l.bf16 %v2353
        %v2482 = vunpack.c.l.bf16 %v2354
        %v2483 = vunpack.c.l.bf16 %v2355
        %v2484 = vunpack.c.l.bf16 %v2356
        %v2485 = vunpack.c.l.bf16 %v2357
        %v2486 = vunpack.c.l.bf16 %v2358
        %v2487 = vunpack.c.l.bf16 %v2359
        %v2488 = vunpack.c.l.bf16 %v2360
        %v2489 = vunpack.c.l.bf16 %v2361
        %v2490 = vunpack.c.l.bf16 %v2362
        %v2491 = vunpack.c.l.bf16 %v2363
        %v2492 = vunpack.c.l.bf16 %v2364
        %v2493 = vunpack.c.l.bf16 %v2365
        %v2494 = vunpack.c.l.bf16 %v2366
        %v2495 = vunpack.c.l.bf16 %v2367
        %v2496 = vunpack.c.l.bf16 %v2368
        %v2497 = vunpack.c.l.bf16 %v2369
        %v2498 = vunpack.c.l.bf16 %v2370
        %v2499 = vunpack.c.l.bf16 %v2371
        %v2500 = vunpack.c.l.bf16 %v2372
        %v2501 = vunpack.c.l.bf16 %v2373
        %v2502 = vunpack.c.l.bf16 %v2374
        %v2503 = vunpack.c.l.bf16 %v2375
        %v2504 = vunpack.c.l.bf16 %v2376
        %v2505 = vunpack.c.l.bf16 %v2377
        %v2506 = vunpack.c.l.bf16 %v2378
        %v2507 = vunpack.c.l.bf16 %v2379
        %v2508 = vunpack.c.l.bf16 %v2380
        %v2509 = vunpack.c.l.bf16 %v2381
        %v2510 = vunpack.c.l.bf16 %v2382
        %v2511 = vunpack.c.l.bf16 %v2383
        %v2512 = vunpack.c.l.bf16 %v2384
        %v2513 = vunpack.c.l.bf16 %v2385
        %v2514 = vunpack.c.l.bf16 %v2386
        %v2515 = vmul.f32 %v2387, %v694
        %v2516 = vmul.f32 %v2388, %v699
        %v2517 = vmul.f32 %v2389, %v704
        %v2518 = vmul.f32 %v2390, %v709
        %v2519 = vmul.f32 %v2391, %v714
        %v2520 = vmul.f32 %v2392, %v719
        %v2521 = vmul.f32 %v2393, %v724
        %v2522 = vmul.f32 %v2394, %v729
        %v2523 = vmul.f32 %v2395, %v734
        %v2524 = vmul.f32 %v2396, %v739
        %v2525 = vmul.f32 %v2397, %v744
        %v2526 = vmul.f32 %v2398, %v749
        %v2527 = vmul.f32 %v2399, %v754
        %v2528 = vmul.f32 %v2400, %v759
        %v2529 = vmul.f32 %v2401, %v764
        %v2530 = vmul.f32 %v2402, %v769
        %v2531 = vmul.f32 %v2403, %v694
        %v2532 = vmul.f32 %v2404, %v699
        %v2533 = vmul.f32 %v2405, %v704
        %v2534 = vmul.f32 %v2406, %v709
        %v2535 = vmul.f32 %v2407, %v714
        %v2536 = vmul.f32 %v2408, %v719
        %v2537 = vmul.f32 %v2409, %v724
        %v2538 = vmul.f32 %v2410, %v729
        %v2539 = vmul.f32 %v2411, %v734
        %v2540 = vmul.f32 %v2412, %v739
        %v2541 = vmul.f32 %v2413, %v744
        %v2542 = vmul.f32 %v2414, %v749
        %v2543 = vmul.f32 %v2415, %v754
        %v2544 = vmul.f32 %v2416, %v759
        %v2545 = vmul.f32 %v2417, %v764
        %v2546 = vmul.f32 %v2418, %v769
        %v2547 = vmul.f32 %v2419, %v694
        %v2548 = vmul.f32 %v2420, %v699
        %v2549 = vmul.f32 %v2421, %v704
        %v2550 = vmul.f32 %v2422, %v709
        %v2551 = vmul.f32 %v2423, %v714
        %v2552 = vmul.f32 %v2424, %v719
        %v2553 = vmul.f32 %v2425, %v724
        %v2554 = vmul.f32 %v2426, %v729
        %v2555 = vmul.f32 %v2427, %v734
        %v2556 = vmul.f32 %v2428, %v739
        %v2557 = vmul.f32 %v2429, %v744
        %v2558 = vmul.f32 %v2430, %v749
        %v2559 = vmul.f32 %v2431, %v754
        %v2560 = vmul.f32 %v2432, %v759
        %v2561 = vmul.f32 %v2433, %v764
        %v2562 = vmul.f32 %v2434, %v769
        %v2563 = vmul.f32 %v2435, %v694
        %v2564 = vmul.f32 %v2436, %v699
        %v2565 = vmul.f32 %v2437, %v704
        %v2566 = vmul.f32 %v2438, %v709
        %v2567 = vmul.f32 %v2439, %v714
        %v2568 = vmul.f32 %v2440, %v719
        %v2569 = vmul.f32 %v2441, %v724
        %v2570 = vmul.f32 %v2442, %v729
        %v2571 = vmul.f32 %v2443, %v734
        %v2572 = vmul.f32 %v2444, %v739
        %v2573 = vmul.f32 %v2445, %v744
        %v2574 = vmul.f32 %v2446, %v749
        %v2575 = vmul.f32 %v2447, %v754
        %v2576 = vmul.f32 %v2448, %v759
        %v2577 = vmul.f32 %v2449, %v764
        %v2578 = vmul.f32 %v2450, %v769
        %v2579 = vmul.f32 %v2451, %v694
        %v2580 = vmul.f32 %v2452, %v699
        %v2581 = vmul.f32 %v2453, %v704
        %v2582 = vmul.f32 %v2454, %v709
        %v2583 = vmul.f32 %v2455, %v714
        %v2584 = vmul.f32 %v2456, %v719
        %v2585 = vmul.f32 %v2457, %v724
        %v2586 = vmul.f32 %v2458, %v729
        %v2587 = vmul.f32 %v2459, %v734
        %v2588 = vmul.f32 %v2460, %v739
        %v2589 = vmul.f32 %v2461, %v744
        %v2590 = vmul.f32 %v2462, %v749
        %v2591 = vmul.f32 %v2463, %v754
        %v2592 = vmul.f32 %v2464, %v759
        %v2593 = vmul.f32 %v2465, %v764
        %v2594 = vmul.f32 %v2466, %v769
        %v2595 = vmul.f32 %v2467, %v694
        %v2596 = vmul.f32 %v2468, %v699
        %v2597 = vmul.f32 %v2469, %v704
        %v2598 = vmul.f32 %v2470, %v709
        %v2599 = vmul.f32 %v2471, %v714
        %v2600 = vmul.f32 %v2472, %v719
        %v2601 = vmul.f32 %v2473, %v724
        %v2602 = vmul.f32 %v2474, %v729
        %v2603 = vmul.f32 %v2475, %v734
        %v2604 = vmul.f32 %v2476, %v739
        %v2605 = vmul.f32 %v2477, %v744
        %v2606 = vmul.f32 %v2478, %v749
        %v2607 = vmul.f32 %v2479, %v754
        %v2608 = vmul.f32 %v2480, %v759
        %v2609 = vmul.f32 %v2481, %v764
        %v2610 = vmul.f32 %v2482, %v769
        %v2611 = vmul.f32 %v2483, %v694
        %v2612 = vmul.f32 %v2484, %v699
        %v2613 = vmul.f32 %v2485, %v704
        %v2614 = vmul.f32 %v2486, %v709
        %v2615 = vmul.f32 %v2487, %v714
        %v2616 = vmul.f32 %v2488, %v719
        %v2617 = vmul.f32 %v2489, %v724
        %v2618 = vmul.f32 %v2490, %v729
        %v2619 = vmul.f32 %v2491, %v734
        %v2620 = vmul.f32 %v2492, %v739
        %v2621 = vmul.f32 %v2493, %v744
        %v2622 = vmul.f32 %v2494, %v749
        %v2623 = vmul.f32 %v2495, %v754
        %v2624 = vmul.f32 %v2496, %v759
        %v2625 = vmul.f32 %v2497, %v764
        %v2626 = vmul.f32 %v2498, %v769
        %v2627 = vmul.f32 %v2499, %v694
        %v2628 = vmul.f32 %v2500, %v699
        %v2629 = vmul.f32 %v2501, %v704
        %v2630 = vmul.f32 %v2502, %v709
        %v2631 = vmul.f32 %v2503, %v714
        %v2632 = vmul.f32 %v2504, %v719
        %v2633 = vmul.f32 %v2505, %v724
        %v2634 = vmul.f32 %v2506, %v729
        %v2635 = vmul.f32 %v2507, %v734
        %v2636 = vmul.f32 %v2508, %v739
        %v2637 = vmul.f32 %v2509, %v744
        %v2638 = vmul.f32 %v2510, %v749
        %v2639 = vmul.f32 %v2511, %v754
        %v2640 = vmul.f32 %v2512, %v759
        %v2641 = vmul.f32 %v2513, %v764
        %v2642 = vmul.f32 %v2514, %v769
        %v2643 = vadd.f32 %v2515, %v2516
        %v2644 = vadd.f32 %v2643, %v2517
        %v2645 = vadd.f32 %v2644, %v2518
        %v2646 = vadd.f32 %v2645, %v2519
        %v2647 = vadd.f32 %v2646, %v2520
        %v2648 = vadd.f32 %v2647, %v2521
        %v2649 = vadd.f32 %v2648, %v2522
        %v2650 = vadd.f32 %v2649, %v2523
        %v2651 = vadd.f32 %v2650, %v2524
        %v2652 = vadd.f32 %v2651, %v2525
        %v2653 = vadd.f32 %v2652, %v2526
        %v2654 = vadd.f32 %v2653, %v2527
        %v2655 = vadd.f32 %v2654, %v2528
        %v2656 = vadd.f32 %v2655, %v2529
        %v2657 = vadd.f32 %v2656, %v2530
        %v2658 = vrot.slane %v2657, 4
        %v2659 = vadd.f32 %v2657, %v2658
        %v2660 = vrot.slane %v2659, 2
        %v2661 = vadd.f32 %v2659, %v2660
        %v2662 = vrot.slane %v2661, 1
        %v2663 = vadd.f32 %v2661, %v2662
        %v2664 = vadd.f32 %v2531, %v2532
        %v2665 = vadd.f32 %v2664, %v2533
        %v2666 = vadd.f32 %v2665, %v2534
        %v2667 = vadd.f32 %v2666, %v2535
        %v2668 = vadd.f32 %v2667, %v2536
        %v2669 = vadd.f32 %v2668, %v2537
        %v2670 = vadd.f32 %v2669, %v2538
        %v2671 = vadd.f32 %v2670, %v2539
        %v2672 = vadd.f32 %v2671, %v2540
        %v2673 = vadd.f32 %v2672, %v2541
        %v2674 = vadd.f32 %v2673, %v2542
        %v2675 = vadd.f32 %v2674, %v2543
        %v2676 = vadd.f32 %v2675, %v2544
        %v2677 = vadd.f32 %v2676, %v2545
        %v2678 = vadd.f32 %v2677, %v2546
        %v2679 = vrot.slane %v2678, 4
        %v2680 = vadd.f32 %v2678, %v2679
        %v2681 = vrot.slane %v2680, 2
        %v2682 = vadd.f32 %v2680, %v2681
        %v2683 = vrot.slane %v2682, 1
        %v2684 = vadd.f32 %v2682, %v2683
        %v2685 = vadd.f32 %v2547, %v2548
        %v2686 = vadd.f32 %v2685, %v2549
        %v2687 = vadd.f32 %v2686, %v2550
        %v2688 = vadd.f32 %v2687, %v2551
        %v2689 = vadd.f32 %v2688, %v2552
        %v2690 = vadd.f32 %v2689, %v2553
        %v2691 = vadd.f32 %v2690, %v2554
        %v2692 = vadd.f32 %v2691, %v2555
        %v2693 = vadd.f32 %v2692, %v2556
        %v2694 = vadd.f32 %v2693, %v2557
        %v2695 = vadd.f32 %v2694, %v2558
        %v2696 = vadd.f32 %v2695, %v2559
        %v2697 = vadd.f32 %v2696, %v2560
        %v2698 = vadd.f32 %v2697, %v2561
        %v2699 = vadd.f32 %v2698, %v2562
        %v2700 = vrot.slane %v2699, 4
        %v2701 = vadd.f32 %v2699, %v2700
        %v2702 = vrot.slane %v2701, 2
        %v2703 = vadd.f32 %v2701, %v2702
        %v2704 = vrot.slane %v2703, 1
        %v2705 = vadd.f32 %v2703, %v2704
        %v2706 = vadd.f32 %v2563, %v2564
        %v2707 = vadd.f32 %v2706, %v2565
        %v2708 = vadd.f32 %v2707, %v2566
        %v2709 = vadd.f32 %v2708, %v2567
        %v2710 = vadd.f32 %v2709, %v2568
        %v2711 = vadd.f32 %v2710, %v2569
        %v2712 = vadd.f32 %v2711, %v2570
        %v2713 = vadd.f32 %v2712, %v2571
        %v2714 = vadd.f32 %v2713, %v2572
        %v2715 = vadd.f32 %v2714, %v2573
        %v2716 = vadd.f32 %v2715, %v2574
        %v2717 = vadd.f32 %v2716, %v2575
        %v2718 = vadd.f32 %v2717, %v2576
        %v2719 = vadd.f32 %v2718, %v2577
        %v2720 = vadd.f32 %v2719, %v2578
        %v2721 = vrot.slane %v2720, 4
        %v2722 = vadd.f32 %v2720, %v2721
        %v2723 = vrot.slane %v2722, 2
        %v2724 = vadd.f32 %v2722, %v2723
        %v2725 = vrot.slane %v2724, 1
        %v2726 = vadd.f32 %v2724, %v2725
        %v2727 = vadd.f32 %v2579, %v2580
        %v2728 = vadd.f32 %v2727, %v2581
        %v2729 = vadd.f32 %v2728, %v2582
        %v2730 = vadd.f32 %v2729, %v2583
        %v2731 = vadd.f32 %v2730, %v2584
        %v2732 = vadd.f32 %v2731, %v2585
        %v2733 = vadd.f32 %v2732, %v2586
        %v2734 = vadd.f32 %v2733, %v2587
        %v2735 = vadd.f32 %v2734, %v2588
        %v2736 = vadd.f32 %v2735, %v2589
        %v2737 = vadd.f32 %v2736, %v2590
        %v2738 = vadd.f32 %v2737, %v2591
        %v2739 = vadd.f32 %v2738, %v2592
        %v2740 = vadd.f32 %v2739, %v2593
        %v2741 = vadd.f32 %v2740, %v2594
        %v2742 = vrot.slane %v2741, 4
        %v2743 = vadd.f32 %v2741, %v2742
        %v2744 = vrot.slane %v2743, 2
        %v2745 = vadd.f32 %v2743, %v2744
        %v2746 = vrot.slane %v2745, 1
        %v2747 = vadd.f32 %v2745, %v2746
        %v2748 = vadd.f32 %v2595, %v2596
        %v2749 = vadd.f32 %v2748, %v2597
        %v2750 = vadd.f32 %v2749, %v2598
        %v2751 = vadd.f32 %v2750, %v2599
        %v2752 = vadd.f32 %v2751, %v2600
        %v2753 = vadd.f32 %v2752, %v2601
        %v2754 = vadd.f32 %v2753, %v2602
        %v2755 = vadd.f32 %v2754, %v2603
        %v2756 = vadd.f32 %v2755, %v2604
        %v2757 = vadd.f32 %v2756, %v2605
        %v2758 = vadd.f32 %v2757, %v2606
        %v2759 = vadd.f32 %v2758, %v2607
        %v2760 = vadd.f32 %v2759, %v2608
        %v2761 = vadd.f32 %v2760, %v2609
        %v2762 = vadd.f32 %v2761, %v2610
        %v2763 = vrot.slane %v2762, 4
        %v2764 = vadd.f32 %v2762, %v2763
        %v2765 = vrot.slane %v2764, 2
        %v2766 = vadd.f32 %v2764, %v2765
        %v2767 = vrot.slane %v2766, 1
        %v2768 = vadd.f32 %v2766, %v2767
        %v2769 = vadd.f32 %v2611, %v2612
        %v2770 = vadd.f32 %v2769, %v2613
        %v2771 = vadd.f32 %v2770, %v2614
        %v2772 = vadd.f32 %v2771, %v2615
        %v2773 = vadd.f32 %v2772, %v2616
        %v2774 = vadd.f32 %v2773, %v2617
        %v2775 = vadd.f32 %v2774, %v2618
        %v2776 = vadd.f32 %v2775, %v2619
        %v2777 = vadd.f32 %v2776, %v2620
        %v2778 = vadd.f32 %v2777, %v2621
        %v2779 = vadd.f32 %v2778, %v2622
        %v2780 = vadd.f32 %v2779, %v2623
        %v2781 = vadd.f32 %v2780, %v2624
        %v2782 = vadd.f32 %v2781, %v2625
        %v2783 = vadd.f32 %v2782, %v2626
        %v2784 = vrot.slane %v2783, 4
        %v2785 = vadd.f32 %v2783, %v2784
        %v2786 = vrot.slane %v2785, 2
        %v2787 = vadd.f32 %v2785, %v2786
        %v2788 = vrot.slane %v2787, 1
        %v2789 = vadd.f32 %v2787, %v2788
        %v2790 = vadd.f32 %v2627, %v2628
        %v2791 = vadd.f32 %v2790, %v2629
        %v2792 = vadd.f32 %v2791, %v2630
        %v2793 = vadd.f32 %v2792, %v2631
        %v2794 = vadd.f32 %v2793, %v2632
        %v2795 = vadd.f32 %v2794, %v2633
        %v2796 = vadd.f32 %v2795, %v2634
        %v2797 = vadd.f32 %v2796, %v2635
        %v2798 = vadd.f32 %v2797, %v2636
        %v2799 = vadd.f32 %v2798, %v2637
        %v2800 = vadd.f32 %v2799, %v2638
        %v2801 = vadd.f32 %v2800, %v2639
        %v2802 = vadd.f32 %v2801, %v2640
        %v2803 = vadd.f32 %v2802, %v2641
        %v2804 = vadd.f32 %v2803, %v2642
        %v2805 = vrot.slane %v2804, 4
        %v2806 = vadd.f32 %v2804, %v2805
        %v2807 = vrot.slane %v2806, 2
        %v2808 = vadd.f32 %v2806, %v2807
        %v2809 = vrot.slane %v2808, 1
        %v2810 = vadd.f32 %v2808, %v2809
        %v2811 = vadd.f32 %v2663, %v1067
        %v2812 = vadd.f32 %v2684, %v1067
        %v2813 = vadd.f32 %v2705, %v1067
        %v2814 = vadd.f32 %v2726, %v1067
        %v2815 = vadd.f32 %v2747, %v1067
        %v2816 = vadd.f32 %v2768, %v1067
        %v2817 = vadd.f32 %v2789, %v1067
        %v2818 = vadd.f32 %v2810, %v1067
        %v2827 = vsel %vm1084, %v2812, %v2811
        %v2828 = vsel %vm1086, %v2813, %v2827
        %v2829 = vsel %vm1088, %v2814, %v2828
        %v2830 = vsel %vm1090, %v2815, %v2829
        %v2831 = vsel %vm1092, %v2816, %v2830
        %v2832 = vsel %vm1094, %v2817, %v2831
        %v2833 = vsel %vm1096, %v2818, %v2832
        %s2835 = scalar_lea.vmem [#allocation2], 24
        %2836 = vst [vmem:[%s2835] sm:$0xff] %v2833
        %s2837 = scalar_lea.vmem %s354, 16 [#allocation4]
        %v2838 = vld [vmem:[%s2837] sm:$0xf]
        %v2839 = vld [vmem:[%s2837 + $0x18] sm:$0xf]
        %v2840 = vld [vmem:[%s2837 + $0x30] sm:$0xf]
        %v2841 = vld [vmem:[%s2837 + $0x48] sm:$0xf]
        %v2842 = vld [vmem:[%s2837 + $0x60] sm:$0xf]
        %v2843 = vld [vmem:[%s2837 + $0x78] sm:$0xf]
        %v2844 = vld [vmem:[%s2837 + $0x90] sm:$0xf]
        %v2845 = vld [vmem:[%s2837 + $0xa8] sm:$0xf]
        %v2846 = vld [vmem:[%s2837 + $0xc0] sm:$0xf]
        %v2847 = vld [vmem:[%s2837 + $0xd8] sm:$0xf]
        %v2848 = vld [vmem:[%s2837 + $0xf0] sm:$0xf]
        %v2849 = vld [vmem:[%s2837 + $0x108] sm:$0xf]
        %v2850 = vld [vmem:[%s2837 + $0x120] sm:$0xf]
        %v2851 = vld [vmem:[%s2837 + $0x138] sm:$0xf]
        %v2852 = vld [vmem:[%s2837 + $0x150] sm:$0xf]
        %v2853 = vld [vmem:[%s2837 + $0x168] sm:$0xf]
        %v2854 = vld [vmem:[%s2837 + $0x180] sm:$0xf]
        %v2855 = vld [vmem:[%s2837 + $0x198] sm:$0xf]
        %v2856 = vld [vmem:[%s2837 + $0x1b0] sm:$0xf]
        %v2857 = vld [vmem:[%s2837 + $0x1c8] sm:$0xf]
        %v2858 = vld [vmem:[%s2837 + $0x1e0] sm:$0xf]
        %v2859 = vld [vmem:[%s2837 + $0x1f8] sm:$0xf]
        %v2860 = vld [vmem:[%s2837 + $0x210] sm:$0xf]
        %v2861 = vld [vmem:[%s2837 + $0x228] sm:$0xf]
        %v2862 = vld [vmem:[%s2837 + $0x240] sm:$0xf]
        %v2863 = vld [vmem:[%s2837 + $0x258] sm:$0xf]
        %v2864 = vld [vmem:[%s2837 + $0x270] sm:$0xf]
        %v2865 = vld [vmem:[%s2837 + $0x288] sm:$0xf]
        %v2866 = vld [vmem:[%s2837 + $0x2a0] sm:$0xf]
        %v2867 = vld [vmem:[%s2837 + $0x2b8] sm:$0xf]
        %v2868 = vld [vmem:[%s2837 + $0x2d0] sm:$0xf]
        %v2869 = vld [vmem:[%s2837 + $0x2e8] sm:$0xf]
        %v2870 = vld [vmem:[%s2837 + $0x300] sm:$0xf]
        %v2871 = vld [vmem:[%s2837 + $0x318] sm:$0xf]
        %v2872 = vld [vmem:[%s2837 + $0x330] sm:$0xf]
        %v2873 = vld [vmem:[%s2837 + $0x348] sm:$0xf]
        %v2874 = vld [vmem:[%s2837 + $0x360] sm:$0xf]
        %v2875 = vld [vmem:[%s2837 + $0x378] sm:$0xf]
        %v2876 = vld [vmem:[%s2837 + $0x390] sm:$0xf]
        %v2877 = vld [vmem:[%s2837 + $0x3a8] sm:$0xf]
        %v2878 = vld [vmem:[%s2837 + $0x3c0] sm:$0xf]
        %v2879 = vld [vmem:[%s2837 + $0x3d8] sm:$0xf]
        %v2880 = vld [vmem:[%s2837 + $0x3f0] sm:$0xf]
        %v2881 = vld [vmem:[%s2837 + $0x408] sm:$0xf]
        %v2882 = vld [vmem:[%s2837 + $0x420] sm:$0xf]
        %v2883 = vld [vmem:[%s2837 + $0x438] sm:$0xf]
        %v2884 = vld [vmem:[%s2837 + $0x450] sm:$0xf]
        %v2885 = vld [vmem:[%s2837 + $0x468] sm:$0xf]
        %v2886 = vld [vmem:[%s2837 + $0x480] sm:$0xf]
        %v2887 = vld [vmem:[%s2837 + $0x498] sm:$0xf]
        %v2888 = vld [vmem:[%s2837 + $0x4b0] sm:$0xf]
        %v2889 = vld [vmem:[%s2837 + $0x4c8] sm:$0xf]
        %v2890 = vld [vmem:[%s2837 + $0x4e0] sm:$0xf]
        %v2891 = vld [vmem:[%s2837 + $0x4f8] sm:$0xf]
        %v2892 = vld [vmem:[%s2837 + $0x510] sm:$0xf]
        %v2893 = vld [vmem:[%s2837 + $0x528] sm:$0xf]
        %v2894 = vld [vmem:[%s2837 + $0x540] sm:$0xf]
        %v2895 = vld [vmem:[%s2837 + $0x558] sm:$0xf]
        %v2896 = vld [vmem:[%s2837 + $0x570] sm:$0xf]
        %v2897 = vld [vmem:[%s2837 + $0x588] sm:$0xf]
        %v2898 = vld [vmem:[%s2837 + $0x5a0] sm:$0xf]
        %v2899 = vld [vmem:[%s2837 + $0x5b8] sm:$0xf]
        %v2900 = vld [vmem:[%s2837 + $0x5d0] sm:$0xf]
        %v2901 = vld [vmem:[%s2837 + $0x5e8] sm:$0xf]
        %v2902 = vld [vmem:[%s2837 + $0x600] sm:$0xf]
        %v2903 = vld [vmem:[%s2837 + $0x618] sm:$0xf]
        %v2904 = vld [vmem:[%s2837 + $0x630] sm:$0xf]
        %v2905 = vld [vmem:[%s2837 + $0x648] sm:$0xf]
        %v2906 = vld [vmem:[%s2837 + $0x660] sm:$0xf]
        %v2907 = vld [vmem:[%s2837 + $0x678] sm:$0xf]
        %v2908 = vld [vmem:[%s2837 + $0x690] sm:$0xf]
        %v2909 = vld [vmem:[%s2837 + $0x6a8] sm:$0xf]
        %v2910 = vld [vmem:[%s2837 + $0x6c0] sm:$0xf]
        %v2911 = vld [vmem:[%s2837 + $0x6d8] sm:$0xf]
        %v2912 = vld [vmem:[%s2837 + $0x6f0] sm:$0xf]
        %v2913 = vld [vmem:[%s2837 + $0x708] sm:$0xf]
        %v2914 = vld [vmem:[%s2837 + $0x720] sm:$0xf]
        %v2915 = vld [vmem:[%s2837 + $0x738] sm:$0xf]
        %v2916 = vld [vmem:[%s2837 + $0x750] sm:$0xf]
        %v2917 = vld [vmem:[%s2837 + $0x768] sm:$0xf]
        %v2918 = vld [vmem:[%s2837 + $0x780] sm:$0xf]
        %v2919 = vld [vmem:[%s2837 + $0x798] sm:$0xf]
        %v2920 = vld [vmem:[%s2837 + $0x7b0] sm:$0xf]
        %v2921 = vld [vmem:[%s2837 + $0x7c8] sm:$0xf]
        %v2922 = vld [vmem:[%s2837 + $0x7e0] sm:$0xf]
        %v2923 = vld [vmem:[%s2837 + $0x7f8] sm:$0xf]
        %v2924 = vld [vmem:[%s2837 + $0x810] sm:$0xf]
        %v2925 = vld [vmem:[%s2837 + $0x828] sm:$0xf]
        %v2926 = vld [vmem:[%s2837 + $0x840] sm:$0xf]
        %v2927 = vld [vmem:[%s2837 + $0x858] sm:$0xf]
        %v2928 = vld [vmem:[%s2837 + $0x870] sm:$0xf]
        %v2929 = vld [vmem:[%s2837 + $0x888] sm:$0xf]
        %v2930 = vld [vmem:[%s2837 + $0x8a0] sm:$0xf]
        %v2931 = vld [vmem:[%s2837 + $0x8b8] sm:$0xf]
        %v2932 = vld [vmem:[%s2837 + $0x8d0] sm:$0xf]
        %v2933 = vld [vmem:[%s2837 + $0x8e8] sm:$0xf]
        %v2934 = vld [vmem:[%s2837 + $0x900] sm:$0xf]
        %v2935 = vld [vmem:[%s2837 + $0x918] sm:$0xf]
        %v2936 = vld [vmem:[%s2837 + $0x930] sm:$0xf]
        %v2937 = vld [vmem:[%s2837 + $0x948] sm:$0xf]
        %v2938 = vld [vmem:[%s2837 + $0x960] sm:$0xf]
        %v2939 = vld [vmem:[%s2837 + $0x978] sm:$0xf]
        %v2940 = vld [vmem:[%s2837 + $0x990] sm:$0xf]
        %v2941 = vld [vmem:[%s2837 + $0x9a8] sm:$0xf]
        %v2942 = vld [vmem:[%s2837 + $0x9c0] sm:$0xf]
        %v2943 = vld [vmem:[%s2837 + $0x9d8] sm:$0xf]
        %v2944 = vld [vmem:[%s2837 + $0x9f0] sm:$0xf]
        %v2945 = vld [vmem:[%s2837 + $0xa08] sm:$0xf]
        %v2946 = vld [vmem:[%s2837 + $0xa20] sm:$0xf]
        %v2947 = vld [vmem:[%s2837 + $0xa38] sm:$0xf]
        %v2948 = vld [vmem:[%s2837 + $0xa50] sm:$0xf]
        %v2949 = vld [vmem:[%s2837 + $0xa68] sm:$0xf]
        %v2950 = vld [vmem:[%s2837 + $0xa80] sm:$0xf]
        %v2951 = vld [vmem:[%s2837 + $0xa98] sm:$0xf]
        %v2952 = vld [vmem:[%s2837 + $0xab0] sm:$0xf]
        %v2953 = vld [vmem:[%s2837 + $0xac8] sm:$0xf]
        %v2954 = vld [vmem:[%s2837 + $0xae0] sm:$0xf]
        %v2955 = vld [vmem:[%s2837 + $0xaf8] sm:$0xf]
        %v2956 = vld [vmem:[%s2837 + $0xb10] sm:$0xf]
        %v2957 = vld [vmem:[%s2837 + $0xb28] sm:$0xf]
        %v2958 = vld [vmem:[%s2837 + $0xb40] sm:$0xf]
        %v2959 = vld [vmem:[%s2837 + $0xb58] sm:$0xf]
        %v2960 = vld [vmem:[%s2837 + $0xb70] sm:$0xf]
        %v2961 = vld [vmem:[%s2837 + $0xb88] sm:$0xf]
        %v2962 = vld [vmem:[%s2837 + $0xba0] sm:$0xf]
        %v2963 = vld [vmem:[%s2837 + $0xbb8] sm:$0xf]
        %v2964 = vld [vmem:[%s2837 + $0xbd0] sm:$0xf]
        %v2965 = vld [vmem:[%s2837 + $0xbe8] sm:$0xf]
        %v2966 = vunpack.c.l.bf16 %v2838
        %v2967 = vunpack.c.l.bf16 %v2839
        %v2968 = vunpack.c.l.bf16 %v2840
        %v2969 = vunpack.c.l.bf16 %v2841
        %v2970 = vunpack.c.l.bf16 %v2842
        %v2971 = vunpack.c.l.bf16 %v2843
        %v2972 = vunpack.c.l.bf16 %v2844
        %v2973 = vunpack.c.l.bf16 %v2845
        %v2974 = vunpack.c.l.bf16 %v2846
        %v2975 = vunpack.c.l.bf16 %v2847
        %v2976 = vunpack.c.l.bf16 %v2848
        %v2977 = vunpack.c.l.bf16 %v2849
        %v2978 = vunpack.c.l.bf16 %v2850
        %v2979 = vunpack.c.l.bf16 %v2851
        %v2980 = vunpack.c.l.bf16 %v2852
        %v2981 = vunpack.c.l.bf16 %v2853
        %v2982 = vunpack.c.l.bf16 %v2854
        %v2983 = vunpack.c.l.bf16 %v2855
        %v2984 = vunpack.c.l.bf16 %v2856
        %v2985 = vunpack.c.l.bf16 %v2857
        %v2986 = vunpack.c.l.bf16 %v2858
        %v2987 = vunpack.c.l.bf16 %v2859
        %v2988 = vunpack.c.l.bf16 %v2860
        %v2989 = vunpack.c.l.bf16 %v2861
        %v2990 = vunpack.c.l.bf16 %v2862
        %v2991 = vunpack.c.l.bf16 %v2863
        %v2992 = vunpack.c.l.bf16 %v2864
        %v2993 = vunpack.c.l.bf16 %v2865
        %v2994 = vunpack.c.l.bf16 %v2866
        %v2995 = vunpack.c.l.bf16 %v2867
        %v2996 = vunpack.c.l.bf16 %v2868
        %v2997 = vunpack.c.l.bf16 %v2869
        %v2998 = vunpack.c.l.bf16 %v2870
        %v2999 = vunpack.c.l.bf16 %v2871
        %v3000 = vunpack.c.l.bf16 %v2872
        %v3001 = vunpack.c.l.bf16 %v2873
        %v3002 = vunpack.c.l.bf16 %v2874
        %v3003 = vunpack.c.l.bf16 %v2875
        %v3004 = vunpack.c.l.bf16 %v2876
        %v3005 = vunpack.c.l.bf16 %v2877
        %v3006 = vunpack.c.l.bf16 %v2878
        %v3007 = vunpack.c.l.bf16 %v2879
        %v3008 = vunpack.c.l.bf16 %v2880
        %v3009 = vunpack.c.l.bf16 %v2881
        %v3010 = vunpack.c.l.bf16 %v2882
        %v3011 = vunpack.c.l.bf16 %v2883
        %v3012 = vunpack.c.l.bf16 %v2884
        %v3013 = vunpack.c.l.bf16 %v2885
        %v3014 = vunpack.c.l.bf16 %v2886
        %v3015 = vunpack.c.l.bf16 %v2887
        %v3016 = vunpack.c.l.bf16 %v2888
        %v3017 = vunpack.c.l.bf16 %v2889
        %v3018 = vunpack.c.l.bf16 %v2890
        %v3019 = vunpack.c.l.bf16 %v2891
        %v3020 = vunpack.c.l.bf16 %v2892
        %v3021 = vunpack.c.l.bf16 %v2893
        %v3022 = vunpack.c.l.bf16 %v2894
        %v3023 = vunpack.c.l.bf16 %v2895
        %v3024 = vunpack.c.l.bf16 %v2896
        %v3025 = vunpack.c.l.bf16 %v2897
        %v3026 = vunpack.c.l.bf16 %v2898
        %v3027 = vunpack.c.l.bf16 %v2899
        %v3028 = vunpack.c.l.bf16 %v2900
        %v3029 = vunpack.c.l.bf16 %v2901
        %v3030 = vunpack.c.l.bf16 %v2902
        %v3031 = vunpack.c.l.bf16 %v2903
        %v3032 = vunpack.c.l.bf16 %v2904
        %v3033 = vunpack.c.l.bf16 %v2905
        %v3034 = vunpack.c.l.bf16 %v2906
        %v3035 = vunpack.c.l.bf16 %v2907
        %v3036 = vunpack.c.l.bf16 %v2908
        %v3037 = vunpack.c.l.bf16 %v2909
        %v3038 = vunpack.c.l.bf16 %v2910
        %v3039 = vunpack.c.l.bf16 %v2911
        %v3040 = vunpack.c.l.bf16 %v2912
        %v3041 = vunpack.c.l.bf16 %v2913
        %v3042 = vunpack.c.l.bf16 %v2914
        %v3043 = vunpack.c.l.bf16 %v2915
        %v3044 = vunpack.c.l.bf16 %v2916
        %v3045 = vunpack.c.l.bf16 %v2917
        %v3046 = vunpack.c.l.bf16 %v2918
        %v3047 = vunpack.c.l.bf16 %v2919
        %v3048 = vunpack.c.l.bf16 %v2920
        %v3049 = vunpack.c.l.bf16 %v2921
        %v3050 = vunpack.c.l.bf16 %v2922
        %v3051 = vunpack.c.l.bf16 %v2923
        %v3052 = vunpack.c.l.bf16 %v2924
        %v3053 = vunpack.c.l.bf16 %v2925
        %v3054 = vunpack.c.l.bf16 %v2926
        %v3055 = vunpack.c.l.bf16 %v2927
        %v3056 = vunpack.c.l.bf16 %v2928
        %v3057 = vunpack.c.l.bf16 %v2929
        %v3058 = vunpack.c.l.bf16 %v2930
        %v3059 = vunpack.c.l.bf16 %v2931
        %v3060 = vunpack.c.l.bf16 %v2932
        %v3061 = vunpack.c.l.bf16 %v2933
        %v3062 = vunpack.c.l.bf16 %v2934
        %v3063 = vunpack.c.l.bf16 %v2935
        %v3064 = vunpack.c.l.bf16 %v2936
        %v3065 = vunpack.c.l.bf16 %v2937
        %v3066 = vunpack.c.l.bf16 %v2938
        %v3067 = vunpack.c.l.bf16 %v2939
        %v3068 = vunpack.c.l.bf16 %v2940
        %v3069 = vunpack.c.l.bf16 %v2941
        %v3070 = vunpack.c.l.bf16 %v2942
        %v3071 = vunpack.c.l.bf16 %v2943
        %v3072 = vunpack.c.l.bf16 %v2944
        %v3073 = vunpack.c.l.bf16 %v2945
        %v3074 = vunpack.c.l.bf16 %v2946
        %v3075 = vunpack.c.l.bf16 %v2947
        %v3076 = vunpack.c.l.bf16 %v2948
        %v3077 = vunpack.c.l.bf16 %v2949
        %v3078 = vunpack.c.l.bf16 %v2950
        %v3079 = vunpack.c.l.bf16 %v2951
        %v3080 = vunpack.c.l.bf16 %v2952
        %v3081 = vunpack.c.l.bf16 %v2953
        %v3082 = vunpack.c.l.bf16 %v2954
        %v3083 = vunpack.c.l.bf16 %v2955
        %v3084 = vunpack.c.l.bf16 %v2956
        %v3085 = vunpack.c.l.bf16 %v2957
        %v3086 = vunpack.c.l.bf16 %v2958
        %v3087 = vunpack.c.l.bf16 %v2959
        %v3088 = vunpack.c.l.bf16 %v2960
        %v3089 = vunpack.c.l.bf16 %v2961
        %v3090 = vunpack.c.l.bf16 %v2962
        %v3091 = vunpack.c.l.bf16 %v2963
        %v3092 = vunpack.c.l.bf16 %v2964
        %v3093 = vunpack.c.l.bf16 %v2965
        %v3094 = vmul.f32 %v2966, %v694
        %v3095 = vmul.f32 %v2967, %v699
        %v3096 = vmul.f32 %v2968, %v704
        %v3097 = vmul.f32 %v2969, %v709
        %v3098 = vmul.f32 %v2970, %v714
        %v3099 = vmul.f32 %v2971, %v719
        %v3100 = vmul.f32 %v2972, %v724
        %v3101 = vmul.f32 %v2973, %v729
        %v3102 = vmul.f32 %v2974, %v734
        %v3103 = vmul.f32 %v2975, %v739
        %v3104 = vmul.f32 %v2976, %v744
        %v3105 = vmul.f32 %v2977, %v749
        %v3106 = vmul.f32 %v2978, %v754
        %v3107 = vmul.f32 %v2979, %v759
        %v3108 = vmul.f32 %v2980, %v764
        %v3109 = vmul.f32 %v2981, %v769
        %v3110 = vmul.f32 %v2982, %v694
        %v3111 = vmul.f32 %v2983, %v699
        %v3112 = vmul.f32 %v2984, %v704
        %v3113 = vmul.f32 %v2985, %v709
        %v3114 = vmul.f32 %v2986, %v714
        %v3115 = vmul.f32 %v2987, %v719
        %v3116 = vmul.f32 %v2988, %v724
        %v3117 = vmul.f32 %v2989, %v729
        %v3118 = vmul.f32 %v2990, %v734
        %v3119 = vmul.f32 %v2991, %v739
        %v3120 = vmul.f32 %v2992, %v744
        %v3121 = vmul.f32 %v2993, %v749
        %v3122 = vmul.f32 %v2994, %v754
        %v3123 = vmul.f32 %v2995, %v759
        %v3124 = vmul.f32 %v2996, %v764
        %v3125 = vmul.f32 %v2997, %v769
        %v3126 = vmul.f32 %v2998, %v694
        %v3127 = vmul.f32 %v2999, %v699
        %v3128 = vmul.f32 %v3000, %v704
        %v3129 = vmul.f32 %v3001, %v709
        %v3130 = vmul.f32 %v3002, %v714
        %v3131 = vmul.f32 %v3003, %v719
        %v3132 = vmul.f32 %v3004, %v724
        %v3133 = vmul.f32 %v3005, %v729
        %v3134 = vmul.f32 %v3006, %v734
        %v3135 = vmul.f32 %v3007, %v739
        %v3136 = vmul.f32 %v3008, %v744
        %v3137 = vmul.f32 %v3009, %v749
        %v3138 = vmul.f32 %v3010, %v754
        %v3139 = vmul.f32 %v3011, %v759
        %v3140 = vmul.f32 %v3012, %v764
        %v3141 = vmul.f32 %v3013, %v769
        %v3142 = vmul.f32 %v3014, %v694
        %v3143 = vmul.f32 %v3015, %v699
        %v3144 = vmul.f32 %v3016, %v704
        %v3145 = vmul.f32 %v3017, %v709
        %v3146 = vmul.f32 %v3018, %v714
        %v3147 = vmul.f32 %v3019, %v719
        %v3148 = vmul.f32 %v3020, %v724
        %v3149 = vmul.f32 %v3021, %v729
        %v3150 = vmul.f32 %v3022, %v734
        %v3151 = vmul.f32 %v3023, %v739
        %v3152 = vmul.f32 %v3024, %v744
        %v3153 = vmul.f32 %v3025, %v749
        %v3154 = vmul.f32 %v3026, %v754
        %v3155 = vmul.f32 %v3027, %v759
        %v3156 = vmul.f32 %v3028, %v764
        %v3157 = vmul.f32 %v3029, %v769
        %v3158 = vmul.f32 %v3030, %v694
        %v3159 = vmul.f32 %v3031, %v699
        %v3160 = vmul.f32 %v3032, %v704
        %v3161 = vmul.f32 %v3033, %v709
        %v3162 = vmul.f32 %v3034, %v714
        %v3163 = vmul.f32 %v3035, %v719
        %v3164 = vmul.f32 %v3036, %v724
        %v3165 = vmul.f32 %v3037, %v729
        %v3166 = vmul.f32 %v3038, %v734
        %v3167 = vmul.f32 %v3039, %v739
        %v3168 = vmul.f32 %v3040, %v744
        %v3169 = vmul.f32 %v3041, %v749
        %v3170 = vmul.f32 %v3042, %v754
        %v3171 = vmul.f32 %v3043, %v759
        %v3172 = vmul.f32 %v3044, %v764
        %v3173 = vmul.f32 %v3045, %v769
        %v3174 = vmul.f32 %v3046, %v694
        %v3175 = vmul.f32 %v3047, %v699
        %v3176 = vmul.f32 %v3048, %v704
        %v3177 = vmul.f32 %v3049, %v709
        %v3178 = vmul.f32 %v3050, %v714
        %v3179 = vmul.f32 %v3051, %v719
        %v3180 = vmul.f32 %v3052, %v724
        %v3181 = vmul.f32 %v3053, %v729
        %v3182 = vmul.f32 %v3054, %v734
        %v3183 = vmul.f32 %v3055, %v739
        %v3184 = vmul.f32 %v3056, %v744
        %v3185 = vmul.f32 %v3057, %v749
        %v3186 = vmul.f32 %v3058, %v754
        %v3187 = vmul.f32 %v3059, %v759
        %v3188 = vmul.f32 %v3060, %v764
        %v3189 = vmul.f32 %v3061, %v769
        %v3190 = vmul.f32 %v3062, %v694
        %v3191 = vmul.f32 %v3063, %v699
        %v3192 = vmul.f32 %v3064, %v704
        %v3193 = vmul.f32 %v3065, %v709
        %v3194 = vmul.f32 %v3066, %v714
        %v3195 = vmul.f32 %v3067, %v719
        %v3196 = vmul.f32 %v3068, %v724
        %v3197 = vmul.f32 %v3069, %v729
        %v3198 = vmul.f32 %v3070, %v734
        %v3199 = vmul.f32 %v3071, %v739
        %v3200 = vmul.f32 %v3072, %v744
        %v3201 = vmul.f32 %v3073, %v749
        %v3202 = vmul.f32 %v3074, %v754
        %v3203 = vmul.f32 %v3075, %v759
        %v3204 = vmul.f32 %v3076, %v764
        %v3205 = vmul.f32 %v3077, %v769
        %v3206 = vmul.f32 %v3078, %v694
        %v3207 = vmul.f32 %v3079, %v699
        %v3208 = vmul.f32 %v3080, %v704
        %v3209 = vmul.f32 %v3081, %v709
        %v3210 = vmul.f32 %v3082, %v714
        %v3211 = vmul.f32 %v3083, %v719
        %v3212 = vmul.f32 %v3084, %v724
        %v3213 = vmul.f32 %v3085, %v729
        %v3214 = vmul.f32 %v3086, %v734
        %v3215 = vmul.f32 %v3087, %v739
        %v3216 = vmul.f32 %v3088, %v744
        %v3217 = vmul.f32 %v3089, %v749
        %v3218 = vmul.f32 %v3090, %v754
        %v3219 = vmul.f32 %v3091, %v759
        %v3220 = vmul.f32 %v3092, %v764
        %v3221 = vmul.f32 %v3093, %v769
        %v3222 = vadd.f32 %v3094, %v3095
        %v3223 = vadd.f32 %v3222, %v3096
        %v3224 = vadd.f32 %v3223, %v3097
        %v3225 = vadd.f32 %v3224, %v3098
        %v3226 = vadd.f32 %v3225, %v3099
        %v3227 = vadd.f32 %v3226, %v3100
        %v3228 = vadd.f32 %v3227, %v3101
        %v3229 = vadd.f32 %v3228, %v3102
        %v3230 = vadd.f32 %v3229, %v3103
        %v3231 = vadd.f32 %v3230, %v3104
        %v3232 = vadd.f32 %v3231, %v3105
        %v3233 = vadd.f32 %v3232, %v3106
        %v3234 = vadd.f32 %v3233, %v3107
        %v3235 = vadd.f32 %v3234, %v3108
        %v3236 = vadd.f32 %v3235, %v3109
        %v3237 = vrot.slane %v3236, 4
        %v3238 = vadd.f32 %v3236, %v3237
        %v3239 = vrot.slane %v3238, 2
        %v3240 = vadd.f32 %v3238, %v3239
        %v3241 = vrot.slane %v3240, 1
        %v3242 = vadd.f32 %v3240, %v3241
        %v3243 = vadd.f32 %v3110, %v3111
        %v3244 = vadd.f32 %v3243, %v3112
        %v3245 = vadd.f32 %v3244, %v3113
        %v3246 = vadd.f32 %v3245, %v3114
        %v3247 = vadd.f32 %v3246, %v3115
        %v3248 = vadd.f32 %v3247, %v3116
        %v3249 = vadd.f32 %v3248, %v3117
        %v3250 = vadd.f32 %v3249, %v3118
        %v3251 = vadd.f32 %v3250, %v3119
        %v3252 = vadd.f32 %v3251, %v3120
        %v3253 = vadd.f32 %v3252, %v3121
        %v3254 = vadd.f32 %v3253, %v3122
        %v3255 = vadd.f32 %v3254, %v3123
        %v3256 = vadd.f32 %v3255, %v3124
        %v3257 = vadd.f32 %v3256, %v3125
        %v3258 = vrot.slane %v3257, 4
        %v3259 = vadd.f32 %v3257, %v3258
        %v3260 = vrot.slane %v3259, 2
        %v3261 = vadd.f32 %v3259, %v3260
        %v3262 = vrot.slane %v3261, 1
        %v3263 = vadd.f32 %v3261, %v3262
        %v3264 = vadd.f32 %v3126, %v3127
        %v3265 = vadd.f32 %v3264, %v3128
        %v3266 = vadd.f32 %v3265, %v3129
        %v3267 = vadd.f32 %v3266, %v3130
        %v3268 = vadd.f32 %v3267, %v3131
        %v3269 = vadd.f32 %v3268, %v3132
        %v3270 = vadd.f32 %v3269, %v3133
        %v3271 = vadd.f32 %v3270, %v3134
        %v3272 = vadd.f32 %v3271, %v3135
        %v3273 = vadd.f32 %v3272, %v3136
        %v3274 = vadd.f32 %v3273, %v3137
        %v3275 = vadd.f32 %v3274, %v3138
        %v3276 = vadd.f32 %v3275, %v3139
        %v3277 = vadd.f32 %v3276, %v3140
        %v3278 = vadd.f32 %v3277, %v3141
        %v3279 = vrot.slane %v3278, 4
        %v3280 = vadd.f32 %v3278, %v3279
        %v3281 = vrot.slane %v3280, 2
        %v3282 = vadd.f32 %v3280, %v3281
        %v3283 = vrot.slane %v3282, 1
        %v3284 = vadd.f32 %v3282, %v3283
        %v3285 = vadd.f32 %v3142, %v3143
        %v3286 = vadd.f32 %v3285, %v3144
        %v3287 = vadd.f32 %v3286, %v3145
        %v3288 = vadd.f32 %v3287, %v3146
        %v3289 = vadd.f32 %v3288, %v3147
        %v3290 = vadd.f32 %v3289, %v3148
        %v3291 = vadd.f32 %v3290, %v3149
        %v3292 = vadd.f32 %v3291, %v3150
        %v3293 = vadd.f32 %v3292, %v3151
        %v3294 = vadd.f32 %v3293, %v3152
        %v3295 = vadd.f32 %v3294, %v3153
        %v3296 = vadd.f32 %v3295, %v3154
        %v3297 = vadd.f32 %v3296, %v3155
        %v3298 = vadd.f32 %v3297, %v3156
        %v3299 = vadd.f32 %v3298, %v3157
        %v3300 = vrot.slane %v3299, 4
        %v3301 = vadd.f32 %v3299, %v3300
        %v3302 = vrot.slane %v3301, 2
        %v3303 = vadd.f32 %v3301, %v3302
        %v3304 = vrot.slane %v3303, 1
        %v3305 = vadd.f32 %v3303, %v3304
        %v3306 = vadd.f32 %v3158, %v3159
        %v3307 = vadd.f32 %v3306, %v3160
        %v3308 = vadd.f32 %v3307, %v3161
        %v3309 = vadd.f32 %v3308, %v3162
        %v3310 = vadd.f32 %v3309, %v3163
        %v3311 = vadd.f32 %v3310, %v3164
        %v3312 = vadd.f32 %v3311, %v3165
        %v3313 = vadd.f32 %v3312, %v3166
        %v3314 = vadd.f32 %v3313, %v3167
        %v3315 = vadd.f32 %v3314, %v3168
        %v3316 = vadd.f32 %v3315, %v3169
        %v3317 = vadd.f32 %v3316, %v3170
        %v3318 = vadd.f32 %v3317, %v3171
        %v3319 = vadd.f32 %v3318, %v3172
        %v3320 = vadd.f32 %v3319, %v3173
        %v3321 = vrot.slane %v3320, 4
        %v3322 = vadd.f32 %v3320, %v3321
        %v3323 = vrot.slane %v3322, 2
        %v3324 = vadd.f32 %v3322, %v3323
        %v3325 = vrot.slane %v3324, 1
        %v3326 = vadd.f32 %v3324, %v3325
        %v3327 = vadd.f32 %v3174, %v3175
        %v3328 = vadd.f32 %v3327, %v3176
        %v3329 = vadd.f32 %v3328, %v3177
        %v3330 = vadd.f32 %v3329, %v3178
        %v3331 = vadd.f32 %v3330, %v3179
        %v3332 = vadd.f32 %v3331, %v3180
        %v3333 = vadd.f32 %v3332, %v3181
        %v3334 = vadd.f32 %v3333, %v3182
        %v3335 = vadd.f32 %v3334, %v3183
        %v3336 = vadd.f32 %v3335, %v3184
        %v3337 = vadd.f32 %v3336, %v3185
        %v3338 = vadd.f32 %v3337, %v3186
        %v3339 = vadd.f32 %v3338, %v3187
        %v3340 = vadd.f32 %v3339, %v3188
        %v3341 = vadd.f32 %v3340, %v3189
        %v3342 = vrot.slane %v3341, 4
        %v3343 = vadd.f32 %v3341, %v3342
        %v3344 = vrot.slane %v3343, 2
        %v3345 = vadd.f32 %v3343, %v3344
        %v3346 = vrot.slane %v3345, 1
        %v3347 = vadd.f32 %v3345, %v3346
        %v3348 = vadd.f32 %v3190, %v3191
        %v3349 = vadd.f32 %v3348, %v3192
        %v3350 = vadd.f32 %v3349, %v3193
        %v3351 = vadd.f32 %v3350, %v3194
        %v3352 = vadd.f32 %v3351, %v3195
        %v3353 = vadd.f32 %v3352, %v3196
        %v3354 = vadd.f32 %v3353, %v3197
        %v3355 = vadd.f32 %v3354, %v3198
        %v3356 = vadd.f32 %v3355, %v3199
        %v3357 = vadd.f32 %v3356, %v3200
        %v3358 = vadd.f32 %v3357, %v3201
        %v3359 = vadd.f32 %v3358, %v3202
        %v3360 = vadd.f32 %v3359, %v3203
        %v3361 = vadd.f32 %v3360, %v3204
        %v3362 = vadd.f32 %v3361, %v3205
        %v3363 = vrot.slane %v3362, 4
        %v3364 = vadd.f32 %v3362, %v3363
        %v3365 = vrot.slane %v3364, 2
        %v3366 = vadd.f32 %v3364, %v3365
        %v3367 = vrot.slane %v3366, 1
        %v3368 = vadd.f32 %v3366, %v3367
        %v3369 = vadd.f32 %v3206, %v3207
        %v3370 = vadd.f32 %v3369, %v3208
        %v3371 = vadd.f32 %v3370, %v3209
        %v3372 = vadd.f32 %v3371, %v3210
        %v3373 = vadd.f32 %v3372, %v3211
        %v3374 = vadd.f32 %v3373, %v3212
        %v3375 = vadd.f32 %v3374, %v3213
        %v3376 = vadd.f32 %v3375, %v3214
        %v3377 = vadd.f32 %v3376, %v3215
        %v3378 = vadd.f32 %v3377, %v3216
        %v3379 = vadd.f32 %v3378, %v3217
        %v3380 = vadd.f32 %v3379, %v3218
        %v3381 = vadd.f32 %v3380, %v3219
        %v3382 = vadd.f32 %v3381, %v3220
        %v3383 = vadd.f32 %v3382, %v3221
        %v3384 = vrot.slane %v3383, 4
        %v3385 = vadd.f32 %v3383, %v3384
        %v3386 = vrot.slane %v3385, 2
        %v3387 = vadd.f32 %v3385, %v3386
        %v3388 = vrot.slane %v3387, 1
        %v3389 = vadd.f32 %v3387, %v3388
        %v3390 = vadd.f32 %v3242, %v1067
        %v3391 = vadd.f32 %v3263, %v1067
        %v3392 = vadd.f32 %v3284, %v1067
        %v3393 = vadd.f32 %v3305, %v1067
        %v3394 = vadd.f32 %v3326, %v1067
        %v3395 = vadd.f32 %v3347, %v1067
        %v3396 = vadd.f32 %v3368, %v1067
        %v3397 = vadd.f32 %v3389, %v1067
        %v3406 = vsel %vm1084, %v3391, %v3390
        %v3407 = vsel %vm1086, %v3392, %v3406
        %v3408 = vsel %vm1088, %v3393, %v3407
        %v3409 = vsel %vm1090, %v3394, %v3408
        %v3410 = vsel %vm1092, %v3395, %v3409
        %v3411 = vsel %vm1094, %v3396, %v3410
        %v3412 = vsel %vm1096, %v3397, %v3411
        %s3414 = scalar_lea.vmem [#allocation2], 32
        %3415 = vst [vmem:[%s3414] sm:$0xff] %v3412
        %s3416 = scalar_lea.vmem %s354, 20 [#allocation4]
        %v3417 = vld [vmem:[%s3416] sm:$0xf]
        %v3418 = vld [vmem:[%s3416 + $0x18] sm:$0xf]
        %v3419 = vld [vmem:[%s3416 + $0x30] sm:$0xf]
        %v3420 = vld [vmem:[%s3416 + $0x48] sm:$0xf]
        %v3421 = vld [vmem:[%s3416 + $0x60] sm:$0xf]
        %v3422 = vld [vmem:[%s3416 + $0x78] sm:$0xf]
        %v3423 = vld [vmem:[%s3416 + $0x90] sm:$0xf]
        %v3424 = vld [vmem:[%s3416 + $0xa8] sm:$0xf]
        %v3425 = vld [vmem:[%s3416 + $0xc0] sm:$0xf]
        %v3426 = vld [vmem:[%s3416 + $0xd8] sm:$0xf]
        %v3427 = vld [vmem:[%s3416 + $0xf0] sm:$0xf]
        %v3428 = vld [vmem:[%s3416 + $0x108] sm:$0xf]
        %v3429 = vld [vmem:[%s3416 + $0x120] sm:$0xf]
        %v3430 = vld [vmem:[%s3416 + $0x138] sm:$0xf]
        %v3431 = vld [vmem:[%s3416 + $0x150] sm:$0xf]
        %v3432 = vld [vmem:[%s3416 + $0x168] sm:$0xf]
        %v3433 = vld [vmem:[%s3416 + $0x180] sm:$0xf]
        %v3434 = vld [vmem:[%s3416 + $0x198] sm:$0xf]
        %v3435 = vld [vmem:[%s3416 + $0x1b0] sm:$0xf]
        %v3436 = vld [vmem:[%s3416 + $0x1c8] sm:$0xf]
        %v3437 = vld [vmem:[%s3416 + $0x1e0] sm:$0xf]
        %v3438 = vld [vmem:[%s3416 + $0x1f8] sm:$0xf]
        %v3439 = vld [vmem:[%s3416 + $0x210] sm:$0xf]
        %v3440 = vld [vmem:[%s3416 + $0x228] sm:$0xf]
        %v3441 = vld [vmem:[%s3416 + $0x240] sm:$0xf]
        %v3442 = vld [vmem:[%s3416 + $0x258] sm:$0xf]
        %v3443 = vld [vmem:[%s3416 + $0x270] sm:$0xf]
        %v3444 = vld [vmem:[%s3416 + $0x288] sm:$0xf]
        %v3445 = vld [vmem:[%s3416 + $0x2a0] sm:$0xf]
        %v3446 = vld [vmem:[%s3416 + $0x2b8] sm:$0xf]
        %v3447 = vld [vmem:[%s3416 + $0x2d0] sm:$0xf]
        %v3448 = vld [vmem:[%s3416 + $0x2e8] sm:$0xf]
        %v3449 = vld [vmem:[%s3416 + $0x300] sm:$0xf]
        %v3450 = vld [vmem:[%s3416 + $0x318] sm:$0xf]
        %v3451 = vld [vmem:[%s3416 + $0x330] sm:$0xf]
        %v3452 = vld [vmem:[%s3416 + $0x348] sm:$0xf]
        %v3453 = vld [vmem:[%s3416 + $0x360] sm:$0xf]
        %v3454 = vld [vmem:[%s3416 + $0x378] sm:$0xf]
        %v3455 = vld [vmem:[%s3416 + $0x390] sm:$0xf]
        %v3456 = vld [vmem:[%s3416 + $0x3a8] sm:$0xf]
        %v3457 = vld [vmem:[%s3416 + $0x3c0] sm:$0xf]
        %v3458 = vld [vmem:[%s3416 + $0x3d8] sm:$0xf]
        %v3459 = vld [vmem:[%s3416 + $0x3f0] sm:$0xf]
        %v3460 = vld [vmem:[%s3416 + $0x408] sm:$0xf]
        %v3461 = vld [vmem:[%s3416 + $0x420] sm:$0xf]
        %v3462 = vld [vmem:[%s3416 + $0x438] sm:$0xf]
        %v3463 = vld [vmem:[%s3416 + $0x450] sm:$0xf]
        %v3464 = vld [vmem:[%s3416 + $0x468] sm:$0xf]
        %v3465 = vld [vmem:[%s3416 + $0x480] sm:$0xf]
        %v3466 = vld [vmem:[%s3416 + $0x498] sm:$0xf]
        %v3467 = vld [vmem:[%s3416 + $0x4b0] sm:$0xf]
        %v3468 = vld [vmem:[%s3416 + $0x4c8] sm:$0xf]
        %v3469 = vld [vmem:[%s3416 + $0x4e0] sm:$0xf]
        %v3470 = vld [vmem:[%s3416 + $0x4f8] sm:$0xf]
        %v3471 = vld [vmem:[%s3416 + $0x510] sm:$0xf]
        %v3472 = vld [vmem:[%s3416 + $0x528] sm:$0xf]
        %v3473 = vld [vmem:[%s3416 + $0x540] sm:$0xf]
        %v3474 = vld [vmem:[%s3416 + $0x558] sm:$0xf]
        %v3475 = vld [vmem:[%s3416 + $0x570] sm:$0xf]
        %v3476 = vld [vmem:[%s3416 + $0x588] sm:$0xf]
        %v3477 = vld [vmem:[%s3416 + $0x5a0] sm:$0xf]
        %v3478 = vld [vmem:[%s3416 + $0x5b8] sm:$0xf]
        %v3479 = vld [vmem:[%s3416 + $0x5d0] sm:$0xf]
        %v3480 = vld [vmem:[%s3416 + $0x5e8] sm:$0xf]
        %v3481 = vld [vmem:[%s3416 + $0x600] sm:$0xf]
        %v3482 = vld [vmem:[%s3416 + $0x618] sm:$0xf]
        %v3483 = vld [vmem:[%s3416 + $0x630] sm:$0xf]
        %v3484 = vld [vmem:[%s3416 + $0x648] sm:$0xf]
        %v3485 = vld [vmem:[%s3416 + $0x660] sm:$0xf]
        %v3486 = vld [vmem:[%s3416 + $0x678] sm:$0xf]
        %v3487 = vld [vmem:[%s3416 + $0x690] sm:$0xf]
        %v3488 = vld [vmem:[%s3416 + $0x6a8] sm:$0xf]
        %v3489 = vld [vmem:[%s3416 + $0x6c0] sm:$0xf]
        %v3490 = vld [vmem:[%s3416 + $0x6d8] sm:$0xf]
        %v3491 = vld [vmem:[%s3416 + $0x6f0] sm:$0xf]
        %v3492 = vld [vmem:[%s3416 + $0x708] sm:$0xf]
        %v3493 = vld [vmem:[%s3416 + $0x720] sm:$0xf]
        %v3494 = vld [vmem:[%s3416 + $0x738] sm:$0xf]
        %v3495 = vld [vmem:[%s3416 + $0x750] sm:$0xf]
        %v3496 = vld [vmem:[%s3416 + $0x768] sm:$0xf]
        %v3497 = vld [vmem:[%s3416 + $0x780] sm:$0xf]
        %v3498 = vld [vmem:[%s3416 + $0x798] sm:$0xf]
        %v3499 = vld [vmem:[%s3416 + $0x7b0] sm:$0xf]
        %v3500 = vld [vmem:[%s3416 + $0x7c8] sm:$0xf]
        %v3501 = vld [vmem:[%s3416 + $0x7e0] sm:$0xf]
        %v3502 = vld [vmem:[%s3416 + $0x7f8] sm:$0xf]
        %v3503 = vld [vmem:[%s3416 + $0x810] sm:$0xf]
        %v3504 = vld [vmem:[%s3416 + $0x828] sm:$0xf]
        %v3505 = vld [vmem:[%s3416 + $0x840] sm:$0xf]
        %v3506 = vld [vmem:[%s3416 + $0x858] sm:$0xf]
        %v3507 = vld [vmem:[%s3416 + $0x870] sm:$0xf]
        %v3508 = vld [vmem:[%s3416 + $0x888] sm:$0xf]
        %v3509 = vld [vmem:[%s3416 + $0x8a0] sm:$0xf]
        %v3510 = vld [vmem:[%s3416 + $0x8b8] sm:$0xf]
        %v3511 = vld [vmem:[%s3416 + $0x8d0] sm:$0xf]
        %v3512 = vld [vmem:[%s3416 + $0x8e8] sm:$0xf]
        %v3513 = vld [vmem:[%s3416 + $0x900] sm:$0xf]
        %v3514 = vld [vmem:[%s3416 + $0x918] sm:$0xf]
        %v3515 = vld [vmem:[%s3416 + $0x930] sm:$0xf]
        %v3516 = vld [vmem:[%s3416 + $0x948] sm:$0xf]
        %v3517 = vld [vmem:[%s3416 + $0x960] sm:$0xf]
        %v3518 = vld [vmem:[%s3416 + $0x978] sm:$0xf]
        %v3519 = vld [vmem:[%s3416 + $0x990] sm:$0xf]
        %v3520 = vld [vmem:[%s3416 + $0x9a8] sm:$0xf]
        %v3521 = vld [vmem:[%s3416 + $0x9c0] sm:$0xf]
        %v3522 = vld [vmem:[%s3416 + $0x9d8] sm:$0xf]
        %v3523 = vld [vmem:[%s3416 + $0x9f0] sm:$0xf]
        %v3524 = vld [vmem:[%s3416 + $0xa08] sm:$0xf]
        %v3525 = vld [vmem:[%s3416 + $0xa20] sm:$0xf]
        %v3526 = vld [vmem:[%s3416 + $0xa38] sm:$0xf]
        %v3527 = vld [vmem:[%s3416 + $0xa50] sm:$0xf]
        %v3528 = vld [vmem:[%s3416 + $0xa68] sm:$0xf]
        %v3529 = vld [vmem:[%s3416 + $0xa80] sm:$0xf]
        %v3530 = vld [vmem:[%s3416 + $0xa98] sm:$0xf]
        %v3531 = vld [vmem:[%s3416 + $0xab0] sm:$0xf]
        %v3532 = vld [vmem:[%s3416 + $0xac8] sm:$0xf]
        %v3533 = vld [vmem:[%s3416 + $0xae0] sm:$0xf]
        %v3534 = vld [vmem:[%s3416 + $0xaf8] sm:$0xf]
        %v3535 = vld [vmem:[%s3416 + $0xb10] sm:$0xf]
        %v3536 = vld [vmem:[%s3416 + $0xb28] sm:$0xf]
        %v3537 = vld [vmem:[%s3416 + $0xb40] sm:$0xf]
        %v3538 = vld [vmem:[%s3416 + $0xb58] sm:$0xf]
        %v3539 = vld [vmem:[%s3416 + $0xb70] sm:$0xf]
        %v3540 = vld [vmem:[%s3416 + $0xb88] sm:$0xf]
        %v3541 = vld [vmem:[%s3416 + $0xba0] sm:$0xf]
        %v3542 = vld [vmem:[%s3416 + $0xbb8] sm:$0xf]
        %v3543 = vld [vmem:[%s3416 + $0xbd0] sm:$0xf]
        %v3544 = vld [vmem:[%s3416 + $0xbe8] sm:$0xf]
        %v3545 = vunpack.c.l.bf16 %v3417
        %v3546 = vunpack.c.l.bf16 %v3418
        %v3547 = vunpack.c.l.bf16 %v3419
        %v3548 = vunpack.c.l.bf16 %v3420
        %v3549 = vunpack.c.l.bf16 %v3421
        %v3550 = vunpack.c.l.bf16 %v3422
        %v3551 = vunpack.c.l.bf16 %v3423
        %v3552 = vunpack.c.l.bf16 %v3424
        %v3553 = vunpack.c.l.bf16 %v3425
        %v3554 = vunpack.c.l.bf16 %v3426
        %v3555 = vunpack.c.l.bf16 %v3427
        %v3556 = vunpack.c.l.bf16 %v3428
        %v3557 = vunpack.c.l.bf16 %v3429
        %v3558 = vunpack.c.l.bf16 %v3430
        %v3559 = vunpack.c.l.bf16 %v3431
        %v3560 = vunpack.c.l.bf16 %v3432
        %v3561 = vunpack.c.l.bf16 %v3433
        %v3562 = vunpack.c.l.bf16 %v3434
        %v3563 = vunpack.c.l.bf16 %v3435
        %v3564 = vunpack.c.l.bf16 %v3436
        %v3565 = vunpack.c.l.bf16 %v3437
        %v3566 = vunpack.c.l.bf16 %v3438
        %v3567 = vunpack.c.l.bf16 %v3439
        %v3568 = vunpack.c.l.bf16 %v3440
        %v3569 = vunpack.c.l.bf16 %v3441
        %v3570 = vunpack.c.l.bf16 %v3442
        %v3571 = vunpack.c.l.bf16 %v3443
        %v3572 = vunpack.c.l.bf16 %v3444
        %v3573 = vunpack.c.l.bf16 %v3445
        %v3574 = vunpack.c.l.bf16 %v3446
        %v3575 = vunpack.c.l.bf16 %v3447
        %v3576 = vunpack.c.l.bf16 %v3448
        %v3577 = vunpack.c.l.bf16 %v3449
        %v3578 = vunpack.c.l.bf16 %v3450
        %v3579 = vunpack.c.l.bf16 %v3451
        %v3580 = vunpack.c.l.bf16 %v3452
        %v3581 = vunpack.c.l.bf16 %v3453
        %v3582 = vunpack.c.l.bf16 %v3454
        %v3583 = vunpack.c.l.bf16 %v3455
        %v3584 = vunpack.c.l.bf16 %v3456
        %v3585 = vunpack.c.l.bf16 %v3457
        %v3586 = vunpack.c.l.bf16 %v3458
        %v3587 = vunpack.c.l.bf16 %v3459
        %v3588 = vunpack.c.l.bf16 %v3460
        %v3589 = vunpack.c.l.bf16 %v3461
        %v3590 = vunpack.c.l.bf16 %v3462
        %v3591 = vunpack.c.l.bf16 %v3463
        %v3592 = vunpack.c.l.bf16 %v3464
        %v3593 = vunpack.c.l.bf16 %v3465
        %v3594 = vunpack.c.l.bf16 %v3466
        %v3595 = vunpack.c.l.bf16 %v3467
        %v3596 = vunpack.c.l.bf16 %v3468
        %v3597 = vunpack.c.l.bf16 %v3469
        %v3598 = vunpack.c.l.bf16 %v3470
        %v3599 = vunpack.c.l.bf16 %v3471
        %v3600 = vunpack.c.l.bf16 %v3472
        %v3601 = vunpack.c.l.bf16 %v3473
        %v3602 = vunpack.c.l.bf16 %v3474
        %v3603 = vunpack.c.l.bf16 %v3475
        %v3604 = vunpack.c.l.bf16 %v3476
        %v3605 = vunpack.c.l.bf16 %v3477
        %v3606 = vunpack.c.l.bf16 %v3478
        %v3607 = vunpack.c.l.bf16 %v3479
        %v3608 = vunpack.c.l.bf16 %v3480
        %v3609 = vunpack.c.l.bf16 %v3481
        %v3610 = vunpack.c.l.bf16 %v3482
        %v3611 = vunpack.c.l.bf16 %v3483
        %v3612 = vunpack.c.l.bf16 %v3484
        %v3613 = vunpack.c.l.bf16 %v3485
        %v3614 = vunpack.c.l.bf16 %v3486
        %v3615 = vunpack.c.l.bf16 %v3487
        %v3616 = vunpack.c.l.bf16 %v3488
        %v3617 = vunpack.c.l.bf16 %v3489
        %v3618 = vunpack.c.l.bf16 %v3490
        %v3619 = vunpack.c.l.bf16 %v3491
        %v3620 = vunpack.c.l.bf16 %v3492
        %v3621 = vunpack.c.l.bf16 %v3493
        %v3622 = vunpack.c.l.bf16 %v3494
        %v3623 = vunpack.c.l.bf16 %v3495
        %v3624 = vunpack.c.l.bf16 %v3496
        %v3625 = vunpack.c.l.bf16 %v3497
        %v3626 = vunpack.c.l.bf16 %v3498
        %v3627 = vunpack.c.l.bf16 %v3499
        %v3628 = vunpack.c.l.bf16 %v3500
        %v3629 = vunpack.c.l.bf16 %v3501
        %v3630 = vunpack.c.l.bf16 %v3502
        %v3631 = vunpack.c.l.bf16 %v3503
        %v3632 = vunpack.c.l.bf16 %v3504
        %v3633 = vunpack.c.l.bf16 %v3505
        %v3634 = vunpack.c.l.bf16 %v3506
        %v3635 = vunpack.c.l.bf16 %v3507
        %v3636 = vunpack.c.l.bf16 %v3508
        %v3637 = vunpack.c.l.bf16 %v3509
        %v3638 = vunpack.c.l.bf16 %v3510
        %v3639 = vunpack.c.l.bf16 %v3511
        %v3640 = vunpack.c.l.bf16 %v3512
        %v3641 = vunpack.c.l.bf16 %v3513
        %v3642 = vunpack.c.l.bf16 %v3514
        %v3643 = vunpack.c.l.bf16 %v3515
        %v3644 = vunpack.c.l.bf16 %v3516
        %v3645 = vunpack.c.l.bf16 %v3517
        %v3646 = vunpack.c.l.bf16 %v3518
        %v3647 = vunpack.c.l.bf16 %v3519
        %v3648 = vunpack.c.l.bf16 %v3520
        %v3649 = vunpack.c.l.bf16 %v3521
        %v3650 = vunpack.c.l.bf16 %v3522
        %v3651 = vunpack.c.l.bf16 %v3523
        %v3652 = vunpack.c.l.bf16 %v3524
        %v3653 = vunpack.c.l.bf16 %v3525
        %v3654 = vunpack.c.l.bf16 %v3526
        %v3655 = vunpack.c.l.bf16 %v3527
        %v3656 = vunpack.c.l.bf16 %v3528
        %v3657 = vunpack.c.l.bf16 %v3529
        %v3658 = vunpack.c.l.bf16 %v3530
        %v3659 = vunpack.c.l.bf16 %v3531
        %v3660 = vunpack.c.l.bf16 %v3532
        %v3661 = vunpack.c.l.bf16 %v3533
        %v3662 = vunpack.c.l.bf16 %v3534
        %v3663 = vunpack.c.l.bf16 %v3535
        %v3664 = vunpack.c.l.bf16 %v3536
        %v3665 = vunpack.c.l.bf16 %v3537
        %v3666 = vunpack.c.l.bf16 %v3538
        %v3667 = vunpack.c.l.bf16 %v3539
        %v3668 = vunpack.c.l.bf16 %v3540
        %v3669 = vunpack.c.l.bf16 %v3541
        %v3670 = vunpack.c.l.bf16 %v3542
        %v3671 = vunpack.c.l.bf16 %v3543
        %v3672 = vunpack.c.l.bf16 %v3544
        %v3673 = vmul.f32 %v3545, %v694
        %v3674 = vmul.f32 %v3546, %v699
        %v3675 = vmul.f32 %v3547, %v704
        %v3676 = vmul.f32 %v3548, %v709
        %v3677 = vmul.f32 %v3549, %v714
        %v3678 = vmul.f32 %v3550, %v719
        %v3679 = vmul.f32 %v3551, %v724
        %v3680 = vmul.f32 %v3552, %v729
        %v3681 = vmul.f32 %v3553, %v734
        %v3682 = vmul.f32 %v3554, %v739
        %v3683 = vmul.f32 %v3555, %v744
        %v3684 = vmul.f32 %v3556, %v749
        %v3685 = vmul.f32 %v3557, %v754
        %v3686 = vmul.f32 %v3558, %v759
        %v3687 = vmul.f32 %v3559, %v764
        %v3688 = vmul.f32 %v3560, %v769
        %v3689 = vmul.f32 %v3561, %v694
        %v3690 = vmul.f32 %v3562, %v699
        %v3691 = vmul.f32 %v3563, %v704
        %v3692 = vmul.f32 %v3564, %v709
        %v3693 = vmul.f32 %v3565, %v714
        %v3694 = vmul.f32 %v3566, %v719
        %v3695 = vmul.f32 %v3567, %v724
        %v3696 = vmul.f32 %v3568, %v729
        %v3697 = vmul.f32 %v3569, %v734
        %v3698 = vmul.f32 %v3570, %v739
        %v3699 = vmul.f32 %v3571, %v744
        %v3700 = vmul.f32 %v3572, %v749
        %v3701 = vmul.f32 %v3573, %v754
        %v3702 = vmul.f32 %v3574, %v759
        %v3703 = vmul.f32 %v3575, %v764
        %v3704 = vmul.f32 %v3576, %v769
        %v3705 = vmul.f32 %v3577, %v694
        %v3706 = vmul.f32 %v3578, %v699
        %v3707 = vmul.f32 %v3579, %v704
        %v3708 = vmul.f32 %v3580, %v709
        %v3709 = vmul.f32 %v3581, %v714
        %v3710 = vmul.f32 %v3582, %v719
        %v3711 = vmul.f32 %v3583, %v724
        %v3712 = vmul.f32 %v3584, %v729
        %v3713 = vmul.f32 %v3585, %v734
        %v3714 = vmul.f32 %v3586, %v739
        %v3715 = vmul.f32 %v3587, %v744
        %v3716 = vmul.f32 %v3588, %v749
        %v3717 = vmul.f32 %v3589, %v754
        %v3718 = vmul.f32 %v3590, %v759
        %v3719 = vmul.f32 %v3591, %v764
        %v3720 = vmul.f32 %v3592, %v769
        %v3721 = vmul.f32 %v3593, %v694
        %v3722 = vmul.f32 %v3594, %v699
        %v3723 = vmul.f32 %v3595, %v704
        %v3724 = vmul.f32 %v3596, %v709
        %v3725 = vmul.f32 %v3597, %v714
        %v3726 = vmul.f32 %v3598, %v719
        %v3727 = vmul.f32 %v3599, %v724
        %v3728 = vmul.f32 %v3600, %v729
        %v3729 = vmul.f32 %v3601, %v734
        %v3730 = vmul.f32 %v3602, %v739
        %v3731 = vmul.f32 %v3603, %v744
        %v3732 = vmul.f32 %v3604, %v749
        %v3733 = vmul.f32 %v3605, %v754
        %v3734 = vmul.f32 %v3606, %v759
        %v3735 = vmul.f32 %v3607, %v764
        %v3736 = vmul.f32 %v3608, %v769
        %v3737 = vmul.f32 %v3609, %v694
        %v3738 = vmul.f32 %v3610, %v699
        %v3739 = vmul.f32 %v3611, %v704
        %v3740 = vmul.f32 %v3612, %v709
        %v3741 = vmul.f32 %v3613, %v714
        %v3742 = vmul.f32 %v3614, %v719
        %v3743 = vmul.f32 %v3615, %v724
        %v3744 = vmul.f32 %v3616, %v729
        %v3745 = vmul.f32 %v3617, %v734
        %v3746 = vmul.f32 %v3618, %v739
        %v3747 = vmul.f32 %v3619, %v744
        %v3748 = vmul.f32 %v3620, %v749
        %v3749 = vmul.f32 %v3621, %v754
        %v3750 = vmul.f32 %v3622, %v759
        %v3751 = vmul.f32 %v3623, %v764
        %v3752 = vmul.f32 %v3624, %v769
        %v3753 = vmul.f32 %v3625, %v694
        %v3754 = vmul.f32 %v3626, %v699
        %v3755 = vmul.f32 %v3627, %v704
        %v3756 = vmul.f32 %v3628, %v709
        %v3757 = vmul.f32 %v3629, %v714
        %v3758 = vmul.f32 %v3630, %v719
        %v3759 = vmul.f32 %v3631, %v724
        %v3760 = vmul.f32 %v3632, %v729
        %v3761 = vmul.f32 %v3633, %v734
        %v3762 = vmul.f32 %v3634, %v739
        %v3763 = vmul.f32 %v3635, %v744
        %v3764 = vmul.f32 %v3636, %v749
        %v3765 = vmul.f32 %v3637, %v754
        %v3766 = vmul.f32 %v3638, %v759
        %v3767 = vmul.f32 %v3639, %v764
        %v3768 = vmul.f32 %v3640, %v769
        %v3769 = vmul.f32 %v3641, %v694
        %v3770 = vmul.f32 %v3642, %v699
        %v3771 = vmul.f32 %v3643, %v704
        %v3772 = vmul.f32 %v3644, %v709
        %v3773 = vmul.f32 %v3645, %v714
        %v3774 = vmul.f32 %v3646, %v719
        %v3775 = vmul.f32 %v3647, %v724
        %v3776 = vmul.f32 %v3648, %v729
        %v3777 = vmul.f32 %v3649, %v734
        %v3778 = vmul.f32 %v3650, %v739
        %v3779 = vmul.f32 %v3651, %v744
        %v3780 = vmul.f32 %v3652, %v749
        %v3781 = vmul.f32 %v3653, %v754
        %v3782 = vmul.f32 %v3654, %v759
        %v3783 = vmul.f32 %v3655, %v764
        %v3784 = vmul.f32 %v3656, %v769
        %v3785 = vmul.f32 %v3657, %v694
        %v3786 = vmul.f32 %v3658, %v699
        %v3787 = vmul.f32 %v3659, %v704
        %v3788 = vmul.f32 %v3660, %v709
        %v3789 = vmul.f32 %v3661, %v714
        %v3790 = vmul.f32 %v3662, %v719
        %v3791 = vmul.f32 %v3663, %v724
        %v3792 = vmul.f32 %v3664, %v729
        %v3793 = vmul.f32 %v3665, %v734
        %v3794 = vmul.f32 %v3666, %v739
        %v3795 = vmul.f32 %v3667, %v744
        %v3796 = vmul.f32 %v3668, %v749
        %v3797 = vmul.f32 %v3669, %v754
        %v3798 = vmul.f32 %v3670, %v759
        %v3799 = vmul.f32 %v3671, %v764
        %v3800 = vmul.f32 %v3672, %v769
        %v3801 = vadd.f32 %v3673, %v3674
        %v3802 = vadd.f32 %v3801, %v3675
        %v3803 = vadd.f32 %v3802, %v3676
        %v3804 = vadd.f32 %v3803, %v3677
        %v3805 = vadd.f32 %v3804, %v3678
        %v3806 = vadd.f32 %v3805, %v3679
        %v3807 = vadd.f32 %v3806, %v3680
        %v3808 = vadd.f32 %v3807, %v3681
        %v3809 = vadd.f32 %v3808, %v3682
        %v3810 = vadd.f32 %v3809, %v3683
        %v3811 = vadd.f32 %v3810, %v3684
        %v3812 = vadd.f32 %v3811, %v3685
        %v3813 = vadd.f32 %v3812, %v3686
        %v3814 = vadd.f32 %v3813, %v3687
        %v3815 = vadd.f32 %v3814, %v3688
        %v3816 = vrot.slane %v3815, 4
        %v3817 = vadd.f32 %v3815, %v3816
        %v3818 = vrot.slane %v3817, 2
        %v3819 = vadd.f32 %v3817, %v3818
        %v3820 = vrot.slane %v3819, 1
        %v3821 = vadd.f32 %v3819, %v3820
        %v3822 = vadd.f32 %v3689, %v3690
        %v3823 = vadd.f32 %v3822, %v3691
        %v3824 = vadd.f32 %v3823, %v3692
        %v3825 = vadd.f32 %v3824, %v3693
        %v3826 = vadd.f32 %v3825, %v3694
        %v3827 = vadd.f32 %v3826, %v3695
        %v3828 = vadd.f32 %v3827, %v3696
        %v3829 = vadd.f32 %v3828, %v3697
        %v3830 = vadd.f32 %v3829, %v3698
        %v3831 = vadd.f32 %v3830, %v3699
        %v3832 = vadd.f32 %v3831, %v3700
        %v3833 = vadd.f32 %v3832, %v3701
        %v3834 = vadd.f32 %v3833, %v3702
        %v3835 = vadd.f32 %v3834, %v3703
        %v3836 = vadd.f32 %v3835, %v3704
        %v3837 = vrot.slane %v3836, 4
        %v3838 = vadd.f32 %v3836, %v3837
        %v3839 = vrot.slane %v3838, 2
        %v3840 = vadd.f32 %v3838, %v3839
        %v3841 = vrot.slane %v3840, 1
        %v3842 = vadd.f32 %v3840, %v3841
        %v3843 = vadd.f32 %v3705, %v3706
        %v3844 = vadd.f32 %v3843, %v3707
        %v3845 = vadd.f32 %v3844, %v3708
        %v3846 = vadd.f32 %v3845, %v3709
        %v3847 = vadd.f32 %v3846, %v3710
        %v3848 = vadd.f32 %v3847, %v3711
        %v3849 = vadd.f32 %v3848, %v3712
        %v3850 = vadd.f32 %v3849, %v3713
        %v3851 = vadd.f32 %v3850, %v3714
        %v3852 = vadd.f32 %v3851, %v3715
        %v3853 = vadd.f32 %v3852, %v3716
        %v3854 = vadd.f32 %v3853, %v3717
        %v3855 = vadd.f32 %v3854, %v3718
        %v3856 = vadd.f32 %v3855, %v3719
        %v3857 = vadd.f32 %v3856, %v3720
        %v3858 = vrot.slane %v3857, 4
        %v3859 = vadd.f32 %v3857, %v3858
        %v3860 = vrot.slane %v3859, 2
        %v3861 = vadd.f32 %v3859, %v3860
        %v3862 = vrot.slane %v3861, 1
        %v3863 = vadd.f32 %v3861, %v3862
        %v3864 = vadd.f32 %v3721, %v3722
        %v3865 = vadd.f32 %v3864, %v3723
        %v3866 = vadd.f32 %v3865, %v3724
        %v3867 = vadd.f32 %v3866, %v3725
        %v3868 = vadd.f32 %v3867, %v3726
        %v3869 = vadd.f32 %v3868, %v3727
        %v3870 = vadd.f32 %v3869, %v3728
        %v3871 = vadd.f32 %v3870, %v3729
        %v3872 = vadd.f32 %v3871, %v3730
        %v3873 = vadd.f32 %v3872, %v3731
        %v3874 = vadd.f32 %v3873, %v3732
        %v3875 = vadd.f32 %v3874, %v3733
        %v3876 = vadd.f32 %v3875, %v3734
        %v3877 = vadd.f32 %v3876, %v3735
        %v3878 = vadd.f32 %v3877, %v3736
        %v3879 = vrot.slane %v3878, 4
        %v3880 = vadd.f32 %v3878, %v3879
        %v3881 = vrot.slane %v3880, 2
        %v3882 = vadd.f32 %v3880, %v3881
        %v3883 = vrot.slane %v3882, 1
        %v3884 = vadd.f32 %v3882, %v3883
        %v3885 = vadd.f32 %v3737, %v3738
        %v3886 = vadd.f32 %v3885, %v3739
        %v3887 = vadd.f32 %v3886, %v3740
        %v3888 = vadd.f32 %v3887, %v3741
        %v3889 = vadd.f32 %v3888, %v3742
        %v3890 = vadd.f32 %v3889, %v3743
        %v3891 = vadd.f32 %v3890, %v3744
        %v3892 = vadd.f32 %v3891, %v3745
        %v3893 = vadd.f32 %v3892, %v3746
        %v3894 = vadd.f32 %v3893, %v3747
        %v3895 = vadd.f32 %v3894, %v3748
        %v3896 = vadd.f32 %v3895, %v3749
        %v3897 = vadd.f32 %v3896, %v3750
        %v3898 = vadd.f32 %v3897, %v3751
        %v3899 = vadd.f32 %v3898, %v3752
        %v3900 = vrot.slane %v3899, 4
        %v3901 = vadd.f32 %v3899, %v3900
        %v3902 = vrot.slane %v3901, 2
        %v3903 = vadd.f32 %v3901, %v3902
        %v3904 = vrot.slane %v3903, 1
        %v3905 = vadd.f32 %v3903, %v3904
        %v3906 = vadd.f32 %v3753, %v3754
        %v3907 = vadd.f32 %v3906, %v3755
        %v3908 = vadd.f32 %v3907, %v3756
        %v3909 = vadd.f32 %v3908, %v3757
        %v3910 = vadd.f32 %v3909, %v3758
        %v3911 = vadd.f32 %v3910, %v3759
        %v3912 = vadd.f32 %v3911, %v3760
        %v3913 = vadd.f32 %v3912, %v3761
        %v3914 = vadd.f32 %v3913, %v3762
        %v3915 = vadd.f32 %v3914, %v3763
        %v3916 = vadd.f32 %v3915, %v3764
        %v3917 = vadd.f32 %v3916, %v3765
        %v3918 = vadd.f32 %v3917, %v3766
        %v3919 = vadd.f32 %v3918, %v3767
        %v3920 = vadd.f32 %v3919, %v3768
        %v3921 = vrot.slane %v3920, 4
        %v3922 = vadd.f32 %v3920, %v3921
        %v3923 = vrot.slane %v3922, 2
        %v3924 = vadd.f32 %v3922, %v3923
        %v3925 = vrot.slane %v3924, 1
        %v3926 = vadd.f32 %v3924, %v3925
        %v3927 = vadd.f32 %v3769, %v3770
        %v3928 = vadd.f32 %v3927, %v3771
        %v3929 = vadd.f32 %v3928, %v3772
        %v3930 = vadd.f32 %v3929, %v3773
        %v3931 = vadd.f32 %v3930, %v3774
        %v3932 = vadd.f32 %v3931, %v3775
        %v3933 = vadd.f32 %v3932, %v3776
        %v3934 = vadd.f32 %v3933, %v3777
        %v3935 = vadd.f32 %v3934, %v3778
        %v3936 = vadd.f32 %v3935, %v3779
        %v3937 = vadd.f32 %v3936, %v3780
        %v3938 = vadd.f32 %v3937, %v3781
        %v3939 = vadd.f32 %v3938, %v3782
        %v3940 = vadd.f32 %v3939, %v3783
        %v3941 = vadd.f32 %v3940, %v3784
        %v3942 = vrot.slane %v3941, 4
        %v3943 = vadd.f32 %v3941, %v3942
        %v3944 = vrot.slane %v3943, 2
        %v3945 = vadd.f32 %v3943, %v3944
        %v3946 = vrot.slane %v3945, 1
        %v3947 = vadd.f32 %v3945, %v3946
        %v3948 = vadd.f32 %v3785, %v3786
        %v3949 = vadd.f32 %v3948, %v3787
        %v3950 = vadd.f32 %v3949, %v3788
        %v3951 = vadd.f32 %v3950, %v3789
        %v3952 = vadd.f32 %v3951, %v3790
        %v3953 = vadd.f32 %v3952, %v3791
        %v3954 = vadd.f32 %v3953, %v3792
        %v3955 = vadd.f32 %v3954, %v3793
        %v3956 = vadd.f32 %v3955, %v3794
        %v3957 = vadd.f32 %v3956, %v3795
        %v3958 = vadd.f32 %v3957, %v3796
        %v3959 = vadd.f32 %v3958, %v3797
        %v3960 = vadd.f32 %v3959, %v3798
        %v3961 = vadd.f32 %v3960, %v3799
        %v3962 = vadd.f32 %v3961, %v3800
        %v3963 = vrot.slane %v3962, 4
        %v3964 = vadd.f32 %v3962, %v3963
        %v3965 = vrot.slane %v3964, 2
        %v3966 = vadd.f32 %v3964, %v3965
        %v3967 = vrot.slane %v3966, 1
        %v3968 = vadd.f32 %v3966, %v3967
        %v3969 = vadd.f32 %v3821, %v1067
        %v3970 = vadd.f32 %v3842, %v1067
        %v3971 = vadd.f32 %v3863, %v1067
        %v3972 = vadd.f32 %v3884, %v1067
        %v3973 = vadd.f32 %v3905, %v1067
        %v3974 = vadd.f32 %v3926, %v1067
        %v3975 = vadd.f32 %v3947, %v1067
        %v3976 = vadd.f32 %v3968, %v1067
        %v3985 = vsel %vm1084, %v3970, %v3969
        %v3986 = vsel %vm1086, %v3971, %v3985
        %v3987 = vsel %vm1088, %v3972, %v3986
        %v3988 = vsel %vm1090, %v3973, %v3987
        %v3989 = vsel %vm1092, %v3974, %v3988
        %v3990 = vsel %vm1094, %v3975, %v3989
        %v3991 = vsel %vm1096, %v3976, %v3990
        %s3993 = scalar_lea.vmem [#allocation2], 40
        %3994 = vst [vmem:[%s3993] sm:$0xff] %v3991
        %v3995 = vld [vmem:[#allocation2] sm:$0xff]
        %v3996 = vld [vmem:[#allocation2 + $0x8] sm:$0xff]
        %v3997 = vld [vmem:[#allocation2 + $0x10] sm:$0xff]
        %v3998 = vld [vmem:[#allocation2 + $0x18] sm:$0xff]
        %v3999 = vld [vmem:[#allocation2 + $0x20] sm:$0xff]
        %v4000 = vld [vmem:[#allocation2 + $0x28] sm:$0xff]
        %v4001 = vld [vmem:[#allocation7] sm:$0xff]
        %v4002 = vld [vmem:[#allocation7 + $0x8] sm:$0xff]
        %v4003 = vld [vmem:[#allocation7 + $0x10] sm:$0xff]
        %v4004 = vld [vmem:[#allocation7 + $0x18] sm:$0xff]
        %v4005 = vld [vmem:[#allocation7 + $0x20] sm:$0xff]
        %v4006 = vld [vmem:[#allocation7 + $0x28] sm:$0xff]
        %v4007 = vld [vmem:[#allocation7 + $0x30] sm:$0xff]
        %v4008 = vld [vmem:[#allocation7 + $0x38] sm:$0xff]
        %v4009 = vld [vmem:[#allocation7 + $0x40] sm:$0xff]
        %v4010 = vld [vmem:[#allocation7 + $0x48] sm:$0xff]
        %v4011 = vld [vmem:[#allocation7 + $0x50] sm:$0xff]
        %v4012 = vld [vmem:[#allocation7 + $0x58] sm:$0xff]
        %v4013 = vld [vmem:[#allocation7 + $0x60] sm:$0xff]
        %v4014 = vld [vmem:[#allocation7 + $0x68] sm:$0xff]
        %v4015 = vld [vmem:[#allocation7 + $0x70] sm:$0xff]
        %v4016 = vld [vmem:[#allocation7 + $0x78] sm:$0xff]
        %v4017 = vld [vmem:[#allocation7 + $0x80] sm:$0xff]
        %v4018 = vld [vmem:[#allocation7 + $0x88] sm:$0xff]
        %v4019 = vld [vmem:[#allocation7 + $0x90] sm:$0xff]
        %v4020 = vld [vmem:[#allocation7 + $0x98] sm:$0xff]
        %v4021 = vld [vmem:[#allocation7 + $0xa0] sm:$0xff]
        %v4022 = vld [vmem:[#allocation7 + $0xa8] sm:$0xff]
        %v4023 = vld [vmem:[#allocation7 + $0xb0] sm:$0xff]
        %v4024 = vld [vmem:[#allocation7 + $0xb8] sm:$0xff]
        %v4025 = vld [vmem:[#allocation7 + $0xc0] sm:$0xff]
        %v4026 = vld [vmem:[#allocation7 + $0xc8] sm:$0xff]
        %v4027 = vld [vmem:[#allocation7 + $0xd0] sm:$0xff]
        %v4028 = vld [vmem:[#allocation7 + $0xd8] sm:$0xff]
        %v4029 = vld [vmem:[#allocation7 + $0xe0] sm:$0xff]
        %v4030 = vld [vmem:[#allocation7 + $0xe8] sm:$0xff]
        %v4031 = vld [vmem:[#allocation7 + $0xf0] sm:$0xff]
        %v4032 = vld [vmem:[#allocation7 + $0xf8] sm:$0xff]
        %v4033 = vld [vmem:[#allocation7 + $0x100] sm:$0xff]
        %v4034 = vld [vmem:[#allocation7 + $0x108] sm:$0xff]
        %v4035 = vld [vmem:[#allocation7 + $0x110] sm:$0xff]
        %v4036 = vld [vmem:[#allocation7 + $0x118] sm:$0xff]
        %v4037 = vld [vmem:[#allocation7 + $0x120] sm:$0xff]
        %v4038 = vld [vmem:[#allocation7 + $0x128] sm:$0xff]
        %v4039 = vld [vmem:[#allocation7 + $0x130] sm:$0xff]
        %v4040 = vld [vmem:[#allocation7 + $0x138] sm:$0xff]
        %v4041 = vld [vmem:[#allocation7 + $0x140] sm:$0xff]
        %v4042 = vld [vmem:[#allocation7 + $0x148] sm:$0xff]
        %v4043 = vld [vmem:[#allocation7 + $0x150] sm:$0xff]
        %v4044 = vld [vmem:[#allocation7 + $0x158] sm:$0xff]
        %v4045 = vld [vmem:[#allocation7 + $0x160] sm:$0xff]
        %v4046 = vld [vmem:[#allocation7 + $0x168] sm:$0xff]
        %v4047 = vld [vmem:[#allocation7 + $0x170] sm:$0xff]
        %v4048 = vld [vmem:[#allocation7 + $0x178] sm:$0xff]
        %v4049 = vld [vmem:[#allocation7 + $0x180] sm:$0xff]
        %v4050 = vld [vmem:[#allocation7 + $0x188] sm:$0xff]
        %v4051 = vld [vmem:[#allocation7 + $0x190] sm:$0xff]
        %v4052 = vld [vmem:[#allocation7 + $0x198] sm:$0xff]
        %v4053 = vld [vmem:[#allocation7 + $0x1a0] sm:$0xff]
        %v4054 = vld [vmem:[#allocation7 + $0x1a8] sm:$0xff]
        %v4055 = vld [vmem:[#allocation7 + $0x1b0] sm:$0xff]
        %v4056 = vld [vmem:[#allocation7 + $0x1b8] sm:$0xff]
        %v4057 = vld [vmem:[#allocation7 + $0x1c0] sm:$0xff]
        %v4058 = vld [vmem:[#allocation7 + $0x1c8] sm:$0xff]
        %v4059 = vld [vmem:[#allocation7 + $0x1d0] sm:$0xff]
        %v4060 = vld [vmem:[#allocation7 + $0x1d8] sm:$0xff]
        %v4061 = vld [vmem:[#allocation7 + $0x1e0] sm:$0xff]
        %v4062 = vld [vmem:[#allocation7 + $0x1e8] sm:$0xff]
        %v4063 = vld [vmem:[#allocation7 + $0x1f0] sm:$0xff]
        %v4064 = vld [vmem:[#allocation7 + $0x1f8] sm:$0xff]
        %v4065 = vld [vmem:[#allocation7 + $0x200] sm:$0xff]
        %v4066 = vld [vmem:[#allocation7 + $0x208] sm:$0xff]
        %v4067 = vld [vmem:[#allocation7 + $0x210] sm:$0xff]
        %v4068 = vld [vmem:[#allocation7 + $0x218] sm:$0xff]
        %v4069 = vld [vmem:[#allocation7 + $0x220] sm:$0xff]
        %v4070 = vld [vmem:[#allocation7 + $0x228] sm:$0xff]
        %v4071 = vld [vmem:[#allocation7 + $0x230] sm:$0xff]
        %v4072 = vld [vmem:[#allocation7 + $0x238] sm:$0xff]
        %v4073 = vld [vmem:[#allocation7 + $0x240] sm:$0xff]
        %v4074 = vld [vmem:[#allocation7 + $0x248] sm:$0xff]
        %v4075 = vld [vmem:[#allocation7 + $0x250] sm:$0xff]
        %v4076 = vld [vmem:[#allocation7 + $0x258] sm:$0xff]
        %v4077 = vld [vmem:[#allocation7 + $0x260] sm:$0xff]
        %v4078 = vld [vmem:[#allocation7 + $0x268] sm:$0xff]
        %v4079 = vld [vmem:[#allocation7 + $0x270] sm:$0xff]
        %v4080 = vld [vmem:[#allocation7 + $0x278] sm:$0xff]
        %v4081 = vld [vmem:[#allocation7 + $0x280] sm:$0xff]
        %v4082 = vld [vmem:[#allocation7 + $0x288] sm:$0xff]
        %v4083 = vld [vmem:[#allocation7 + $0x290] sm:$0xff]
        %v4084 = vld [vmem:[#allocation7 + $0x298] sm:$0xff]
        %v4085 = vld [vmem:[#allocation7 + $0x2a0] sm:$0xff]
        %v4086 = vld [vmem:[#allocation7 + $0x2a8] sm:$0xff]
        %v4087 = vld [vmem:[#allocation7 + $0x2b0] sm:$0xff]
        %v4088 = vld [vmem:[#allocation7 + $0x2b8] sm:$0xff]
        %v4089 = vld [vmem:[#allocation7 + $0x2c0] sm:$0xff]
        %v4090 = vld [vmem:[#allocation7 + $0x2c8] sm:$0xff]
        %v4091 = vld [vmem:[#allocation7 + $0x2d0] sm:$0xff]
        %v4092 = vld [vmem:[#allocation7 + $0x2d8] sm:$0xff]
        %v4093 = vld [vmem:[#allocation7 + $0x2e0] sm:$0xff]
        %v4094 = vld [vmem:[#allocation7 + $0x2e8] sm:$0xff]
        %v4095 = vld [vmem:[#allocation7 + $0x2f0] sm:$0xff]
        %v4096 = vld [vmem:[#allocation7 + $0x2f8] sm:$0xff]
        %v4097 = vld [vmem:[#allocation9] sm:$0x1]
        %v4099 = vlaneseq
        %v4100 = vshrl.u32 %v4099, 7
        %v4101 = vsub.s32 0, %v4100
        %v4102 = vrot.slane %v4097, %v4101
        %4104 = vmatprep.subr.mxu0 0.0
        %4105 = vmatpush1.msra.mxu0 %v4001
        %4106 = vmatprep.subr.mxu0 0.0
        %4107 = vmatpush1.msra.mxu0 %v4002
        %4108 = vmatprep.subr.mxu0 0.0
        %4109 = vmatpush1.msra.mxu0 %v4003
        %4110 = vmatprep.subr.mxu0 0.0
        %4111 = vmatpush1.msra.mxu0 %v4004
        %4112 = vmatprep.subr.mxu0 0.0
        %4113 = vmatpush1.msra.mxu0 %v4005
        %4114 = vmatprep.subr.mxu0 0.0
        %4115 = vmatpush1.msra.mxu0 %v4006
        %4116 = vmatprep.subr.mxu0 0.0
        %4117 = vmatpush1.msra.mxu0 %v4007
        %4118 = vmatprep.subr.mxu0 0.0
        %4119 = vmatpush1.msra.mxu0 %v4008
        %4120 = vmatprep.subr.mxu0 0.0
        %4121 = vmatpush1.msra.mxu0 %v4009
        %4122 = vmatprep.subr.mxu0 0.0
        %4123 = vmatpush1.msra.mxu0 %v4010
        %4124 = vmatprep.subr.mxu0 0.0
        %4125 = vmatpush1.msra.mxu0 %v4011
        %4126 = vmatprep.subr.mxu0 0.0
        %4127 = vmatpush1.msra.mxu0 %v4012
        %4128 = vmatprep.subr.mxu0 0.0
        %4129 = vmatpush1.msra.mxu0 %v4013
        %4130 = vmatprep.subr.mxu0 0.0
        %4131 = vmatpush1.msra.mxu0 %v4014
        %4132 = vmatprep.subr.mxu0 0.0
        %4133 = vmatpush1.msra.mxu0 %v4015
        %4134 = vmatprep.subr.mxu0 0.0
        %4135 = vmatpush1.msra.mxu0 %v4016
        %4136 = vmatprep.subr.mxu0 0.0
        %4137 = vmatpush1.msra.mxu0 %v4017
        %4138 = vmatprep.subr.mxu0 0.0
        %4139 = vmatpush1.msra.mxu0 %v4018
        %4140 = vmatprep.subr.mxu0 0.0
        %4141 = vmatpush1.msra.mxu0 %v4019
        %4142 = vmatprep.subr.mxu0 0.0
        %4143 = vmatpush1.msra.mxu0 %v4020
        %4144 = vmatprep.subr.mxu0 0.0
        %4145 = vmatpush1.msra.mxu0 %v4021
        %4146 = vmatprep.subr.mxu0 0.0
        %4147 = vmatpush1.msra.mxu0 %v4022
        %4148 = vmatprep.subr.mxu0 0.0
        %4149 = vmatpush1.msra.mxu0 %v4023
        %4150 = vmatprep.subr.mxu0 0.0
        %4151 = vmatpush1.msra.mxu0 %v4024
        %4152 = vmatprep.subr.mxu0 0.0
        %4153 = vmatpush1.msra.mxu0 %v4025
        %4154 = vmatprep.subr.mxu0 0.0
        %4155 = vmatpush1.msra.mxu0 %v4026
        %4156 = vmatprep.subr.mxu0 0.0
        %4157 = vmatpush1.msra.mxu0 %v4027
        %4158 = vmatprep.subr.mxu0 0.0
        %4159 = vmatpush1.msra.mxu0 %v4028
        %4160 = vmatprep.subr.mxu0 0.0
        %4161 = vmatpush1.msra.mxu0 %v4029
        %4162 = vmatprep.subr.mxu0 0.0
        %4163 = vmatpush1.msra.mxu0 %v4030
        %4164 = vmatprep.subr.mxu0 0.0
        %4165 = vmatpush1.msra.mxu0 %v4031
        %4166 = vmatprep.subr.mxu0 0.0
        %4167 = vmatpush1.msra.mxu0 %v4032
        %4168 = vmatprep.mubr.f32.mxu0 %v3996
        %4169 = vmatmul.mubr.f32.gmra.mrb[0].mxu0 %v3995
        %v4170 = vpop.f32.mrb[0].mxu0
        %v4171 = vadd.f32 %v4102, %v4170
        %v4172 = vpop.f32.mrb[0].mxu0
        %4173 = vdwg.mxu0
        %4174 = vmatprep.subr.mxu0 0.0
        %4175 = vmatpush1.msra.mxu0 %v4033
        %4176 = vmatprep.subr.mxu0 0.0
        %4177 = vmatpush1.msra.mxu0 %v4034
        %4178 = vmatprep.subr.mxu0 0.0
        %4179 = vmatpush1.msra.mxu0 %v4035
        %4180 = vmatprep.subr.mxu0 0.0
        %4181 = vmatpush1.msra.mxu0 %v4036
        %4182 = vmatprep.subr.mxu0 0.0
        %4183 = vmatpush1.msra.mxu0 %v4037
        %4184 = vmatprep.subr.mxu0 0.0
        %4185 = vmatpush1.msra.mxu0 %v4038
        %4186 = vmatprep.subr.mxu0 0.0
        %4187 = vmatpush1.msra.mxu0 %v4039
        %4188 = vmatprep.subr.mxu0 0.0
        %4189 = vmatpush1.msra.mxu0 %v4040
        %4190 = vmatprep.subr.mxu0 0.0
        %4191 = vmatpush1.msra.mxu0 %v4041
        %4192 = vmatprep.subr.mxu0 0.0
        %4193 = vmatpush1.msra.mxu0 %v4042
        %4194 = vmatprep.subr.mxu0 0.0
        %4195 = vmatpush1.msra.mxu0 %v4043
        %4196 = vmatprep.subr.mxu0 0.0
        %4197 = vmatpush1.msra.mxu0 %v4044
        %4198 = vmatprep.subr.mxu0 0.0
        %4199 = vmatpush1.msra.mxu0 %v4045
        %4200 = vmatprep.subr.mxu0 0.0
        %4201 = vmatpush1.msra.mxu0 %v4046
        %4202 = vmatprep.subr.mxu0 0.0
        %4203 = vmatpush1.msra.mxu0 %v4047
        %4204 = vmatprep.subr.mxu0 0.0
        %4205 = vmatpush1.msra.mxu0 %v4048
        %4206 = vmatprep.subr.mxu0 0.0
        %4207 = vmatpush1.msra.mxu0 %v4049
        %4208 = vmatprep.subr.mxu0 0.0
        %4209 = vmatpush1.msra.mxu0 %v4050
        %4210 = vmatprep.subr.mxu0 0.0
        %4211 = vmatpush1.msra.mxu0 %v4051
        %4212 = vmatprep.subr.mxu0 0.0
        %4213 = vmatpush1.msra.mxu0 %v4052
        %4214 = vmatprep.subr.mxu0 0.0
        %4215 = vmatpush1.msra.mxu0 %v4053
        %4216 = vmatprep.subr.mxu0 0.0
        %4217 = vmatpush1.msra.mxu0 %v4054
        %4218 = vmatprep.subr.mxu0 0.0
        %4219 = vmatpush1.msra.mxu0 %v4055
        %4220 = vmatprep.subr.mxu0 0.0
        %4221 = vmatpush1.msra.mxu0 %v4056
        %4222 = vmatprep.subr.mxu0 0.0
        %4223 = vmatpush1.msra.mxu0 %v4057
        %4224 = vmatprep.subr.mxu0 0.0
        %4225 = vmatpush1.msra.mxu0 %v4058
        %4226 = vmatprep.subr.mxu0 0.0
        %4227 = vmatpush1.msra.mxu0 %v4059
        %4228 = vmatprep.subr.mxu0 0.0
        %4229 = vmatpush1.msra.mxu0 %v4060
        %4230 = vmatprep.subr.mxu0 0.0
        %4231 = vmatpush1.msra.mxu0 %v4061
        %4232 = vmatprep.subr.mxu0 0.0
        %4233 = vmatpush1.msra.mxu0 %v4062
        %4234 = vmatprep.subr.mxu0 0.0
        %4235 = vmatpush1.msra.mxu0 %v4063
        %4236 = vmatprep.subr.mxu0 0.0
        %4237 = vmatpush1.msra.mxu0 %v4064
        %4238 = vmatprep.mubr.f32.mxu0 %v3998
        %4239 = vmatmul.mubr.f32.gmra.mrb[0].mxu0 %v3997
        %v4240 = vpop.f32.mrb[0].mxu0
        %v4241 = vadd.f32 %v4171, %v4240
        %v4242 = vpop.f32.mrb[0].mxu0
        %4243 = vdwg.mxu0
        %4244 = vmatprep.subr.mxu0 0.0
        %4245 = vmatpush1.msra.mxu0 %v4065
        %4246 = vmatprep.subr.mxu0 0.0
        %4247 = vmatpush1.msra.mxu0 %v4066
        %4248 = vmatprep.subr.mxu0 0.0
        %4249 = vmatpush1.msra.mxu0 %v4067
        %4250 = vmatprep.subr.mxu0 0.0
        %4251 = vmatpush1.msra.mxu0 %v4068
        %4252 = vmatprep.subr.mxu0 0.0
        %4253 = vmatpush1.msra.mxu0 %v4069
        %4254 = vmatprep.subr.mxu0 0.0
        %4255 = vmatpush1.msra.mxu0 %v4070
        %4256 = vmatprep.subr.mxu0 0.0
        %4257 = vmatpush1.msra.mxu0 %v4071
        %4258 = vmatprep.subr.mxu0 0.0
        %4259 = vmatpush1.msra.mxu0 %v4072
        %4260 = vmatprep.subr.mxu0 0.0
        %4261 = vmatpush1.msra.mxu0 %v4073
        %4262 = vmatprep.subr.mxu0 0.0
        %4263 = vmatpush1.msra.mxu0 %v4074
        %4264 = vmatprep.subr.mxu0 0.0
        %4265 = vmatpush1.msra.mxu0 %v4075
        %4266 = vmatprep.subr.mxu0 0.0
        %4267 = vmatpush1.msra.mxu0 %v4076
        %4268 = vmatprep.subr.mxu0 0.0
        %4269 = vmatpush1.msra.mxu0 %v4077
        %4270 = vmatprep.subr.mxu0 0.0
        %4271 = vmatpush1.msra.mxu0 %v4078
        %4272 = vmatprep.subr.mxu0 0.0
        %4273 = vmatpush1.msra.mxu0 %v4079
        %4274 = vmatprep.subr.mxu0 0.0
        %4275 = vmatpush1.msra.mxu0 %v4080
        %4276 = vmatprep.subr.mxu0 0.0
        %4277 = vmatpush1.msra.mxu0 %v4081
        %4278 = vmatprep.subr.mxu0 0.0
        %4279 = vmatpush1.msra.mxu0 %v4082
        %4280 = vmatprep.subr.mxu0 0.0
        %4281 = vmatpush1.msra.mxu0 %v4083
        %4282 = vmatprep.subr.mxu0 0.0
        %4283 = vmatpush1.msra.mxu0 %v4084
        %4284 = vmatprep.subr.mxu0 0.0
        %4285 = vmatpush1.msra.mxu0 %v4085
        %4286 = vmatprep.subr.mxu0 0.0
        %4287 = vmatpush1.msra.mxu0 %v4086
        %4288 = vmatprep.subr.mxu0 0.0
        %4289 = vmatpush1.msra.mxu0 %v4087
        %4290 = vmatprep.subr.mxu0 0.0
        %4291 = vmatpush1.msra.mxu0 %v4088
        %4292 = vmatprep.subr.mxu0 0.0
        %4293 = vmatpush1.msra.mxu0 %v4089
        %4294 = vmatprep.subr.mxu0 0.0
        %4295 = vmatpush1.msra.mxu0 %v4090
        %4296 = vmatprep.subr.mxu0 0.0
        %4297 = vmatpush1.msra.mxu0 %v4091
        %4298 = vmatprep.subr.mxu0 0.0
        %4299 = vmatpush1.msra.mxu0 %v4092
        %4300 = vmatprep.subr.mxu0 0.0
        %4301 = vmatpush1.msra.mxu0 %v4093
        %4302 = vmatprep.subr.mxu0 0.0
        %4303 = vmatpush1.msra.mxu0 %v4094
        %4304 = vmatprep.subr.mxu0 0.0
        %4305 = vmatpush1.msra.mxu0 %v4095
        %4306 = vmatprep.subr.mxu0 0.0
        %4307 = vmatpush1.msra.mxu0 %v4096
        %4308 = vmatprep.mubr.f32.mxu0 %v4000
        %4309 = vmatmul.mubr.f32.gmra.mrb[0].mxu0 %v3999
        %v4310 = vpop.f32.mrb[0].mxu0
        %v4311 = vadd.f32 %v4241, %v4310
        %v4312 = vpop.f32.mrb[0].mxu0
        %4313 = vdwg.mxu0
        %v4314 = vmax.f32 %v4311, 0.0
        %v4315 = vld [vmem:[#allocation10] sm:$0xff]
        %v4316 = vld [vmem:[#allocation10 + $0x8] sm:$0xff]
        %v4317 = vld [vmem:[#allocation10 + $0x10] sm:$0xff]
        %v4318 = vld [vmem:[#allocation10 + $0x18] sm:$0xff]
        %v4319 = vld [vmem:[#allocation10 + $0x20] sm:$0xff]
        %v4320 = vld [vmem:[#allocation10 + $0x28] sm:$0xff]
        %v4321 = vld [vmem:[#allocation10 + $0x30] sm:$0xff]
        %v4322 = vld [vmem:[#allocation10 + $0x38] sm:$0xff]
        %v4323 = vld [vmem:[#allocation10 + $0x40] sm:$0xff]
        %v4324 = vld [vmem:[#allocation10 + $0x48] sm:$0xff]
        %v4325 = vld [vmem:[#allocation10 + $0x50] sm:$0xff]
        %v4326 = vld [vmem:[#allocation10 + $0x58] sm:$0xff]
        %v4327 = vld [vmem:[#allocation10 + $0x60] sm:$0xff]
        %v4328 = vld [vmem:[#allocation10 + $0x68] sm:$0xff]
        %v4329 = vld [vmem:[#allocation10 + $0x70] sm:$0xff]
        %v4330 = vld [vmem:[#allocation10 + $0x78] sm:$0xff]
        %v4331 = vld [vmem:[#allocation10 + $0x80] sm:$0xff]
        %v4332 = vld [vmem:[#allocation10 + $0x88] sm:$0xff]
        %v4333 = vld [vmem:[#allocation10 + $0x90] sm:$0xff]
        %v4334 = vld [vmem:[#allocation10 + $0x98] sm:$0xff]
        %v4335 = vld [vmem:[#allocation10 + $0xa0] sm:$0xff]
        %v4336 = vld [vmem:[#allocation10 + $0xa8] sm:$0xff]
        %v4337 = vld [vmem:[#allocation10 + $0xb0] sm:$0xff]
        %v4338 = vld [vmem:[#allocation10 + $0xb8] sm:$0xff]
        %v4339 = vld [vmem:[#allocation10 + $0xc0] sm:$0xff]
        %v4340 = vld [vmem:[#allocation10 + $0xc8] sm:$0xff]
        %v4341 = vld [vmem:[#allocation10 + $0xd0] sm:$0xff]
        %v4342 = vld [vmem:[#allocation10 + $0xd8] sm:$0xff]
        %v4343 = vld [vmem:[#allocation10 + $0xe0] sm:$0xff]
        %v4344 = vld [vmem:[#allocation10 + $0xe8] sm:$0xff]
        %v4345 = vld [vmem:[#allocation10 + $0xf0] sm:$0xff]
        %v4346 = vld [vmem:[#allocation10 + $0xf8] sm:$0xff]
        %v4347 = vld [vmem:[#allocation12] sm:$0x3]
        %v4349 = vlaneseq
        %v4350 = vshrl.u32 %v4349, 7
        %v4351 = vsub.s32 0, %v4350
        %v4352 = vrot.slane %v4347, %v4351
        %v4353 = vlaneseq
        %v4354 = vshrl.u32 %v4353, 7
        %v4355 = vsub.s32 1, %v4354
        %v4356 = vrot.slane %v4347, %v4355
        %4359 = vmatprep.subr.mxu0 %v4316
        %4360 = vmatpush1.msra.mxu0 %v4315
        %4361 = vmatprep.subr.mxu0 %v4318
        %4362 = vmatpush1.msra.mxu0 %v4317
        %4363 = vmatprep.subr.mxu0 %v4320
        %4364 = vmatpush1.msra.mxu0 %v4319
        %4365 = vmatprep.subr.mxu0 %v4322
        %4366 = vmatpush1.msra.mxu0 %v4321
        %4367 = vmatprep.subr.mxu0 %v4324
        %4368 = vmatpush1.msra.mxu0 %v4323
        %4369 = vmatprep.subr.mxu0 %v4326
        %4370 = vmatpush1.msra.mxu0 %v4325
        %4371 = vmatprep.subr.mxu0 %v4328
        %4372 = vmatpush1.msra.mxu0 %v4327
        %4373 = vmatprep.subr.mxu0 %v4330
        %4374 = vmatpush1.msra.mxu0 %v4329
        %4375 = vmatprep.subr.mxu0 %v4332
        %4376 = vmatpush1.msra.mxu0 %v4331
        %4377 = vmatprep.subr.mxu0 %v4334
        %4378 = vmatpush1.msra.mxu0 %v4333
        %4379 = vmatprep.subr.mxu0 %v4336
        %4380 = vmatpush1.msra.mxu0 %v4335
        %4381 = vmatprep.subr.mxu0 %v4338
        %4382 = vmatpush1.msra.mxu0 %v4337
        %4383 = vmatprep.subr.mxu0 %v4340
        %4384 = vmatpush1.msra.mxu0 %v4339
        %4385 = vmatprep.subr.mxu0 %v4342
        %4386 = vmatpush1.msra.mxu0 %v4341
        %4387 = vmatprep.subr.mxu0 %v4344
        %4388 = vmatpush1.msra.mxu0 %v4343
        %4389 = vmatprep.subr.mxu0 %v4346
        %4390 = vmatpush1.msra.mxu0 %v4345
        %4391 = vmatprep.subr.mxu0 0.0
        %4392 = vmatpush1.msra.mxu0 0.0
        %4393 = vmatprep.subr.mxu0 0.0
        %4394 = vmatpush1.msra.mxu0 0.0
        %4395 = vmatprep.subr.mxu0 0.0
        %4396 = vmatpush1.msra.mxu0 0.0
        %4397 = vmatprep.subr.mxu0 0.0
        %4398 = vmatpush1.msra.mxu0 0.0
        %4399 = vmatprep.subr.mxu0 0.0
        %4400 = vmatpush1.msra.mxu0 0.0
        %4401 = vmatprep.subr.mxu0 0.0
        %4402 = vmatpush1.msra.mxu0 0.0
        %4403 = vmatprep.subr.mxu0 0.0
        %4404 = vmatpush1.msra.mxu0 0.0
        %4405 = vmatprep.subr.mxu0 0.0
        %4406 = vmatpush1.msra.mxu0 0.0
        %4407 = vmatprep.subr.mxu0 0.0
        %4408 = vmatpush1.msra.mxu0 0.0
        %4409 = vmatprep.subr.mxu0 0.0
        %4410 = vmatpush1.msra.mxu0 0.0
        %4411 = vmatprep.subr.mxu0 0.0
        %4412 = vmatpush1.msra.mxu0 0.0
        %4413 = vmatprep.subr.mxu0 0.0
        %4414 = vmatpush1.msra.mxu0 0.0
        %4415 = vmatprep.subr.mxu0 0.0
        %4416 = vmatpush1.msra.mxu0 0.0
        %4417 = vmatprep.subr.mxu0 0.0
        %4418 = vmatpush1.msra.mxu0 0.0
        %4419 = vmatprep.subr.mxu0 0.0
        %4420 = vmatpush1.msra.mxu0 0.0
        %4421 = vmatprep.subr.mxu0 0.0
        %4422 = vmatpush1.msra.mxu0 0.0
        %4423 = vmatprep.mubr.f32.mxu0 0.0
        %4424 = vmatmul.mubr.f32.gmra.mrb[0].mxu0 %v4314
        %v4425 = vpop.f32.mrb[0].mxu0
        %v4426 = vadd.f32 %v4352, %v4425
        %v4427 = vpop.f32.mrb[0].mxu0
        %v4428 = vadd.f32 %v4356, %v4427
        %4429 = vdwg.mxu0
        %v4430 = vmax.f32 %v4428, 0.0
        %v4431 = vand.u32 2147483647, %v4428
        %v4432 = vsub.f32 0.0, %v4431
        %v4433 = vmul.f32 %v4432, 1.442695
        %v4434 = vpow.pop %v4433
        %v4435 = vadd.f32 %v4434, 1.0
        %v4436 = vlog2.pop %v4435
        %v4437 = vmul.f32 %v4436, 0.6931472
        %v4438 = vadd.f32 %v4430, %v4437
        %v4439 = vadd.f32 %v4438, 1e-07
        %v4440 = vld [vmem:[%s379] sm:$0xff]
        %v4441 = vmul.f32 %v4439, %v4440
        %v4442 = vadd.f32 %v4426, %v4441
        %4443 = vst [vmem:[%s416] sm:$0xff] %v4442
        %s4444 = sand.u32 %s217, 1
        %s4445 = scalar_lea.sflag [#allocation6], %s4444
        %s4446 = sand.u32 %s217, 1
        %s4447 = smul.addr %s4446, 8
        %s4448 = scalar_lea.vmem [#allocation15], %s4447
        // Predicated region
        $region77: #{tpu_custom_call.1} parent=51 // pred_check
          %p4449 = pneg %p227
        $region78: #{tpu_custom_call.1} parent=51 // pred_check_branch
          %4451 = sbr.rel (%p4449) target = $region80
        $region79: #{tpu_custom_call.1} parent=51 // pred_region
          %s4453 = ssub.s32 128, 128
          %4454 = vsyncadd %s4445, %s4453
          %s4455 = smul.addr %s31, 128
          %s4456 = scalar_lea.hbm %s8, %s4455
          %s4458 = sshll.u32 %s4448, 4
          %s4459 = int_to_ptr.vmem [resolvable:$true] %s4458
          %4461 = dma.vmem_to_hbm [thread:$0]  %s4459, 128, %s4456, %s4445
        $region80: #{tpu_custom_call.1} parent=51 // pred_fallthru
          _
      $region52: #{tpu_custom_call.1} parent=5 // pred_fallthru
        _
      %p4462 = scmp.le.s32.totalorder 2, %s26
      // Predicated region
      $region81: #{tpu_custom_call.1} parent=5 // pred_check
        %p4463 = pneg %p4462
      $region82: #{tpu_custom_call.1} parent=5 // pred_check_branch
        %4465 = sbr.rel (%p4463) target = $region84
      $region83: #{tpu_custom_call.1} parent=5 // pred_region
        %s4466 = ssub.s32 %s26, 2
        // Predicated region
        $region85: #{tpu_custom_call.1} parent=83 // pred_check
          %p4467 = pneg %p233
        $region86: #{tpu_custom_call.1} parent=83 // pred_check_branch
          %4469 = sbr.rel (%p4467) target = $region88
        $region87: #{tpu_custom_call.1} parent=83 // pred_region
          %s4470 = sand.u32 %s218, 1
          %s4471 = scalar_lea.sflag [#allocation6], %s4470
          %s4472 = sand.u32 %s218, 1
          %s4473 = smul.addr %s4472, 8
          %s4474 = scalar_lea.vmem [#allocation15], %s4473
          %4475 = dma.done %s4471, 128
        $region88: #{tpu_custom_call.1} parent=83 // pred_fallthru
          _
      $region84: #{tpu_custom_call.1} parent=5 // pred_fallthru
        _
    $region6: #{tpu_custom_call.1} parent=1 // loop_footer
      %s30 = sadd.s32 1, %s26
    $region7: #{tpu_custom_call.1} parent=1 // loop_footer_branch
      %25 = sbr.rel target = $region3
    $region8: #{tpu_custom_call.1} parent=1 // loop_exit
      _
    %4476 = vsyncpa [#allocation5], 1
    %s4477 = scalar_lea.sflag [#allocation5], 1
    %4478 = vsyncpa %s4477, 1
    %4479 = vsyncpa [#allocation8], 1
    %4480 = vsyncpa [#allocation11], 1
    %4481 = vsyncpa [#allocation14], 1
    %s4482 = scalar_lea.sflag [#allocation14], 1
    %4483 = vsyncpa %s4482, 1
    %4484 = vsyncpa [#allocation6], 1
    %s4485 = scalar_lea.sflag [#allocation6], 1
    %4486 = vsyncpa %s4485, 1

</llo_original>
